<compile_context>
chip_gen: v5e
topology: v5e:2x2
jax: 0.10.0
libtpu: 0.0.40
codegen_flags: <defaults>
</compile_context>

<pallas_src>
import functools

import numpy as np
import jax
import jax.numpy as jnp
from jax import lax
from jax.experimental import pallas as pl
from jax.experimental.pallas import tpu as pltpu

LANE = 128          # output-channel pad -> lane-dense stores / matmul N
FC1_REAL = 500
FC1_PAD = 512
K2 = 32             # conv2 contraction pad (real 20 input channels)
K3 = 64             # conv3/conv4/fc1 contraction pad (real 50 channels)


def _round_up(x, m):
    return (x + m - 1) // m * m


# ----------------------------------------------------------------------------
# Per-image geometry (flat layout: row = i * pitch + j, channels on lanes)
# ----------------------------------------------------------------------------
def _geometry(height, width):
    c1h, c1w = height - 4, width - 4                  # conv1 out (compact)
    assert c1h > 0 and c1w > 0 and c1h % 2 == 0 and c1w % 2 == 0
    p1h, p1w = c1h // 2, c1w // 2                     # pool1
    c2h, c2w = p1h - 4, p1w - 4                       # conv2 out
    assert c2h > 0 and c2w > 0 and c2h % 2 == 0 and c2w % 2 == 0
    acc2 = (c2h - 1) * p1w + c2w
    p2h, p2w = c2h // 2, c2w // 2                     # pool2
    h3p, w3p = p2h + 2, p2w + 2                       # conv3 padded input
    c3h, c3w = p2h, p2w                               # conv3 out ("same")
    assert c3h % 2 == 0 and c3w % 2 == 0
    acc3 = (c3h - 1) * w3p + c3w
    p3h, p3w = c3h // 2, c3w // 2                     # pool3
    h4p, w4p = p3h + 2, p3w + 2                       # conv4 padded input
    c4h, c4w = p3h, p3w                               # conv4 out ("same")
    acc4 = (c4h - 1) * w4p + c4w
    assert c4h // 2 == 1 and c4w // 2 == 1, \
        "x.view(-1, 50) needs a 1x1 final spatial (28x28 input)"
    return dict(c1h=c1h, c1w=c1w, p1h=p1h, p1w=p1w,
                c2h=c2h, c2w=c2w, acc2=acc2, p2h=p2h, p2w=p2w,
                c3h=c3h, c3w=c3w, w3p=w3p, acc3=acc3, p3h=p3h, p3w=p3w,
                c4h=c4h, c4w=c4w, w4p=w4p, acc4=acc4)


def _pool_select(ho, wo, pitch):
    # 0/1 matrix picking the 2x2/stride-2 pooled rows out of the shift-max
    # array of a flat conv output (valid region (ho, wo), row pitch `pitch`).
    hp, wp = ho // 2, wo // 2
    m_len = (ho - 1) * pitch + wo - 1 - pitch
    sel = np.zeros((hp * wp, m_len), np.float32)
    for i in range(hp):
        for j in range(wp):
            sel[i * wp + j, (2 * i) * pitch + 2 * j] = 1.0
    return sel


def _pad_embed(h, w, pad):
    # 0/1 matrix embedding a compact (h, w) flat layout into a zero-padded
    # (h+2p, w+2p) flat layout.
    hp, wp = h + 2 * pad, w + 2 * pad
    emb = np.zeros((hp * wp, h * w), np.float32)
    for i in range(h):
        for j in range(w):
            emb[(i + pad) * wp + (j + pad), i * w + j] = 1.0
    return emb


# ----------------------------------------------------------------------------
# Parameter init (math layout) and one-time lane-dense / bf16 repack
# ----------------------------------------------------------------------------
def init_params(key, channels, classes):
    ks = jax.random.split(key, 12)

    def w(k, shape, fan_in):
        return jax.random.normal(k, shape, jnp.float32) * (1.0 / jnp.sqrt(fan_in))

    return {
        "conv1_w": w(ks[0], (5, 5, channels, 20), 5 * 5 * channels),
        "conv1_b": w(ks[1], (20,), 5 * 5 * channels),
        "conv2_w": w(ks[2], (5, 5, 20, 50), 5 * 5 * 20),
        "conv2_b": w(ks[3], (50,), 5 * 5 * 20),
        "conv3_w": w(ks[4], (3, 3, 50, 50), 3 * 3 * 50),
        "conv3_b": w(ks[5], (50,), 3 * 3 * 50),
        "conv4_w": w(ks[6], (3, 3, 50, 50), 3 * 3 * 50),
        "conv4_b": w(ks[7], (50,), 3 * 3 * 50),
        "fc1_w":   w(ks[8], (50, 500), 50),
        "fc1_b":   w(ks[9], (500,), 50),
        "fc2_w":   w(ks[10], (500, classes), 500),
        "fc2_b":   w(ks[11], (classes,), 500),
    }


def pack_params(params, channels, classes, height=28, width=28):
    assert classes <= LANE
    g = _geometry(height, width)
    k1 = 25 * channels
    k1p = max(_round_up(k1, 8), 8)

    def pad_arr(a, shape):
        a = np.asarray(a, np.float32)
        out = np.zeros(shape, np.float32)
        out[tuple(slice(0, s) for s in a.shape)] = a
        return out

    # conv1 folded for host-side im2col: row (i*5+j)*C + c -> conv1_w[i,j,c,:]
    w1_fold = np.asarray(params["conv1_w"], np.float32).reshape(k1, 20)

    # Fused pool-select + zero-pad embeddings (exact 0/1 matrices).
    s1 = _pool_select(g["c1h"], g["c1w"], g["c1w"])
    ps3 = _pad_embed(g["p2h"], g["p2w"], 1) @ _pool_select(g["c2h"], g["c2w"], g["p1w"])
    ps4 = _pad_embed(g["p3h"], g["p3w"], 1) @ _pool_select(g["c3h"], g["c3w"], g["w3p"])

    mxu = {  # bf16 MXU operands
        "w1":  pad_arr(w1_fold, (k1p, LANE)),
        "w2":  pad_arr(params["conv2_w"], (5, 5, K2, LANE)),
        "w3":  pad_arr(params["conv3_w"], (3, 3, K3, LANE)),
        "w4":  pad_arr(params["conv4_w"], (3, 3, K3, LANE)),
        "fw1": pad_arr(params["fc1_w"], (K3, FC1_PAD)),
        "fw2": pad_arr(params["fc2_w"], (FC1_PAD, LANE)),
        "s1":  s1,
        "ps3": ps3,
        "ps4": ps4,
    }
    vec = {  # f32 biases (element-wise path stays f32)
        "b1":  pad_arr(np.asarray(params["conv1_b"]).reshape(1, -1), (1, LANE)),
        "b2":  pad_arr(np.asarray(params["conv2_b"]).reshape(1, -1), (1, LANE)),
        "b3":  pad_arr(np.asarray(params["conv3_b"]).reshape(1, -1), (1, LANE)),
        "b4":  pad_arr(np.asarray(params["conv4_b"]).reshape(1, -1), (1, LANE)),
        "fb1": pad_arr(np.asarray(params["fc1_b"]).reshape(1, -1), (1, FC1_PAD)),
        "fb2": pad_arr(np.asarray(params["fc2_b"]).reshape(1, -1), (1, LANE)),
    }
    packed = {k: jnp.asarray(v, jnp.bfloat16) for k, v in mxu.items()}
    packed.update({k: jnp.asarray(v, jnp.float32) for k, v in vec.items()})
    return packed


# ----------------------------------------------------------------------------
# Fully fused forward pass (one pallas_call, per-image parallel grid)
# ----------------------------------------------------------------------------
def large_forward(packed, x_nchw, *, classes, feat=False):
    n, cin, height, width = x_nchw.shape
    g = _geometry(height, width)
    k1p = packed["w1"].shape[0]
    k1 = 25 * cin
    m1 = g["c1h"] * g["c1w"]            # conv1 output rows per image

    # Host-side im2col for conv1 (input is tiny): (n, 24*24, 25*C -> k1p) bf16.
    x = jnp.transpose(x_nchw, (0, 2, 3, 1)).astype(jnp.float32)     # NHWC
    pieces = [x[:, i:i + g["c1h"], j:j + g["c1w"], :]
              for i in range(5) for j in range(5)]
    patches = jnp.concatenate(pieces, axis=-1).reshape(n, m1, k1)
    patches = jnp.pad(patches, ((0, 0), (0, 0), (0, k1p - k1)))
    patches = patches.astype(jnp.bfloat16)

    def kernel(*refs):
        (p_ref, w1_ref, b1_ref, s1_ref,
         w2_ref, b2_ref, w3_ref, b3_ref, ps3_ref,
         w4_ref, b4_ref, ps4_ref,
         fw1_ref, fb1_ref, fw2_ref, fb2_ref) = refs[:16]
        out_refs = refs[16:]

        def conv_taps(xf_bf16, w_ref, b_f32, k, pitch, acc_len):
            # Direct conv in the flat domain: one row-shifted slice + one MXU
            # matmul per kernel tap, f32 accumulation (acc is vreg-sized).
            acc = jnp.zeros((acc_len, LANE), jnp.float32)
            for i in range(k):
                for j in range(k):
                    s = i * pitch + j
                    acc = acc + jnp.dot(xf_bf16[s:s + acc_len, :], w_ref[i, j],
                                        preferred_element_type=jnp.float32)
            return jnp.maximum(acc + b_f32, 0.0)

        def shift_max(y_f32, pitch):
            # 2x2 window max in the flat domain (f32 element-wise).
            t = jnp.maximum(y_f32[:-1, :], y_f32[1:, :])
            return jnp.maximum(t[:-pitch, :], t[pitch:, :])

        # ---- layer 1: conv via host-side im2col, one MXU matmul ----
        y1 = jnp.maximum(
            jnp.dot(p_ref[...], w1_ref[...],
                    preferred_element_type=jnp.float32) + b1_ref[...], 0.0)
        m1v = shift_max(y1, g["c1w"])
        pooled1 = jnp.dot(s1_ref[...], m1v.astype(jnp.bfloat16),
                          preferred_element_type=jnp.float32)        # (144,128)

        # ---- layer 2 (valid 5x5) ----
        xf2 = pooled1[:, :K2].astype(jnp.bfloat16)
        y2 = conv_taps(xf2, w2_ref, b2_ref[...], 5, g["p1w"], g["acc2"])
        m2v = shift_max(y2, g["p1w"])

        # ---- layer 3 ("same" 3x3): PS3 fuses pool selection + zero pad ----
        xf3 = jnp.dot(ps3_ref[...], m2v.astype(jnp.bfloat16),
                      preferred_element_type=jnp.float32)
        xf3 = xf3[:, :K3].astype(jnp.bfloat16)
        y3 = conv_taps(xf3, w3_ref, b3_ref[...], 3, g["w3p"], g["acc3"])
        m3v = shift_max(y3, g["w3p"])

        # ---- layer 4 ("same" 3x3) ----
        xf4 = jnp.dot(ps4_ref[...], m3v.astype(jnp.bfloat16),
                      preferred_element_type=jnp.float32)
        xf4 = xf4[:, :K3].astype(jnp.bfloat16)
        y4 = conv_taps(xf4, w4_ref, b4_ref[...], 3, g["w4p"], g["acc4"])
        t4 = jnp.maximum(y4[:-1, :], y4[1:, :])
        pooled4 = jnp.maximum(t4[0:1, :], t4[g["w4p"]:g["w4p"] + 1, :])  # (1,128)

        # ---- fully connected head ----
        feature = jnp.maximum(
            jnp.dot(pooled4[:, :K3].astype(jnp.bfloat16), fw1_ref[...],
                    preferred_element_type=jnp.float32) + fb1_ref[...], 0.0)
        logits = (jnp.dot(feature.astype(jnp.bfloat16), fw2_ref[...],
                          preferred_element_type=jnp.float32) + fb2_ref[...])

        out_refs[0][...] = jnp.broadcast_to(logits, (8, LANE))
        if feat:
            out_refs[1][...] = jnp.broadcast_to(feature, (8, FC1_PAD))

    kernel_in = (patches,
                 packed["w1"], packed["b1"], packed["s1"],
                 packed["w2"], packed["b2"],
                 packed["w3"], packed["b3"], packed["ps3"],
                 packed["w4"], packed["b4"], packed["ps4"],
                 packed["fw1"], packed["fb1"], packed["fw2"], packed["fb2"])

    vmem_full = pl.BlockSpec(memory_space=pltpu.MemorySpace.VMEM)
    in_specs = ([pl.BlockSpec((None, m1, k1p), lambda b: (b, 0, 0))]
                + [vmem_full] * (len(kernel_in) - 1))

    if feat:
        out_shape = (jax.ShapeDtypeStruct((n, 8, LANE), jnp.float32),
                     jax.ShapeDtypeStruct((n, 8, FC1_PAD), jnp.float32))
        out_specs = (pl.BlockSpec((None, 8, LANE), lambda b: (b, 0, 0)),
                     pl.BlockSpec((None, 8, FC1_PAD), lambda b: (b, 0, 0)))
    else:
        out_shape = jax.ShapeDtypeStruct((n, 8, LANE), jnp.float32)
        out_specs = pl.BlockSpec((None, 8, LANE), lambda b: (b, 0, 0))

    result = pl.pallas_call(
        kernel,
        grid=(n,),
        in_specs=in_specs,
        out_specs=out_specs,
        out_shape=out_shape,
        compiler_params=pltpu.CompilerParams(
            dimension_semantics=("parallel",),
            vmem_limit_bytes=16 * 1024 * 1024),
    )(*kernel_in)

    if feat:
        logits_p, feat_p = result
        return logits_p[:, 0, :classes], feat_p[:, 0, :FC1_REAL]
    return result[:, 0, :classes]


# ----------------------------------------------------------------------------
# Pure-JAX reference (numeric validation)
# ----------------------------------------------------------------------------
def _ref_forward(params, x_nchw):
    x = jnp.transpose(x_nchw, (0, 2, 3, 1)).astype(jnp.float32)

    def conv(x, w, b, pad):
        y = lax.conv_general_dilated(
            x, w, window_strides=(1, 1),
            padding=[(pad, pad), (pad, pad)],
            dimension_numbers=("NHWC", "HWIO", "NHWC"),
            precision=lax.Precision.HIGHEST)
        return jax.nn.relu(y + b)

    def pool(x):
        return lax.reduce_window(x, -jnp.inf, lax.max,
                                 (1, 2, 2, 1), (1, 2, 2, 1), "VALID")

    x = pool(conv(x, params["conv1_w"], params["conv1_b"], 0))
    x = pool(conv(x, params["conv2_w"], params["conv2_b"], 0))
    x = pool(conv(x, params["conv3_w"], params["conv3_b"], 1))
    x = pool(conv(x, params["conv4_w"], params["conv4_b"], 1))
    x = x.reshape(-1, 50)
    feature = jax.nn.relu(
        jnp.dot(x, params["fc1_w"], precision=lax.Precision.HIGHEST)
        + params["fc1_b"])
    return (jnp.dot(feature, params["fc2_w"], precision=lax.Precision.HIGHEST)
            + params["fc2_b"])


if __name__ == "__main__":
    batch, channels, spatial, classes = 2, 1, 28, 10  # 28->24->12->8->4->4->2->2->1
    key = jax.random.PRNGKey(0)
    k_x, k_p = jax.random.split(key)
    x = jax.random.normal(k_x, (batch, channels, spatial, spatial), jnp.float32)
    params = init_params(k_p, channels, classes)

    packed = pack_params(params, channels, classes, spatial, spatial)
    fwd = jax.jit(functools.partial(large_forward, classes=classes, feat=False))
    logits = jax.block_until_ready(fwd(packed, x))
    assert logits.shape == (batch, classes), logits.shape

    ref = _ref_forward(params, x)
    max_err = float(jnp.max(jnp.abs(logits - ref)))
    # bf16 MXU operands with f32 accumulation -> loosened tolerance.
    assert jnp.allclose(logits, ref, rtol=8e-2, atol=8e-2), max_err

    print("KERNEL_OK")
</pallas_src>

<mosaic_0001>
module attributes {stable_mosaic.version = 11 : i64} {
  func.func @kernel(%arg0: i32, %arg1: memref<1x576x32xbf16, #tpu.memory_space<vmem>>, %arg2: memref<32x128xbf16, #tpu.memory_space<vmem>>, %arg3: memref<1x128xf32, #tpu.memory_space<vmem>>, %arg4: memref<144x551xbf16, #tpu.memory_space<vmem>>, %arg5: memref<5x5x32x128xbf16, #tpu.memory_space<vmem>>, %arg6: memref<1x128xf32, #tpu.memory_space<vmem>>, %arg7: memref<3x3x64x128xbf16, #tpu.memory_space<vmem>>, %arg8: memref<1x128xf32, #tpu.memory_space<vmem>>, %arg9: memref<36x79xbf16, #tpu.memory_space<vmem>>, %arg10: memref<3x3x64x128xbf16, #tpu.memory_space<vmem>>, %arg11: memref<1x128xf32, #tpu.memory_space<vmem>>, %arg12: memref<16x15xbf16, #tpu.memory_space<vmem>>, %arg13: memref<64x512xbf16, #tpu.memory_space<vmem>>, %arg14: memref<1x512xf32, #tpu.memory_space<vmem>>, %arg15: memref<512x128xbf16, #tpu.memory_space<vmem>>, %arg16: memref<1x128xf32, #tpu.memory_space<vmem>>, %arg17: memref<1x8x128xf32, #tpu.memory_space<vmem>>) attributes {dimension_semantics = [#tpu.dimension_semantics<parallel>], iteration_bounds = array<i64: 2>, scalar_prefetch = 0 : i64, scratch_operands = 0 : i64, tpu.core_type = #tpu.core_type<tc>, window_params = [{transform_indices = @transform_0, window_bounds = array<i64: 1, 576, 32>}, {pipeline_mode = #tpu.pipeline_mode<synchronous>, transform_indices = @transform_1, window_bounds = array<i64: 32, 128>}, {pipeline_mode = #tpu.pipeline_mode<synchronous>, transform_indices = @transform_2, window_bounds = array<i64: 1, 128>}, {pipeline_mode = #tpu.pipeline_mode<synchronous>, transform_indices = @transform_3, window_bounds = array<i64: 144, 551>}, {pipeline_mode = #tpu.pipeline_mode<synchronous>, transform_indices = @transform_4, window_bounds = array<i64: 5, 5, 32, 128>}, {pipeline_mode = #tpu.pipeline_mode<synchronous>, transform_indices = @transform_5, window_bounds = array<i64: 1, 128>}, {pipeline_mode = #tpu.pipeline_mode<synchronous>, transform_indices = @transform_6, window_bounds = array<i64: 3, 3, 64, 128>}, {pipeline_mode = #tpu.pipeline_mode<synchronous>, transform_indices = @transform_7, window_bounds = array<i64: 1, 128>}, {pipeline_mode = #tpu.pipeline_mode<synchronous>, transform_indices = @transform_8, window_bounds = array<i64: 36, 79>}, {pipeline_mode = #tpu.pipeline_mode<synchronous>, transform_indices = @transform_9, window_bounds = array<i64: 3, 3, 64, 128>}, {pipeline_mode = #tpu.pipeline_mode<synchronous>, transform_indices = @transform_10, window_bounds = array<i64: 1, 128>}, {pipeline_mode = #tpu.pipeline_mode<synchronous>, transform_indices = @transform_11, window_bounds = array<i64: 16, 15>}, {pipeline_mode = #tpu.pipeline_mode<synchronous>, transform_indices = @transform_12, window_bounds = array<i64: 64, 512>}, {pipeline_mode = #tpu.pipeline_mode<synchronous>, transform_indices = @transform_13, window_bounds = array<i64: 1, 512>}, {pipeline_mode = #tpu.pipeline_mode<synchronous>, transform_indices = @transform_14, window_bounds = array<i64: 512, 128>}, {pipeline_mode = #tpu.pipeline_mode<synchronous>, transform_indices = @transform_15, window_bounds = array<i64: 1, 128>}, {transform_indices = @transform_16, window_bounds = array<i64: 1, 8, 128>}]} {
    %c0 = arith.constant 0 : index
    %c0_0 = arith.constant 0 : index
    %c0_1 = arith.constant 0 : index
    %0 = vector.load %arg1[%c0, %c0_0, %c0_1] : memref<1x576x32xbf16, #tpu.memory_space<vmem>>, vector<1x576x32xbf16>
    %1 = vector.shape_cast %0 : vector<1x576x32xbf16> to vector<576x32xbf16>
    %c0_2 = arith.constant 0 : index
    %c0_3 = arith.constant 0 : index
    %2 = vector.load %arg2[%c0_2, %c0_3] : memref<32x128xbf16, #tpu.memory_space<vmem>>, vector<32x128xbf16>
    %cst = arith.constant dense<0.000000e+00> : vector<576x128xf32>
    %3 = tpu.matmul %1, %2, %cst {dimension_numbers = #tpu.dot_dimension_numbers<[1], [0], [0], [1], [0, 0, 1, 1], [], []>} : vector<576x32xbf16>, vector<32x128xbf16>, vector<576x128xf32> -> vector<576x128xf32>
    %c0_4 = arith.constant 0 : index
    %c0_5 = arith.constant 0 : index
    %4 = vector.load %arg3[%c0_4, %c0_5] : memref<1x128xf32, #tpu.memory_space<vmem>>, vector<1x128xf32>
    %5 = vector.broadcast %4 : vector<1x128xf32> to vector<576x128xf32>
    %6 = arith.addf %3, %5 : vector<576x128xf32>
    %cst_6 = arith.constant 0.000000e+00 : f32
    %7 = vector.broadcast %cst_6 : f32 to vector<576x128xf32>
    %8 = arith.maximumf %6, %7 : vector<576x128xf32>
    %9 = vector.extract_strided_slice %8 {offsets = [0, 0], sizes = [575, 128], strides = [1, 1]} : vector<576x128xf32> to vector<575x128xf32>
    %10 = vector.extract_strided_slice %8 {offsets = [1, 0], sizes = [575, 128], strides = [1, 1]} : vector<576x128xf32> to vector<575x128xf32>
    %11 = arith.maximumf %9, %10 : vector<575x128xf32>
    %12 = vector.extract_strided_slice %11 {offsets = [0, 0], sizes = [551, 128], strides = [1, 1]} : vector<575x128xf32> to vector<551x128xf32>
    %13 = vector.extract_strided_slice %11 {offsets = [24, 0], sizes = [551, 128], strides = [1, 1]} : vector<575x128xf32> to vector<551x128xf32>
    %14 = arith.maximumf %12, %13 : vector<551x128xf32>
    %c0_7 = arith.constant 0 : index
    %c0_8 = arith.constant 0 : index
    %15 = vector.load %arg4[%c0_7, %c0_8] : memref<144x551xbf16, #tpu.memory_space<vmem>>, vector<144x551xbf16>
    %16 = arith.truncf %14 : vector<551x128xf32> to vector<551x128xbf16>
    %cst_9 = arith.constant dense<0.000000e+00> : vector<144x128xf32>
    %17 = tpu.matmul %15, %16, %cst_9 {dimension_numbers = #tpu.dot_dimension_numbers<[1], [0], [0], [1], [0, 0, 1, 1], [], []>} : vector<144x551xbf16>, vector<551x128xbf16>, vector<144x128xf32> -> vector<144x128xf32>
    %18 = vector.extract_strided_slice %17 {offsets = [0, 0], sizes = [144, 32], strides = [1, 1]} : vector<144x128xf32> to vector<144x32xf32>
    %19 = arith.truncf %18 : vector<144x32xf32> to vector<144x32xbf16>
    %c0_10 = arith.constant 0 : index
    %c0_11 = arith.constant 0 : index
    %20 = vector.load %arg6[%c0_10, %c0_11] : memref<1x128xf32, #tpu.memory_space<vmem>>, vector<1x128xf32>
    %cst_12 = arith.constant 0.000000e+00 : f32
    %21 = vector.broadcast %cst_12 : f32 to vector<92x128xf32>
    %22 = vector.extract_strided_slice %19 {offsets = [0, 0], sizes = [92, 32], strides = [1, 1]} : vector<144x32xbf16> to vector<92x32xbf16>
    %c0_13 = arith.constant 0 : index
    %c0_14 = arith.constant 0 : index
    %c0_15 = arith.constant 0 : index
    %c0_16 = arith.constant 0 : index
    %23 = vector.load %arg5[%c0_13, %c0_14, %c0_15, %c0_16] : memref<5x5x32x128xbf16, #tpu.memory_space<vmem>>, vector<1x1x32x128xbf16>
    %24 = vector.shape_cast %23 : vector<1x1x32x128xbf16> to vector<32x128xbf16>
    %cst_17 = arith.constant dense<0.000000e+00> : vector<92x128xf32>
    %25 = tpu.matmul %22, %24, %cst_17 {dimension_numbers = #tpu.dot_dimension_numbers<[1], [0], [0], [1], [0, 0, 1, 1], [], []>} : vector<92x32xbf16>, vector<32x128xbf16>, vector<92x128xf32> -> vector<92x128xf32>
    %26 = arith.addf %21, %25 : vector<92x128xf32>
    %27 = vector.extract_strided_slice %19 {offsets = [1, 0], sizes = [92, 32], strides = [1, 1]} : vector<144x32xbf16> to vector<92x32xbf16>
    %c0_18 = arith.constant 0 : index
    %c1 = arith.constant 1 : index
    %c0_19 = arith.constant 0 : index
    %c0_20 = arith.constant 0 : index
    %28 = vector.load %arg5[%c0_18, %c1, %c0_19, %c0_20] : memref<5x5x32x128xbf16, #tpu.memory_space<vmem>>, vector<1x1x32x128xbf16>
    %29 = vector.shape_cast %28 : vector<1x1x32x128xbf16> to vector<32x128xbf16>
    %cst_21 = arith.constant dense<0.000000e+00> : vector<92x128xf32>
    %30 = tpu.matmul %27, %29, %cst_21 {dimension_numbers = #tpu.dot_dimension_numbers<[1], [0], [0], [1], [0, 0, 1, 1], [], []>} : vector<92x32xbf16>, vector<32x128xbf16>, vector<92x128xf32> -> vector<92x128xf32>
    %31 = arith.addf %26, %30 : vector<92x128xf32>
    %32 = vector.extract_strided_slice %19 {offsets = [2, 0], sizes = [92, 32], strides = [1, 1]} : vector<144x32xbf16> to vector<92x32xbf16>
    %c0_22 = arith.constant 0 : index
    %c2 = arith.constant 2 : index
    %c0_23 = arith.constant 0 : index
    %c0_24 = arith.constant 0 : index
    %33 = vector.load %arg5[%c0_22, %c2, %c0_23, %c0_24] : memref<5x5x32x128xbf16, #tpu.memory_space<vmem>>, vector<1x1x32x128xbf16>
    %34 = vector.shape_cast %33 : vector<1x1x32x128xbf16> to vector<32x128xbf16>
    %cst_25 = arith.constant dense<0.000000e+00> : vector<92x128xf32>
    %35 = tpu.matmul %32, %34, %cst_25 {dimension_numbers = #tpu.dot_dimension_numbers<[1], [0], [0], [1], [0, 0, 1, 1], [], []>} : vector<92x32xbf16>, vector<32x128xbf16>, vector<92x128xf32> -> vector<92x128xf32>
    %36 = arith.addf %31, %35 : vector<92x128xf32>
    %37 = vector.extract_strided_slice %19 {offsets = [3, 0], sizes = [92, 32], strides = [1, 1]} : vector<144x32xbf16> to vector<92x32xbf16>
    %c0_26 = arith.constant 0 : index
    %c3 = arith.constant 3 : index
    %c0_27 = arith.constant 0 : index
    %c0_28 = arith.constant 0 : index
    %38 = vector.load %arg5[%c0_26, %c3, %c0_27, %c0_28] : memref<5x5x32x128xbf16, #tpu.memory_space<vmem>>, vector<1x1x32x128xbf16>
    %39 = vector.shape_cast %38 : vector<1x1x32x128xbf16> to vector<32x128xbf16>
    %cst_29 = arith.constant dense<0.000000e+00> : vector<92x128xf32>
    %40 = tpu.matmul %37, %39, %cst_29 {dimension_numbers = #tpu.dot_dimension_numbers<[1], [0], [0], [1], [0, 0, 1, 1], [], []>} : vector<92x32xbf16>, vector<32x128xbf16>, vector<92x128xf32> -> vector<92x128xf32>
    %41 = arith.addf %36, %40 : vector<92x128xf32>
    %42 = vector.extract_strided_slice %19 {offsets = [4, 0], sizes = [92, 32], strides = [1, 1]} : vector<144x32xbf16> to vector<92x32xbf16>
    %c0_30 = arith.constant 0 : index
    %c4 = arith.constant 4 : index
    %c0_31 = arith.constant 0 : index
    %c0_32 = arith.constant 0 : index
    %43 = vector.load %arg5[%c0_30, %c4, %c0_31, %c0_32] : memref<5x5x32x128xbf16, #tpu.memory_space<vmem>>, vector<1x1x32x128xbf16>
    %44 = vector.shape_cast %43 : vector<1x1x32x128xbf16> to vector<32x128xbf16>
    %cst_33 = arith.constant dense<0.000000e+00> : vector<92x128xf32>
    %45 = tpu.matmul %42, %44, %cst_33 {dimension_numbers = #tpu.dot_dimension_numbers<[1], [0], [0], [1], [0, 0, 1, 1], [], []>} : vector<92x32xbf16>, vector<32x128xbf16>, vector<92x128xf32> -> vector<92x128xf32>
    %46 = arith.addf %41, %45 : vector<92x128xf32>
    %47 = vector.extract_strided_slice %19 {offsets = [12, 0], sizes = [92, 32], strides = [1, 1]} : vector<144x32xbf16> to vector<92x32xbf16>
    %c1_34 = arith.constant 1 : index
    %c0_35 = arith.constant 0 : index
    %c0_36 = arith.constant 0 : index
    %c0_37 = arith.constant 0 : index
    %48 = vector.load %arg5[%c1_34, %c0_35, %c0_36, %c0_37] : memref<5x5x32x128xbf16, #tpu.memory_space<vmem>>, vector<1x1x32x128xbf16>
    %49 = vector.shape_cast %48 : vector<1x1x32x128xbf16> to vector<32x128xbf16>
    %cst_38 = arith.constant dense<0.000000e+00> : vector<92x128xf32>
    %50 = tpu.matmul %47, %49, %cst_38 {dimension_numbers = #tpu.dot_dimension_numbers<[1], [0], [0], [1], [0, 0, 1, 1], [], []>} : vector<92x32xbf16>, vector<32x128xbf16>, vector<92x128xf32> -> vector<92x128xf32>
    %51 = arith.addf %46, %50 : vector<92x128xf32>
    %52 = vector.extract_strided_slice %19 {offsets = [13, 0], sizes = [92, 32], strides = [1, 1]} : vector<144x32xbf16> to vector<92x32xbf16>
    %c1_39 = arith.constant 1 : index
    %c1_40 = arith.constant 1 : index
    %c0_41 = arith.constant 0 : index
    %c0_42 = arith.constant 0 : index
    %53 = vector.load %arg5[%c1_39, %c1_40, %c0_41, %c0_42] : memref<5x5x32x128xbf16, #tpu.memory_space<vmem>>, vector<1x1x32x128xbf16>
    %54 = vector.shape_cast %53 : vector<1x1x32x128xbf16> to vector<32x128xbf16>
    %cst_43 = arith.constant dense<0.000000e+00> : vector<92x128xf32>
    %55 = tpu.matmul %52, %54, %cst_43 {dimension_numbers = #tpu.dot_dimension_numbers<[1], [0], [0], [1], [0, 0, 1, 1], [], []>} : vector<92x32xbf16>, vector<32x128xbf16>, vector<92x128xf32> -> vector<92x128xf32>
    %56 = arith.addf %51, %55 : vector<92x128xf32>
    %57 = vector.extract_strided_slice %19 {offsets = [14, 0], sizes = [92, 32], strides = [1, 1]} : vector<144x32xbf16> to vector<92x32xbf16>
    %c1_44 = arith.constant 1 : index
    %c2_45 = arith.constant 2 : index
    %c0_46 = arith.constant 0 : index
    %c0_47 = arith.constant 0 : index
    %58 = vector.load %arg5[%c1_44, %c2_45, %c0_46, %c0_47] : memref<5x5x32x128xbf16, #tpu.memory_space<vmem>>, vector<1x1x32x128xbf16>
    %59 = vector.shape_cast %58 : vector<1x1x32x128xbf16> to vector<32x128xbf16>
    %cst_48 = arith.constant dense<0.000000e+00> : vector<92x128xf32>
    %60 = tpu.matmul %57, %59, %cst_48 {dimension_numbers = #tpu.dot_dimension_numbers<[1], [0], [0], [1], [0, 0, 1, 1], [], []>} : vector<92x32xbf16>, vector<32x128xbf16>, vector<92x128xf32> -> vector<92x128xf32>
    %61 = arith.addf %56, %60 : vector<92x128xf32>
    %62 = vector.extract_strided_slice %19 {offsets = [15, 0], sizes = [92, 32], strides = [1, 1]} : vector<144x32xbf16> to vector<92x32xbf16>
    %c1_49 = arith.constant 1 : index
    %c3_50 = arith.constant 3 : index
    %c0_51 = arith.constant 0 : index
    %c0_52 = arith.constant 0 : index
    %63 = vector.load %arg5[%c1_49, %c3_50, %c0_51, %c0_52] : memref<5x5x32x128xbf16, #tpu.memory_space<vmem>>, vector<1x1x32x128xbf16>
    %64 = vector.shape_cast %63 : vector<1x1x32x128xbf16> to vector<32x128xbf16>
    %cst_53 = arith.constant dense<0.000000e+00> : vector<92x128xf32>
    %65 = tpu.matmul %62, %64, %cst_53 {dimension_numbers = #tpu.dot_dimension_numbers<[1], [0], [0], [1], [0, 0, 1, 1], [], []>} : vector<92x32xbf16>, vector<32x128xbf16>, vector<92x128xf32> -> vector<92x128xf32>
    %66 = arith.addf %61, %65 : vector<92x128xf32>
    %67 = vector.extract_strided_slice %19 {offsets = [16, 0], sizes = [92, 32], strides = [1, 1]} : vector<144x32xbf16> to vector<92x32xbf16>
    %c1_54 = arith.constant 1 : index
    %c4_55 = arith.constant 4 : index
    %c0_56 = arith.constant 0 : index
    %c0_57 = arith.constant 0 : index
    %68 = vector.load %arg5[%c1_54, %c4_55, %c0_56, %c0_57] : memref<5x5x32x128xbf16, #tpu.memory_space<vmem>>, vector<1x1x32x128xbf16>
    %69 = vector.shape_cast %68 : vector<1x1x32x128xbf16> to vector<32x128xbf16>
    %cst_58 = arith.constant dense<0.000000e+00> : vector<92x128xf32>
    %70 = tpu.matmul %67, %69, %cst_58 {dimension_numbers = #tpu.dot_dimension_numbers<[1], [0], [0], [1], [0, 0, 1, 1], [], []>} : vector<92x32xbf16>, vector<32x128xbf16>, vector<92x128xf32> -> vector<92x128xf32>
    %71 = arith.addf %66, %70 : vector<92x128xf32>
    %72 = vector.extract_strided_slice %19 {offsets = [24, 0], sizes = [92, 32], strides = [1, 1]} : vector<144x32xbf16> to vector<92x32xbf16>
    %c2_59 = arith.constant 2 : index
    %c0_60 = arith.constant 0 : index
    %c0_61 = arith.constant 0 : index
    %c0_62 = arith.constant 0 : index
    %73 = vector.load %arg5[%c2_59, %c0_60, %c0_61, %c0_62] : memref<5x5x32x128xbf16, #tpu.memory_space<vmem>>, vector<1x1x32x128xbf16>
    %74 = vector.shape_cast %73 : vector<1x1x32x128xbf16> to vector<32x128xbf16>
    %cst_63 = arith.constant dense<0.000000e+00> : vector<92x128xf32>
    %75 = tpu.matmul %72, %74, %cst_63 {dimension_numbers = #tpu.dot_dimension_numbers<[1], [0], [0], [1], [0, 0, 1, 1], [], []>} : vector<92x32xbf16>, vector<32x128xbf16>, vector<92x128xf32> -> vector<92x128xf32>
    %76 = arith.addf %71, %75 : vector<92x128xf32>
    %77 = vector.extract_strided_slice %19 {offsets = [25, 0], sizes = [92, 32], strides = [1, 1]} : vector<144x32xbf16> to vector<92x32xbf16>
    %c2_64 = arith.constant 2 : index
    %c1_65 = arith.constant 1 : index
    %c0_66 = arith.constant 0 : index
    %c0_67 = arith.constant 0 : index
    %78 = vector.load %arg5[%c2_64, %c1_65, %c0_66, %c0_67] : memref<5x5x32x128xbf16, #tpu.memory_space<vmem>>, vector<1x1x32x128xbf16>
    %79 = vector.shape_cast %78 : vector<1x1x32x128xbf16> to vector<32x128xbf16>
    %cst_68 = arith.constant dense<0.000000e+00> : vector<92x128xf32>
    %80 = tpu.matmul %77, %79, %cst_68 {dimension_numbers = #tpu.dot_dimension_numbers<[1], [0], [0], [1], [0, 0, 1, 1], [], []>} : vector<92x32xbf16>, vector<32x128xbf16>, vector<92x128xf32> -> vector<92x128xf32>
    %81 = arith.addf %76, %80 : vector<92x128xf32>
    %82 = vector.extract_strided_slice %19 {offsets = [26, 0], sizes = [92, 32], strides = [1, 1]} : vector<144x32xbf16> to vector<92x32xbf16>
    %c2_69 = arith.constant 2 : index
    %c2_70 = arith.constant 2 : index
    %c0_71 = arith.constant 0 : index
    %c0_72 = arith.constant 0 : index
    %83 = vector.load %arg5[%c2_69, %c2_70, %c0_71, %c0_72] : memref<5x5x32x128xbf16, #tpu.memory_space<vmem>>, vector<1x1x32x128xbf16>
    %84 = vector.shape_cast %83 : vector<1x1x32x128xbf16> to vector<32x128xbf16>
    %cst_73 = arith.constant dense<0.000000e+00> : vector<92x128xf32>
    %85 = tpu.matmul %82, %84, %cst_73 {dimension_numbers = #tpu.dot_dimension_numbers<[1], [0], [0], [1], [0, 0, 1, 1], [], []>} : vector<92x32xbf16>, vector<32x128xbf16>, vector<92x128xf32> -> vector<92x128xf32>
    %86 = arith.addf %81, %85 : vector<92x128xf32>
    %87 = vector.extract_strided_slice %19 {offsets = [27, 0], sizes = [92, 32], strides = [1, 1]} : vector<144x32xbf16> to vector<92x32xbf16>
    %c2_74 = arith.constant 2 : index
    %c3_75 = arith.constant 3 : index
    %c0_76 = arith.constant 0 : index
    %c0_77 = arith.constant 0 : index
    %88 = vector.load %arg5[%c2_74, %c3_75, %c0_76, %c0_77] : memref<5x5x32x128xbf16, #tpu.memory_space<vmem>>, vector<1x1x32x128xbf16>
    %89 = vector.shape_cast %88 : vector<1x1x32x128xbf16> to vector<32x128xbf16>
    %cst_78 = arith.constant dense<0.000000e+00> : vector<92x128xf32>
    %90 = tpu.matmul %87, %89, %cst_78 {dimension_numbers = #tpu.dot_dimension_numbers<[1], [0], [0], [1], [0, 0, 1, 1], [], []>} : vector<92x32xbf16>, vector<32x128xbf16>, vector<92x128xf32> -> vector<92x128xf32>
    %91 = arith.addf %86, %90 : vector<92x128xf32>
    %92 = vector.extract_strided_slice %19 {offsets = [28, 0], sizes = [92, 32], strides = [1, 1]} : vector<144x32xbf16> to vector<92x32xbf16>
    %c2_79 = arith.constant 2 : index
    %c4_80 = arith.constant 4 : index
    %c0_81 = arith.constant 0 : index
    %c0_82 = arith.constant 0 : index
    %93 = vector.load %arg5[%c2_79, %c4_80, %c0_81, %c0_82] : memref<5x5x32x128xbf16, #tpu.memory_space<vmem>>, vector<1x1x32x128xbf16>
    %94 = vector.shape_cast %93 : vector<1x1x32x128xbf16> to vector<32x128xbf16>
    %cst_83 = arith.constant dense<0.000000e+00> : vector<92x128xf32>
    %95 = tpu.matmul %92, %94, %cst_83 {dimension_numbers = #tpu.dot_dimension_numbers<[1], [0], [0], [1], [0, 0, 1, 1], [], []>} : vector<92x32xbf16>, vector<32x128xbf16>, vector<92x128xf32> -> vector<92x128xf32>
    %96 = arith.addf %91, %95 : vector<92x128xf32>
    %97 = vector.extract_strided_slice %19 {offsets = [36, 0], sizes = [92, 32], strides = [1, 1]} : vector<144x32xbf16> to vector<92x32xbf16>
    %c3_84 = arith.constant 3 : index
    %c0_85 = arith.constant 0 : index
    %c0_86 = arith.constant 0 : index
    %c0_87 = arith.constant 0 : index
    %98 = vector.load %arg5[%c3_84, %c0_85, %c0_86, %c0_87] : memref<5x5x32x128xbf16, #tpu.memory_space<vmem>>, vector<1x1x32x128xbf16>
    %99 = vector.shape_cast %98 : vector<1x1x32x128xbf16> to vector<32x128xbf16>
    %cst_88 = arith.constant dense<0.000000e+00> : vector<92x128xf32>
    %100 = tpu.matmul %97, %99, %cst_88 {dimension_numbers = #tpu.dot_dimension_numbers<[1], [0], [0], [1], [0, 0, 1, 1], [], []>} : vector<92x32xbf16>, vector<32x128xbf16>, vector<92x128xf32> -> vector<92x128xf32>
    %101 = arith.addf %96, %100 : vector<92x128xf32>
    %102 = vector.extract_strided_slice %19 {offsets = [37, 0], sizes = [92, 32], strides = [1, 1]} : vector<144x32xbf16> to vector<92x32xbf16>
    %c3_89 = arith.constant 3 : index
    %c1_90 = arith.constant 1 : index
    %c0_91 = arith.constant 0 : index
    %c0_92 = arith.constant 0 : index
    %103 = vector.load %arg5[%c3_89, %c1_90, %c0_91, %c0_92] : memref<5x5x32x128xbf16, #tpu.memory_space<vmem>>, vector<1x1x32x128xbf16>
    %104 = vector.shape_cast %103 : vector<1x1x32x128xbf16> to vector<32x128xbf16>
    %cst_93 = arith.constant dense<0.000000e+00> : vector<92x128xf32>
    %105 = tpu.matmul %102, %104, %cst_93 {dimension_numbers = #tpu.dot_dimension_numbers<[1], [0], [0], [1], [0, 0, 1, 1], [], []>} : vector<92x32xbf16>, vector<32x128xbf16>, vector<92x128xf32> -> vector<92x128xf32>
    %106 = arith.addf %101, %105 : vector<92x128xf32>
    %107 = vector.extract_strided_slice %19 {offsets = [38, 0], sizes = [92, 32], strides = [1, 1]} : vector<144x32xbf16> to vector<92x32xbf16>
    %c3_94 = arith.constant 3 : index
    %c2_95 = arith.constant 2 : index
    %c0_96 = arith.constant 0 : index
    %c0_97 = arith.constant 0 : index
    %108 = vector.load %arg5[%c3_94, %c2_95, %c0_96, %c0_97] : memref<5x5x32x128xbf16, #tpu.memory_space<vmem>>, vector<1x1x32x128xbf16>
    %109 = vector.shape_cast %108 : vector<1x1x32x128xbf16> to vector<32x128xbf16>
    %cst_98 = arith.constant dense<0.000000e+00> : vector<92x128xf32>
    %110 = tpu.matmul %107, %109, %cst_98 {dimension_numbers = #tpu.dot_dimension_numbers<[1], [0], [0], [1], [0, 0, 1, 1], [], []>} : vector<92x32xbf16>, vector<32x128xbf16>, vector<92x128xf32> -> vector<92x128xf32>
    %111 = arith.addf %106, %110 : vector<92x128xf32>
    %112 = vector.extract_strided_slice %19 {offsets = [39, 0], sizes = [92, 32], strides = [1, 1]} : vector<144x32xbf16> to vector<92x32xbf16>
    %c3_99 = arith.constant 3 : index
    %c3_100 = arith.constant 3 : index
    %c0_101 = arith.constant 0 : index
    %c0_102 = arith.constant 0 : index
    %113 = vector.load %arg5[%c3_99, %c3_100, %c0_101, %c0_102] : memref<5x5x32x128xbf16, #tpu.memory_space<vmem>>, vector<1x1x32x128xbf16>
    %114 = vector.shape_cast %113 : vector<1x1x32x128xbf16> to vector<32x128xbf16>
    %cst_103 = arith.constant dense<0.000000e+00> : vector<92x128xf32>
    %115 = tpu.matmul %112, %114, %cst_103 {dimension_numbers = #tpu.dot_dimension_numbers<[1], [0], [0], [1], [0, 0, 1, 1], [], []>} : vector<92x32xbf16>, vector<32x128xbf16>, vector<92x128xf32> -> vector<92x128xf32>
    %116 = arith.addf %111, %115 : vector<92x128xf32>
    %117 = vector.extract_strided_slice %19 {offsets = [40, 0], sizes = [92, 32], strides = [1, 1]} : vector<144x32xbf16> to vector<92x32xbf16>
    %c3_104 = arith.constant 3 : index
    %c4_105 = arith.constant 4 : index
    %c0_106 = arith.constant 0 : index
    %c0_107 = arith.constant 0 : index
    %118 = vector.load %arg5[%c3_104, %c4_105, %c0_106, %c0_107] : memref<5x5x32x128xbf16, #tpu.memory_space<vmem>>, vector<1x1x32x128xbf16>
    %119 = vector.shape_cast %118 : vector<1x1x32x128xbf16> to vector<32x128xbf16>
    %cst_108 = arith.constant dense<0.000000e+00> : vector<92x128xf32>
    %120 = tpu.matmul %117, %119, %cst_108 {dimension_numbers = #tpu.dot_dimension_numbers<[1], [0], [0], [1], [0, 0, 1, 1], [], []>} : vector<92x32xbf16>, vector<32x128xbf16>, vector<92x128xf32> -> vector<92x128xf32>
    %121 = arith.addf %116, %120 : vector<92x128xf32>
    %122 = vector.extract_strided_slice %19 {offsets = [48, 0], sizes = [92, 32], strides = [1, 1]} : vector<144x32xbf16> to vector<92x32xbf16>
    %c4_109 = arith.constant 4 : index
    %c0_110 = arith.constant 0 : index
    %c0_111 = arith.constant 0 : index
    %c0_112 = arith.constant 0 : index
    %123 = vector.load %arg5[%c4_109, %c0_110, %c0_111, %c0_112] : memref<5x5x32x128xbf16, #tpu.memory_space<vmem>>, vector<1x1x32x128xbf16>
    %124 = vector.shape_cast %123 : vector<1x1x32x128xbf16> to vector<32x128xbf16>
    %cst_113 = arith.constant dense<0.000000e+00> : vector<92x128xf32>
    %125 = tpu.matmul %122, %124, %cst_113 {dimension_numbers = #tpu.dot_dimension_numbers<[1], [0], [0], [1], [0, 0, 1, 1], [], []>} : vector<92x32xbf16>, vector<32x128xbf16>, vector<92x128xf32> -> vector<92x128xf32>
    %126 = arith.addf %121, %125 : vector<92x128xf32>
    %127 = vector.extract_strided_slice %19 {offsets = [49, 0], sizes = [92, 32], strides = [1, 1]} : vector<144x32xbf16> to vector<92x32xbf16>
    %c4_114 = arith.constant 4 : index
    %c1_115 = arith.constant 1 : index
    %c0_116 = arith.constant 0 : index
    %c0_117 = arith.constant 0 : index
    %128 = vector.load %arg5[%c4_114, %c1_115, %c0_116, %c0_117] : memref<5x5x32x128xbf16, #tpu.memory_space<vmem>>, vector<1x1x32x128xbf16>
    %129 = vector.shape_cast %128 : vector<1x1x32x128xbf16> to vector<32x128xbf16>
    %cst_118 = arith.constant dense<0.000000e+00> : vector<92x128xf32>
    %130 = tpu.matmul %127, %129, %cst_118 {dimension_numbers = #tpu.dot_dimension_numbers<[1], [0], [0], [1], [0, 0, 1, 1], [], []>} : vector<92x32xbf16>, vector<32x128xbf16>, vector<92x128xf32> -> vector<92x128xf32>
    %131 = arith.addf %126, %130 : vector<92x128xf32>
    %132 = vector.extract_strided_slice %19 {offsets = [50, 0], sizes = [92, 32], strides = [1, 1]} : vector<144x32xbf16> to vector<92x32xbf16>
    %c4_119 = arith.constant 4 : index
    %c2_120 = arith.constant 2 : index
    %c0_121 = arith.constant 0 : index
    %c0_122 = arith.constant 0 : index
    %133 = vector.load %arg5[%c4_119, %c2_120, %c0_121, %c0_122] : memref<5x5x32x128xbf16, #tpu.memory_space<vmem>>, vector<1x1x32x128xbf16>
    %134 = vector.shape_cast %133 : vector<1x1x32x128xbf16> to vector<32x128xbf16>
    %cst_123 = arith.constant dense<0.000000e+00> : vector<92x128xf32>
    %135 = tpu.matmul %132, %134, %cst_123 {dimension_numbers = #tpu.dot_dimension_numbers<[1], [0], [0], [1], [0, 0, 1, 1], [], []>} : vector<92x32xbf16>, vector<32x128xbf16>, vector<92x128xf32> -> vector<92x128xf32>
    %136 = arith.addf %131, %135 : vector<92x128xf32>
    %137 = vector.extract_strided_slice %19 {offsets = [51, 0], sizes = [92, 32], strides = [1, 1]} : vector<144x32xbf16> to vector<92x32xbf16>
    %c4_124 = arith.constant 4 : index
    %c3_125 = arith.constant 3 : index
    %c0_126 = arith.constant 0 : index
    %c0_127 = arith.constant 0 : index
    %138 = vector.load %arg5[%c4_124, %c3_125, %c0_126, %c0_127] : memref<5x5x32x128xbf16, #tpu.memory_space<vmem>>, vector<1x1x32x128xbf16>
    %139 = vector.shape_cast %138 : vector<1x1x32x128xbf16> to vector<32x128xbf16>
    %cst_128 = arith.constant dense<0.000000e+00> : vector<92x128xf32>
    %140 = tpu.matmul %137, %139, %cst_128 {dimension_numbers = #tpu.dot_dimension_numbers<[1], [0], [0], [1], [0, 0, 1, 1], [], []>} : vector<92x32xbf16>, vector<32x128xbf16>, vector<92x128xf32> -> vector<92x128xf32>
    %141 = arith.addf %136, %140 : vector<92x128xf32>
    %142 = vector.extract_strided_slice %19 {offsets = [52, 0], sizes = [92, 32], strides = [1, 1]} : vector<144x32xbf16> to vector<92x32xbf16>
    %c4_129 = arith.constant 4 : index
    %c4_130 = arith.constant 4 : index
    %c0_131 = arith.constant 0 : index
    %c0_132 = arith.constant 0 : index
    %143 = vector.load %arg5[%c4_129, %c4_130, %c0_131, %c0_132] : memref<5x5x32x128xbf16, #tpu.memory_space<vmem>>, vector<1x1x32x128xbf16>
    %144 = vector.shape_cast %143 : vector<1x1x32x128xbf16> to vector<32x128xbf16>
    %cst_133 = arith.constant dense<0.000000e+00> : vector<92x128xf32>
    %145 = tpu.matmul %142, %144, %cst_133 {dimension_numbers = #tpu.dot_dimension_numbers<[1], [0], [0], [1], [0, 0, 1, 1], [], []>} : vector<92x32xbf16>, vector<32x128xbf16>, vector<92x128xf32> -> vector<92x128xf32>
    %146 = arith.addf %141, %145 : vector<92x128xf32>
    %147 = vector.broadcast %20 : vector<1x128xf32> to vector<92x128xf32>
    %148 = arith.addf %146, %147 : vector<92x128xf32>
    %cst_134 = arith.constant 0.000000e+00 : f32
    %149 = vector.broadcast %cst_134 : f32 to vector<92x128xf32>
    %150 = arith.maximumf %148, %149 : vector<92x128xf32>
    %151 = vector.extract_strided_slice %150 {offsets = [0, 0], sizes = [91, 128], strides = [1, 1]} : vector<92x128xf32> to vector<91x128xf32>
    %152 = vector.extract_strided_slice %150 {offsets = [1, 0], sizes = [91, 128], strides = [1, 1]} : vector<92x128xf32> to vector<91x128xf32>
    %153 = arith.maximumf %151, %152 : vector<91x128xf32>
    %154 = vector.extract_strided_slice %153 {offsets = [0, 0], sizes = [79, 128], strides = [1, 1]} : vector<91x128xf32> to vector<79x128xf32>
    %155 = vector.extract_strided_slice %153 {offsets = [12, 0], sizes = [79, 128], strides = [1, 1]} : vector<91x128xf32> to vector<79x128xf32>
    %156 = arith.maximumf %154, %155 : vector<79x128xf32>
    %c0_135 = arith.constant 0 : index
    %c0_136 = arith.constant 0 : index
    %157 = vector.load %arg9[%c0_135, %c0_136] : memref<36x79xbf16, #tpu.memory_space<vmem>>, vector<36x79xbf16>
    %158 = arith.truncf %156 : vector<79x128xf32> to vector<79x128xbf16>
    %cst_137 = arith.constant dense<0.000000e+00> : vector<36x128xf32>
    %159 = tpu.matmul %157, %158, %cst_137 {dimension_numbers = #tpu.dot_dimension_numbers<[1], [0], [0], [1], [0, 0, 1, 1], [], []>} : vector<36x79xbf16>, vector<79x128xbf16>, vector<36x128xf32> -> vector<36x128xf32>
    %160 = vector.extract_strided_slice %159 {offsets = [0, 0], sizes = [36, 64], strides = [1, 1]} : vector<36x128xf32> to vector<36x64xf32>
    %161 = arith.truncf %160 : vector<36x64xf32> to vector<36x64xbf16>
    %c0_138 = arith.constant 0 : index
    %c0_139 = arith.constant 0 : index
    %162 = vector.load %arg8[%c0_138, %c0_139] : memref<1x128xf32, #tpu.memory_space<vmem>>, vector<1x128xf32>
    %cst_140 = arith.constant 0.000000e+00 : f32
    %163 = vector.broadcast %cst_140 : f32 to vector<22x128xf32>
    %164 = vector.extract_strided_slice %161 {offsets = [0, 0], sizes = [22, 64], strides = [1, 1]} : vector<36x64xbf16> to vector<22x64xbf16>
    %c0_141 = arith.constant 0 : index
    %c0_142 = arith.constant 0 : index
    %c0_143 = arith.constant 0 : index
    %c0_144 = arith.constant 0 : index
    %165 = vector.load %arg7[%c0_141, %c0_142, %c0_143, %c0_144] : memref<3x3x64x128xbf16, #tpu.memory_space<vmem>>, vector<1x1x64x128xbf16>
    %166 = vector.shape_cast %165 : vector<1x1x64x128xbf16> to vector<64x128xbf16>
    %cst_145 = arith.constant dense<0.000000e+00> : vector<22x128xf32>
    %167 = tpu.matmul %164, %166, %cst_145 {dimension_numbers = #tpu.dot_dimension_numbers<[1], [0], [0], [1], [0, 0, 1, 1], [], []>} : vector<22x64xbf16>, vector<64x128xbf16>, vector<22x128xf32> -> vector<22x128xf32>
    %168 = arith.addf %163, %167 : vector<22x128xf32>
    %169 = vector.extract_strided_slice %161 {offsets = [1, 0], sizes = [22, 64], strides = [1, 1]} : vector<36x64xbf16> to vector<22x64xbf16>
    %c0_146 = arith.constant 0 : index
    %c1_147 = arith.constant 1 : index
    %c0_148 = arith.constant 0 : index
    %c0_149 = arith.constant 0 : index
    %170 = vector.load %arg7[%c0_146, %c1_147, %c0_148, %c0_149] : memref<3x3x64x128xbf16, #tpu.memory_space<vmem>>, vector<1x1x64x128xbf16>
    %171 = vector.shape_cast %170 : vector<1x1x64x128xbf16> to vector<64x128xbf16>
    %cst_150 = arith.constant dense<0.000000e+00> : vector<22x128xf32>
    %172 = tpu.matmul %169, %171, %cst_150 {dimension_numbers = #tpu.dot_dimension_numbers<[1], [0], [0], [1], [0, 0, 1, 1], [], []>} : vector<22x64xbf16>, vector<64x128xbf16>, vector<22x128xf32> -> vector<22x128xf32>
    %173 = arith.addf %168, %172 : vector<22x128xf32>
    %174 = vector.extract_strided_slice %161 {offsets = [2, 0], sizes = [22, 64], strides = [1, 1]} : vector<36x64xbf16> to vector<22x64xbf16>
    %c0_151 = arith.constant 0 : index
    %c2_152 = arith.constant 2 : index
    %c0_153 = arith.constant 0 : index
    %c0_154 = arith.constant 0 : index
    %175 = vector.load %arg7[%c0_151, %c2_152, %c0_153, %c0_154] : memref<3x3x64x128xbf16, #tpu.memory_space<vmem>>, vector<1x1x64x128xbf16>
    %176 = vector.shape_cast %175 : vector<1x1x64x128xbf16> to vector<64x128xbf16>
    %cst_155 = arith.constant dense<0.000000e+00> : vector<22x128xf32>
    %177 = tpu.matmul %174, %176, %cst_155 {dimension_numbers = #tpu.dot_dimension_numbers<[1], [0], [0], [1], [0, 0, 1, 1], [], []>} : vector<22x64xbf16>, vector<64x128xbf16>, vector<22x128xf32> -> vector<22x128xf32>
    %178 = arith.addf %173, %177 : vector<22x128xf32>
    %179 = vector.extract_strided_slice %161 {offsets = [6, 0], sizes = [22, 64], strides = [1, 1]} : vector<36x64xbf16> to vector<22x64xbf16>
    %c1_156 = arith.constant 1 : index
    %c0_157 = arith.constant 0 : index
    %c0_158 = arith.constant 0 : index
    %c0_159 = arith.constant 0 : index
    %180 = vector.load %arg7[%c1_156, %c0_157, %c0_158, %c0_159] : memref<3x3x64x128xbf16, #tpu.memory_space<vmem>>, vector<1x1x64x128xbf16>
    %181 = vector.shape_cast %180 : vector<1x1x64x128xbf16> to vector<64x128xbf16>
    %cst_160 = arith.constant dense<0.000000e+00> : vector<22x128xf32>
    %182 = tpu.matmul %179, %181, %cst_160 {dimension_numbers = #tpu.dot_dimension_numbers<[1], [0], [0], [1], [0, 0, 1, 1], [], []>} : vector<22x64xbf16>, vector<64x128xbf16>, vector<22x128xf32> -> vector<22x128xf32>
    %183 = arith.addf %178, %182 : vector<22x128xf32>
    %184 = vector.extract_strided_slice %161 {offsets = [7, 0], sizes = [22, 64], strides = [1, 1]} : vector<36x64xbf16> to vector<22x64xbf16>
    %c1_161 = arith.constant 1 : index
    %c1_162 = arith.constant 1 : index
    %c0_163 = arith.constant 0 : index
    %c0_164 = arith.constant 0 : index
    %185 = vector.load %arg7[%c1_161, %c1_162, %c0_163, %c0_164] : memref<3x3x64x128xbf16, #tpu.memory_space<vmem>>, vector<1x1x64x128xbf16>
    %186 = vector.shape_cast %185 : vector<1x1x64x128xbf16> to vector<64x128xbf16>
    %cst_165 = arith.constant dense<0.000000e+00> : vector<22x128xf32>
    %187 = tpu.matmul %184, %186, %cst_165 {dimension_numbers = #tpu.dot_dimension_numbers<[1], [0], [0], [1], [0, 0, 1, 1], [], []>} : vector<22x64xbf16>, vector<64x128xbf16>, vector<22x128xf32> -> vector<22x128xf32>
    %188 = arith.addf %183, %187 : vector<22x128xf32>
    %189 = vector.extract_strided_slice %161 {offsets = [8, 0], sizes = [22, 64], strides = [1, 1]} : vector<36x64xbf16> to vector<22x64xbf16>
    %c1_166 = arith.constant 1 : index
    %c2_167 = arith.constant 2 : index
    %c0_168 = arith.constant 0 : index
    %c0_169 = arith.constant 0 : index
    %190 = vector.load %arg7[%c1_166, %c2_167, %c0_168, %c0_169] : memref<3x3x64x128xbf16, #tpu.memory_space<vmem>>, vector<1x1x64x128xbf16>
    %191 = vector.shape_cast %190 : vector<1x1x64x128xbf16> to vector<64x128xbf16>
    %cst_170 = arith.constant dense<0.000000e+00> : vector<22x128xf32>
    %192 = tpu.matmul %189, %191, %cst_170 {dimension_numbers = #tpu.dot_dimension_numbers<[1], [0], [0], [1], [0, 0, 1, 1], [], []>} : vector<22x64xbf16>, vector<64x128xbf16>, vector<22x128xf32> -> vector<22x128xf32>
    %193 = arith.addf %188, %192 : vector<22x128xf32>
    %194 = vector.extract_strided_slice %161 {offsets = [12, 0], sizes = [22, 64], strides = [1, 1]} : vector<36x64xbf16> to vector<22x64xbf16>
    %c2_171 = arith.constant 2 : index
    %c0_172 = arith.constant 0 : index
    %c0_173 = arith.constant 0 : index
    %c0_174 = arith.constant 0 : index
    %195 = vector.load %arg7[%c2_171, %c0_172, %c0_173, %c0_174] : memref<3x3x64x128xbf16, #tpu.memory_space<vmem>>, vector<1x1x64x128xbf16>
    %196 = vector.shape_cast %195 : vector<1x1x64x128xbf16> to vector<64x128xbf16>
    %cst_175 = arith.constant dense<0.000000e+00> : vector<22x128xf32>
    %197 = tpu.matmul %194, %196, %cst_175 {dimension_numbers = #tpu.dot_dimension_numbers<[1], [0], [0], [1], [0, 0, 1, 1], [], []>} : vector<22x64xbf16>, vector<64x128xbf16>, vector<22x128xf32> -> vector<22x128xf32>
    %198 = arith.addf %193, %197 : vector<22x128xf32>
    %199 = vector.extract_strided_slice %161 {offsets = [13, 0], sizes = [22, 64], strides = [1, 1]} : vector<36x64xbf16> to vector<22x64xbf16>
    %c2_176 = arith.constant 2 : index
    %c1_177 = arith.constant 1 : index
    %c0_178 = arith.constant 0 : index
    %c0_179 = arith.constant 0 : index
    %200 = vector.load %arg7[%c2_176, %c1_177, %c0_178, %c0_179] : memref<3x3x64x128xbf16, #tpu.memory_space<vmem>>, vector<1x1x64x128xbf16>
    %201 = vector.shape_cast %200 : vector<1x1x64x128xbf16> to vector<64x128xbf16>
    %cst_180 = arith.constant dense<0.000000e+00> : vector<22x128xf32>
    %202 = tpu.matmul %199, %201, %cst_180 {dimension_numbers = #tpu.dot_dimension_numbers<[1], [0], [0], [1], [0, 0, 1, 1], [], []>} : vector<22x64xbf16>, vector<64x128xbf16>, vector<22x128xf32> -> vector<22x128xf32>
    %203 = arith.addf %198, %202 : vector<22x128xf32>
    %204 = vector.extract_strided_slice %161 {offsets = [14, 0], sizes = [22, 64], strides = [1, 1]} : vector<36x64xbf16> to vector<22x64xbf16>
    %c2_181 = arith.constant 2 : index
    %c2_182 = arith.constant 2 : index
    %c0_183 = arith.constant 0 : index
    %c0_184 = arith.constant 0 : index
    %205 = vector.load %arg7[%c2_181, %c2_182, %c0_183, %c0_184] : memref<3x3x64x128xbf16, #tpu.memory_space<vmem>>, vector<1x1x64x128xbf16>
    %206 = vector.shape_cast %205 : vector<1x1x64x128xbf16> to vector<64x128xbf16>
    %cst_185 = arith.constant dense<0.000000e+00> : vector<22x128xf32>
    %207 = tpu.matmul %204, %206, %cst_185 {dimension_numbers = #tpu.dot_dimension_numbers<[1], [0], [0], [1], [0, 0, 1, 1], [], []>} : vector<22x64xbf16>, vector<64x128xbf16>, vector<22x128xf32> -> vector<22x128xf32>
    %208 = arith.addf %203, %207 : vector<22x128xf32>
    %209 = vector.broadcast %162 : vector<1x128xf32> to vector<22x128xf32>
    %210 = arith.addf %208, %209 : vector<22x128xf32>
    %cst_186 = arith.constant 0.000000e+00 : f32
    %211 = vector.broadcast %cst_186 : f32 to vector<22x128xf32>
    %212 = arith.maximumf %210, %211 : vector<22x128xf32>
    %213 = vector.extract_strided_slice %212 {offsets = [0, 0], sizes = [21, 128], strides = [1, 1]} : vector<22x128xf32> to vector<21x128xf32>
    %214 = vector.extract_strided_slice %212 {offsets = [1, 0], sizes = [21, 128], strides = [1, 1]} : vector<22x128xf32> to vector<21x128xf32>
    %215 = arith.maximumf %213, %214 : vector<21x128xf32>
    %216 = vector.extract_strided_slice %215 {offsets = [0, 0], sizes = [15, 128], strides = [1, 1]} : vector<21x128xf32> to vector<15x128xf32>
    %217 = vector.extract_strided_slice %215 {offsets = [6, 0], sizes = [15, 128], strides = [1, 1]} : vector<21x128xf32> to vector<15x128xf32>
    %218 = arith.maximumf %216, %217 : vector<15x128xf32>
    %c0_187 = arith.constant 0 : index
    %c0_188 = arith.constant 0 : index
    %219 = vector.load %arg12[%c0_187, %c0_188] : memref<16x15xbf16, #tpu.memory_space<vmem>>, vector<16x15xbf16>
    %220 = arith.truncf %218 : vector<15x128xf32> to vector<15x128xbf16>
    %cst_189 = arith.constant dense<0.000000e+00> : vector<16x128xf32>
    %221 = tpu.matmul %219, %220, %cst_189 {dimension_numbers = #tpu.dot_dimension_numbers<[1], [0], [0], [1], [0, 0, 1, 1], [], []>} : vector<16x15xbf16>, vector<15x128xbf16>, vector<16x128xf32> -> vector<16x128xf32>
    %222 = vector.extract_strided_slice %221 {offsets = [0, 0], sizes = [16, 64], strides = [1, 1]} : vector<16x128xf32> to vector<16x64xf32>
    %223 = arith.truncf %222 : vector<16x64xf32> to vector<16x64xbf16>
    %c0_190 = arith.constant 0 : index
    %c0_191 = arith.constant 0 : index
    %224 = vector.load %arg11[%c0_190, %c0_191] : memref<1x128xf32, #tpu.memory_space<vmem>>, vector<1x128xf32>
    %cst_192 = arith.constant 0.000000e+00 : f32
    %225 = vector.broadcast %cst_192 : f32 to vector<6x128xf32>
    %226 = vector.extract_strided_slice %223 {offsets = [0, 0], sizes = [6, 64], strides = [1, 1]} : vector<16x64xbf16> to vector<6x64xbf16>
    %c0_193 = arith.constant 0 : index
    %c0_194 = arith.constant 0 : index
    %c0_195 = arith.constant 0 : index
    %c0_196 = arith.constant 0 : index
    %227 = vector.load %arg10[%c0_193, %c0_194, %c0_195, %c0_196] : memref<3x3x64x128xbf16, #tpu.memory_space<vmem>>, vector<1x1x64x128xbf16>
    %228 = vector.shape_cast %227 : vector<1x1x64x128xbf16> to vector<64x128xbf16>
    %cst_197 = arith.constant dense<0.000000e+00> : vector<6x128xf32>
    %229 = tpu.matmul %226, %228, %cst_197 {dimension_numbers = #tpu.dot_dimension_numbers<[1], [0], [0], [1], [0, 0, 1, 1], [], []>} : vector<6x64xbf16>, vector<64x128xbf16>, vector<6x128xf32> -> vector<6x128xf32>
    %230 = arith.addf %225, %229 : vector<6x128xf32>
    %231 = vector.extract_strided_slice %223 {offsets = [1, 0], sizes = [6, 64], strides = [1, 1]} : vector<16x64xbf16> to vector<6x64xbf16>
    %c0_198 = arith.constant 0 : index
    %c1_199 = arith.constant 1 : index
    %c0_200 = arith.constant 0 : index
    %c0_201 = arith.constant 0 : index
    %232 = vector.load %arg10[%c0_198, %c1_199, %c0_200, %c0_201] : memref<3x3x64x128xbf16, #tpu.memory_space<vmem>>, vector<1x1x64x128xbf16>
    %233 = vector.shape_cast %232 : vector<1x1x64x128xbf16> to vector<64x128xbf16>
    %cst_202 = arith.constant dense<0.000000e+00> : vector<6x128xf32>
    %234 = tpu.matmul %231, %233, %cst_202 {dimension_numbers = #tpu.dot_dimension_numbers<[1], [0], [0], [1], [0, 0, 1, 1], [], []>} : vector<6x64xbf16>, vector<64x128xbf16>, vector<6x128xf32> -> vector<6x128xf32>
    %235 = arith.addf %230, %234 : vector<6x128xf32>
    %236 = vector.extract_strided_slice %223 {offsets = [2, 0], sizes = [6, 64], strides = [1, 1]} : vector<16x64xbf16> to vector<6x64xbf16>
    %c0_203 = arith.constant 0 : index
    %c2_204 = arith.constant 2 : index
    %c0_205 = arith.constant 0 : index
    %c0_206 = arith.constant 0 : index
    %237 = vector.load %arg10[%c0_203, %c2_204, %c0_205, %c0_206] : memref<3x3x64x128xbf16, #tpu.memory_space<vmem>>, vector<1x1x64x128xbf16>
    %238 = vector.shape_cast %237 : vector<1x1x64x128xbf16> to vector<64x128xbf16>
    %cst_207 = arith.constant dense<0.000000e+00> : vector<6x128xf32>
    %239 = tpu.matmul %236, %238, %cst_207 {dimension_numbers = #tpu.dot_dimension_numbers<[1], [0], [0], [1], [0, 0, 1, 1], [], []>} : vector<6x64xbf16>, vector<64x128xbf16>, vector<6x128xf32> -> vector<6x128xf32>
    %240 = arith.addf %235, %239 : vector<6x128xf32>
    %241 = vector.extract_strided_slice %223 {offsets = [4, 0], sizes = [6, 64], strides = [1, 1]} : vector<16x64xbf16> to vector<6x64xbf16>
    %c1_208 = arith.constant 1 : index
    %c0_209 = arith.constant 0 : index
    %c0_210 = arith.constant 0 : index
    %c0_211 = arith.constant 0 : index
    %242 = vector.load %arg10[%c1_208, %c0_209, %c0_210, %c0_211] : memref<3x3x64x128xbf16, #tpu.memory_space<vmem>>, vector<1x1x64x128xbf16>
    %243 = vector.shape_cast %242 : vector<1x1x64x128xbf16> to vector<64x128xbf16>
    %cst_212 = arith.constant dense<0.000000e+00> : vector<6x128xf32>
    %244 = tpu.matmul %241, %243, %cst_212 {dimension_numbers = #tpu.dot_dimension_numbers<[1], [0], [0], [1], [0, 0, 1, 1], [], []>} : vector<6x64xbf16>, vector<64x128xbf16>, vector<6x128xf32> -> vector<6x128xf32>
    %245 = arith.addf %240, %244 : vector<6x128xf32>
    %246 = vector.extract_strided_slice %223 {offsets = [5, 0], sizes = [6, 64], strides = [1, 1]} : vector<16x64xbf16> to vector<6x64xbf16>
    %c1_213 = arith.constant 1 : index
    %c1_214 = arith.constant 1 : index
    %c0_215 = arith.constant 0 : index
    %c0_216 = arith.constant 0 : index
    %247 = vector.load %arg10[%c1_213, %c1_214, %c0_215, %c0_216] : memref<3x3x64x128xbf16, #tpu.memory_space<vmem>>, vector<1x1x64x128xbf16>
    %248 = vector.shape_cast %247 : vector<1x1x64x128xbf16> to vector<64x128xbf16>
    %cst_217 = arith.constant dense<0.000000e+00> : vector<6x128xf32>
    %249 = tpu.matmul %246, %248, %cst_217 {dimension_numbers = #tpu.dot_dimension_numbers<[1], [0], [0], [1], [0, 0, 1, 1], [], []>} : vector<6x64xbf16>, vector<64x128xbf16>, vector<6x128xf32> -> vector<6x128xf32>
    %250 = arith.addf %245, %249 : vector<6x128xf32>
    %251 = vector.extract_strided_slice %223 {offsets = [6, 0], sizes = [6, 64], strides = [1, 1]} : vector<16x64xbf16> to vector<6x64xbf16>
    %c1_218 = arith.constant 1 : index
    %c2_219 = arith.constant 2 : index
    %c0_220 = arith.constant 0 : index
    %c0_221 = arith.constant 0 : index
    %252 = vector.load %arg10[%c1_218, %c2_219, %c0_220, %c0_221] : memref<3x3x64x128xbf16, #tpu.memory_space<vmem>>, vector<1x1x64x128xbf16>
    %253 = vector.shape_cast %252 : vector<1x1x64x128xbf16> to vector<64x128xbf16>
    %cst_222 = arith.constant dense<0.000000e+00> : vector<6x128xf32>
    %254 = tpu.matmul %251, %253, %cst_222 {dimension_numbers = #tpu.dot_dimension_numbers<[1], [0], [0], [1], [0, 0, 1, 1], [], []>} : vector<6x64xbf16>, vector<64x128xbf16>, vector<6x128xf32> -> vector<6x128xf32>
    %255 = arith.addf %250, %254 : vector<6x128xf32>
    %256 = vector.extract_strided_slice %223 {offsets = [8, 0], sizes = [6, 64], strides = [1, 1]} : vector<16x64xbf16> to vector<6x64xbf16>
    %c2_223 = arith.constant 2 : index
    %c0_224 = arith.constant 0 : index
    %c0_225 = arith.constant 0 : index
    %c0_226 = arith.constant 0 : index
    %257 = vector.load %arg10[%c2_223, %c0_224, %c0_225, %c0_226] : memref<3x3x64x128xbf16, #tpu.memory_space<vmem>>, vector<1x1x64x128xbf16>
    %258 = vector.shape_cast %257 : vector<1x1x64x128xbf16> to vector<64x128xbf16>
    %cst_227 = arith.constant dense<0.000000e+00> : vector<6x128xf32>
    %259 = tpu.matmul %256, %258, %cst_227 {dimension_numbers = #tpu.dot_dimension_numbers<[1], [0], [0], [1], [0, 0, 1, 1], [], []>} : vector<6x64xbf16>, vector<64x128xbf16>, vector<6x128xf32> -> vector<6x128xf32>
    %260 = arith.addf %255, %259 : vector<6x128xf32>
    %261 = vector.extract_strided_slice %223 {offsets = [9, 0], sizes = [6, 64], strides = [1, 1]} : vector<16x64xbf16> to vector<6x64xbf16>
    %c2_228 = arith.constant 2 : index
    %c1_229 = arith.constant 1 : index
    %c0_230 = arith.constant 0 : index
    %c0_231 = arith.constant 0 : index
    %262 = vector.load %arg10[%c2_228, %c1_229, %c0_230, %c0_231] : memref<3x3x64x128xbf16, #tpu.memory_space<vmem>>, vector<1x1x64x128xbf16>
    %263 = vector.shape_cast %262 : vector<1x1x64x128xbf16> to vector<64x128xbf16>
    %cst_232 = arith.constant dense<0.000000e+00> : vector<6x128xf32>
    %264 = tpu.matmul %261, %263, %cst_232 {dimension_numbers = #tpu.dot_dimension_numbers<[1], [0], [0], [1], [0, 0, 1, 1], [], []>} : vector<6x64xbf16>, vector<64x128xbf16>, vector<6x128xf32> -> vector<6x128xf32>
    %265 = arith.addf %260, %264 : vector<6x128xf32>
    %266 = vector.extract_strided_slice %223 {offsets = [10, 0], sizes = [6, 64], strides = [1, 1]} : vector<16x64xbf16> to vector<6x64xbf16>
    %c2_233 = arith.constant 2 : index
    %c2_234 = arith.constant 2 : index
    %c0_235 = arith.constant 0 : index
    %c0_236 = arith.constant 0 : index
    %267 = vector.load %arg10[%c2_233, %c2_234, %c0_235, %c0_236] : memref<3x3x64x128xbf16, #tpu.memory_space<vmem>>, vector<1x1x64x128xbf16>
    %268 = vector.shape_cast %267 : vector<1x1x64x128xbf16> to vector<64x128xbf16>
    %cst_237 = arith.constant dense<0.000000e+00> : vector<6x128xf32>
    %269 = tpu.matmul %266, %268, %cst_237 {dimension_numbers = #tpu.dot_dimension_numbers<[1], [0], [0], [1], [0, 0, 1, 1], [], []>} : vector<6x64xbf16>, vector<64x128xbf16>, vector<6x128xf32> -> vector<6x128xf32>
    %270 = arith.addf %265, %269 : vector<6x128xf32>
    %271 = vector.broadcast %224 : vector<1x128xf32> to vector<6x128xf32>
    %272 = arith.addf %270, %271 : vector<6x128xf32>
    %cst_238 = arith.constant 0.000000e+00 : f32
    %273 = vector.broadcast %cst_238 : f32 to vector<6x128xf32>
    %274 = arith.maximumf %272, %273 : vector<6x128xf32>
    %275 = vector.extract_strided_slice %274 {offsets = [0, 0], sizes = [5, 128], strides = [1, 1]} : vector<6x128xf32> to vector<5x128xf32>
    %276 = vector.extract_strided_slice %274 {offsets = [1, 0], sizes = [5, 128], strides = [1, 1]} : vector<6x128xf32> to vector<5x128xf32>
    %277 = arith.maximumf %275, %276 : vector<5x128xf32>
    %278 = vector.extract_strided_slice %277 {offsets = [0, 0], sizes = [1, 128], strides = [1, 1]} : vector<5x128xf32> to vector<1x128xf32>
    %279 = vector.extract_strided_slice %277 {offsets = [4, 0], sizes = [1, 128], strides = [1, 1]} : vector<5x128xf32> to vector<1x128xf32>
    %280 = arith.maximumf %278, %279 : vector<1x128xf32>
    %281 = vector.extract_strided_slice %280 {offsets = [0, 0], sizes = [1, 64], strides = [1, 1]} : vector<1x128xf32> to vector<1x64xf32>
    %282 = arith.truncf %281 : vector<1x64xf32> to vector<1x64xbf16>
    %c0_239 = arith.constant 0 : index
    %c0_240 = arith.constant 0 : index
    %283 = vector.load %arg13[%c0_239, %c0_240] : memref<64x512xbf16, #tpu.memory_space<vmem>>, vector<64x512xbf16>
    %cst_241 = arith.constant dense<0.000000e+00> : vector<1x512xf32>
    %284 = tpu.matmul %282, %283, %cst_241 {dimension_numbers = #tpu.dot_dimension_numbers<[1], [0], [0], [1], [0, 0, 1, 1], [], []>} : vector<1x64xbf16>, vector<64x512xbf16>, vector<1x512xf32> -> vector<1x512xf32>
    %c0_242 = arith.constant 0 : index
    %c0_243 = arith.constant 0 : index
    %285 = vector.load %arg14[%c0_242, %c0_243] : memref<1x512xf32, #tpu.memory_space<vmem>>, vector<1x512xf32>
    %286 = arith.addf %284, %285 : vector<1x512xf32>
    %cst_244 = arith.constant 0.000000e+00 : f32
    %287 = vector.broadcast %cst_244 : f32 to vector<1x512xf32>
    %288 = arith.maximumf %286, %287 : vector<1x512xf32>
    %289 = arith.truncf %288 : vector<1x512xf32> to vector<1x512xbf16>
    %c0_245 = arith.constant 0 : index
    %c0_246 = arith.constant 0 : index
    %290 = vector.load %arg15[%c0_245, %c0_246] : memref<512x128xbf16, #tpu.memory_space<vmem>>, vector<512x128xbf16>
    %cst_247 = arith.constant dense<0.000000e+00> : vector<1x128xf32>
    %291 = tpu.matmul %289, %290, %cst_247 {dimension_numbers = #tpu.dot_dimension_numbers<[1], [0], [0], [1], [0, 0, 1, 1], [], []>} : vector<1x512xbf16>, vector<512x128xbf16>, vector<1x128xf32> -> vector<1x128xf32>
    %c0_248 = arith.constant 0 : index
    %c0_249 = arith.constant 0 : index
    %292 = vector.load %arg16[%c0_248, %c0_249] : memref<1x128xf32, #tpu.memory_space<vmem>>, vector<1x128xf32>
    %293 = arith.addf %291, %292 : vector<1x128xf32>
    %294 = vector.shape_cast %293 : vector<1x128xf32> to vector<1x128xf32>
    %295 = vector.broadcast %294 : vector<1x128xf32> to vector<8x128xf32>
    %c0_250 = arith.constant 0 : index
    %c0_251 = arith.constant 0 : index
    %c0_252 = arith.constant 0 : index
    %296 = vector.load %arg17[%c0_250, %c0_251, %c0_252] : memref<1x8x128xf32, #tpu.memory_space<vmem>>, vector<1x8x128xf32>
    %297 = vector.shape_cast %296 : vector<1x8x128xf32> to vector<8x128xf32>
    %298 = vector.shape_cast %295 : vector<8x128xf32> to vector<1x8x128xf32>
    tpu.vector_store %arg17[%c0_250, %c0_251, %c0_252], %298 {strides = array<i32>} : memref<1x8x128xf32, #tpu.memory_space<vmem>>, vector<1x8x128xf32>,
    return
  }
  func.func @transform_0(%arg0: i32) -> (i32, i32, i32) {
    %c0_i32 = arith.constant 0 : i32
    %c0_i32_0 = arith.constant 0 : i32
    %c0_i32_1 = arith.constant 0 : i32
    return %arg0, %c0_i32, %c0_i32_0 : i32, i32, i32
  }
  func.func @transform_1(%arg0: i32) -> (i32, i32) {
    %c0_i32 = arith.constant 0 : i32
    %c0_i32_0 = arith.constant 0 : i32
    %c0_i32_1 = arith.constant 0 : i32
    return %c0_i32, %c0_i32_0 : i32, i32
  }
  func.func @transform_2(%arg0: i32) -> (i32, i32) {
    %c0_i32 = arith.constant 0 : i32
    %c0_i32_0 = arith.constant 0 : i32
    %c0_i32_1 = arith.constant 0 : i32
    return %c0_i32, %c0_i32_0 : i32, i32
  }
  func.func @transform_3(%arg0: i32) -> (i32, i32) {
    %c0_i32 = arith.constant 0 : i32
    %c0_i32_0 = arith.constant 0 : i32
    %c0_i32_1 = arith.constant 0 : i32
    return %c0_i32, %c0_i32_0 : i32, i32
  }
  func.func @transform_4(%arg0: i32) -> (i32, i32, i32, i32) {
    %c0_i32 = arith.constant 0 : i32
    %c0_i32_0 = arith.constant 0 : i32
    %c0_i32_1 = arith.constant 0 : i32
    %c0_i32_2 = arith.constant 0 : i32
    %c0_i32_3 = arith.constant 0 : i32
    return %c0_i32, %c0_i32_0, %c0_i32_1, %c0_i32_2 : i32, i32, i32, i32
  }
  func.func @transform_5(%arg0: i32) -> (i32, i32) {
    %c0_i32 = arith.constant 0 : i32
    %c0_i32_0 = arith.constant 0 : i32
    %c0_i32_1 = arith.constant 0 : i32
    return %c0_i32, %c0_i32_0 : i32, i32
  }
  func.func @transform_6(%arg0: i32) -> (i32, i32, i32, i32) {
    %c0_i32 = arith.constant 0 : i32
    %c0_i32_0 = arith.constant 0 : i32
    %c0_i32_1 = arith.constant 0 : i32
    %c0_i32_2 = arith.constant 0 : i32
    %c0_i32_3 = arith.constant 0 : i32
    return %c0_i32, %c0_i32_0, %c0_i32_1, %c0_i32_2 : i32, i32, i32, i32
  }
  func.func @transform_7(%arg0: i32) -> (i32, i32) {
    %c0_i32 = arith.constant 0 : i32
    %c0_i32_0 = arith.constant 0 : i32
    %c0_i32_1 = arith.constant 0 : i32
    return %c0_i32, %c0_i32_0 : i32, i32
  }
  func.func @transform_8(%arg0: i32) -> (i32, i32) {
    %c0_i32 = arith.constant 0 : i32
    %c0_i32_0 = arith.constant 0 : i32
    %c0_i32_1 = arith.constant 0 : i32
    return %c0_i32, %c0_i32_0 : i32, i32
  }
  func.func @transform_9(%arg0: i32) -> (i32, i32, i32, i32) {
    %c0_i32 = arith.constant 0 : i32
    %c0_i32_0 = arith.constant 0 : i32
    %c0_i32_1 = arith.constant 0 : i32
    %c0_i32_2 = arith.constant 0 : i32
    %c0_i32_3 = arith.constant 0 : i32
    return %c0_i32, %c0_i32_0, %c0_i32_1, %c0_i32_2 : i32, i32, i32, i32
  }
  func.func @transform_10(%arg0: i32) -> (i32, i32) {
    %c0_i32 = arith.constant 0 : i32
    %c0_i32_0 = arith.constant 0 : i32
    %c0_i32_1 = arith.constant 0 : i32
    return %c0_i32, %c0_i32_0 : i32, i32
  }
  func.func @transform_11(%arg0: i32) -> (i32, i32) {
    %c0_i32 = arith.constant 0 : i32
    %c0_i32_0 = arith.constant 0 : i32
    %c0_i32_1 = arith.constant 0 : i32
    return %c0_i32, %c0_i32_0 : i32, i32
  }
  func.func @transform_12(%arg0: i32) -> (i32, i32) {
    %c0_i32 = arith.constant 0 : i32
    %c0_i32_0 = arith.constant 0 : i32
    %c0_i32_1 = arith.constant 0 : i32
    return %c0_i32, %c0_i32_0 : i32, i32
  }
  func.func @transform_13(%arg0: i32) -> (i32, i32) {
    %c0_i32 = arith.constant 0 : i32
    %c0_i32_0 = arith.constant 0 : i32
    %c0_i32_1 = arith.constant 0 : i32
    return %c0_i32, %c0_i32_0 : i32, i32
  }
  func.func @transform_14(%arg0: i32) -> (i32, i32) {
    %c0_i32 = arith.constant 0 : i32
    %c0_i32_0 = arith.constant 0 : i32
    %c0_i32_1 = arith.constant 0 : i32
    return %c0_i32, %c0_i32_0 : i32, i32
  }
  func.func @transform_15(%arg0: i32) -> (i32, i32) {
    %c0_i32 = arith.constant 0 : i32
    %c0_i32_0 = arith.constant 0 : i32
    %c0_i32_1 = arith.constant 0 : i32
    return %c0_i32, %c0_i32_0 : i32, i32
  }
  func.func @transform_16(%arg0: i32) -> (i32, i32, i32) {
    %c0_i32 = arith.constant 0 : i32
    %c0_i32_0 = arith.constant 0 : i32
    %c0_i32_1 = arith.constant 0 : i32
    return %arg0, %c0_i32, %c0_i32_0 : i32, i32, i32
  }
}

</mosaic_0001>

<llo_original>
// kernel: large_forward.1
$region0: #{large_forward.1}
  #allocation0 [shape = 'u32[]', space=smem, size = 0x4, offset = 0x4, fixed_abs, tag = 'smem constant byte address 0x4 - core index']
  #allocation1 [shape = 'u32[72,128]{1,0:T(1,128)}', space=vmem, size = 0x9000, scoped, tag = 'internal scratch']
  %s0 = inlined_call_operand.vmem [shape: bf16[2,576,32], index: 0, kind: input, shape index: {}]
  %s1 = inlined_call_operand.vmem [shape: bf16[32,128], index: 1, kind: input, shape index: {}]
  %s2 = inlined_call_operand.vmem [shape: f32[1,128], index: 2, kind: input, shape index: {}]
  %s3 = inlined_call_operand.vmem [shape: bf16[144,551], index: 3, kind: input, shape index: {}]
  %s4 = inlined_call_operand.vmem [shape: bf16[5,5,32,128], index: 4, kind: input, shape index: {}]
  %s5 = inlined_call_operand.vmem [shape: f32[1,128], index: 5, kind: input, shape index: {}]
  %s6 = inlined_call_operand.vmem [shape: bf16[3,3,64,128], index: 6, kind: input, shape index: {}]
  %s7 = inlined_call_operand.vmem [shape: f32[1,128], index: 7, kind: input, shape index: {}]
  %s8 = inlined_call_operand.vmem [shape: bf16[36,79], index: 8, kind: input, shape index: {}]
  %s9 = inlined_call_operand.vmem [shape: bf16[3,3,64,128], index: 9, kind: input, shape index: {}]
  %s10 = inlined_call_operand.vmem [shape: f32[1,128], index: 10, kind: input, shape index: {}]
  %s11 = inlined_call_operand.vmem [shape: bf16[16,15], index: 11, kind: input, shape index: {}]
  %s12 = inlined_call_operand.vmem [shape: bf16[64,512], index: 12, kind: input, shape index: {}]
  %s13 = inlined_call_operand.vmem [shape: f32[1,512], index: 13, kind: input, shape index: {}]
  %s14 = inlined_call_operand.vmem [shape: bf16[512,128], index: 14, kind: input, shape index: {}]
  %s15 = inlined_call_operand.vmem [shape: f32[1,128], index: 15, kind: input, shape index: {}]
  %s16 = inlined_call_operand.vmem [shape: f32[2,8,128], index: 16, kind: output, shape index: {}]
  %s17 = sld [smem:[#allocation0]]
  $region97: #{large_forward.1} parent=0
    _
  %s19 = ssub.s32 1, %s17
  %s20 = scalar_select 0, %s19, %s17
  loop: start=0, step=1, limit=4
  $region2: #{large_forward.1} parent=0 // loop_pre_header
    _
  $region3: #{large_forward.1} parent=0 // loop_header
    %s22 = sphi 0, %s26
    %p23 = scmp.ge.s32.totalorder %s22, 4
    %s32 = sphi 0, %s34
    %s35 = sphi 0, %s32
    %s36 = sphi 0, %s35
    %s52 = sphi 0, %s36
    %s56 = sphi 0, %s56
    %s58 = sphi 0, %s56
    %s59 = sphi 0, %s58
    %s73 = sphi 0, %s59
    %s77 = sphi 0, %s77
    %s79 = sphi 0, %s77
    %s80 = sphi 0, %s79
    %s94 = sphi 0, %s80
    %s98 = sphi 0, %s98
    %s100 = sphi 0, %s98
    %s101 = sphi 0, %s100
    %s115 = sphi 0, %s101
    %s119 = sphi 0, %s119
    %s121 = sphi 0, %s119
    %s122 = sphi 0, %s121
    %s136 = sphi 0, %s122
    %s140 = sphi 0, %s140
    %s142 = sphi 0, %s140
    %s143 = sphi 0, %s142
    %s157 = sphi 0, %s143
    %s161 = sphi 0, %s161
    %s163 = sphi 0, %s161
    %s164 = sphi 0, %s163
    %s178 = sphi 0, %s164
    %s182 = sphi 0, %s182
    %s184 = sphi 0, %s182
    %s185 = sphi 0, %s184
    %s199 = sphi 0, %s185
    %s203 = sphi 0, %s203
    %s205 = sphi 0, %s203
    %s206 = sphi 0, %s205
    %s220 = sphi 0, %s206
    %s224 = sphi 0, %s224
    %s226 = sphi 0, %s224
    %s227 = sphi 0, %s226
    %s241 = sphi 0, %s227
    %s245 = sphi 0, %s245
    %s247 = sphi 0, %s245
    %s248 = sphi 0, %s247
    %s262 = sphi 0, %s248
    %s266 = sphi 0, %s266
    %s268 = sphi 0, %s266
    %s269 = sphi 0, %s268
    %s283 = sphi 0, %s269
    %s287 = sphi 0, %s287
    %s289 = sphi 0, %s287
    %s290 = sphi 0, %s289
    %s304 = sphi 0, %s290
    %s308 = sphi 0, %s308
    %s310 = sphi 0, %s308
    %s311 = sphi 0, %s310
    %s325 = sphi 0, %s311
    %s329 = sphi 0, %s329
    %s331 = sphi 0, %s329
    %s332 = sphi 0, %s331
    %s346 = sphi 0, %s332
    %s350 = sphi 0, %s350
    %s352 = sphi 0, %s350
    %s353 = sphi 0, %s352
    %s367 = sphi 0, %s353
    %s373 = sphi 0, %s375
    %s376 = sphi 0, %s373
    %s377 = sphi 0, %s376
    %s393 = sphi 0, %s377
  $region4: #{large_forward.1} parent=0 // loop_header_branch
    %25 = sbr.rel (%p23) target = $region8
  $region5: #{large_forward.1} parent=0 // loop_body
    %s27 = ssub.s32 %s22, 1
    %s28 = ssub.s32 %s22, 2
    %s29 = sadd.s32 %s22, 1
    %s30 = ssub.s32 %s22, %s29
    %p31 = scmp.eq.s32.totalorder %s30, 0
    %s33 = sadd.s32 %s32, 1
    %s34 = scalar_select %p31, %s32, %s33
    %p37 = pneg %p31
    %p38 = scmp.eq.s32.totalorder %s22, 1
    %p39 = por %p37, %p38
    %p40 = scmp.ne.s32.totalorder %s32, %s35
    %p41 = scmp.eq.s32.totalorder %s22, 0
    %p42 = por %p40, %p41
    %p43 = scmp.ne.s32.totalorder %s32, %s35
    %p44 = scmp.eq.s32.totalorder %s27, 1
    %p45 = por %p43, %p44
    %p46 = scmp.ne.s32.totalorder %s35, %s36
    %p47 = scmp.eq.s32.totalorder %s27, 0
    %p48 = por %p46, %p47
    %p49 = scmp.ne.s32.totalorder %s35, %s36
    %p50 = scmp.eq.s32.totalorder %s28, 1
    %p51 = por %p49, %p50
    %p53 = scmp.ne.s32.totalorder %s36, %s52
    %p54 = scmp.eq.s32.totalorder %s28, 0
    %p55 = por %p53, %p54
    %s57 = sadd.s32 %s56, 1
    %p60 = scmp.eq.s32.totalorder %s22, 1
    %p61 = scmp.ne.s32.totalorder %s56, %s58
    %p62 = scmp.eq.s32.totalorder %s22, 0
    %p63 = por %p61, %p62
    %p64 = scmp.ne.s32.totalorder %s56, %s58
    %p65 = scmp.eq.s32.totalorder %s27, 1
    %p66 = por %p64, %p65
    %p67 = scmp.ne.s32.totalorder %s58, %s59
    %p68 = scmp.eq.s32.totalorder %s27, 0
    %p69 = por %p67, %p68
    %p70 = scmp.ne.s32.totalorder %s58, %s59
    %p71 = scmp.eq.s32.totalorder %s28, 1
    %p72 = por %p70, %p71
    %p74 = scmp.ne.s32.totalorder %s59, %s73
    %p75 = scmp.eq.s32.totalorder %s28, 0
    %p76 = por %p74, %p75
    %s78 = sadd.s32 %s77, 1
    %p81 = scmp.eq.s32.totalorder %s22, 1
    %p82 = scmp.ne.s32.totalorder %s77, %s79
    %p83 = scmp.eq.s32.totalorder %s22, 0
    %p84 = por %p82, %p83
    %p85 = scmp.ne.s32.totalorder %s77, %s79
    %p86 = scmp.eq.s32.totalorder %s27, 1
    %p87 = por %p85, %p86
    %p88 = scmp.ne.s32.totalorder %s79, %s80
    %p89 = scmp.eq.s32.totalorder %s27, 0
    %p90 = por %p88, %p89
    %p91 = scmp.ne.s32.totalorder %s79, %s80
    %p92 = scmp.eq.s32.totalorder %s28, 1
    %p93 = por %p91, %p92
    %p95 = scmp.ne.s32.totalorder %s80, %s94
    %p96 = scmp.eq.s32.totalorder %s28, 0
    %p97 = por %p95, %p96
    %s99 = sadd.s32 %s98, 1
    %p102 = scmp.eq.s32.totalorder %s22, 1
    %p103 = scmp.ne.s32.totalorder %s98, %s100
    %p104 = scmp.eq.s32.totalorder %s22, 0
    %p105 = por %p103, %p104
    %p106 = scmp.ne.s32.totalorder %s98, %s100
    %p107 = scmp.eq.s32.totalorder %s27, 1
    %p108 = por %p106, %p107
    %p109 = scmp.ne.s32.totalorder %s100, %s101
    %p110 = scmp.eq.s32.totalorder %s27, 0
    %p111 = por %p109, %p110
    %p112 = scmp.ne.s32.totalorder %s100, %s101
    %p113 = scmp.eq.s32.totalorder %s28, 1
    %p114 = por %p112, %p113
    %p116 = scmp.ne.s32.totalorder %s101, %s115
    %p117 = scmp.eq.s32.totalorder %s28, 0
    %p118 = por %p116, %p117
    %s120 = sadd.s32 %s119, 1
    %p123 = scmp.eq.s32.totalorder %s22, 1
    %p124 = scmp.ne.s32.totalorder %s119, %s121
    %p125 = scmp.eq.s32.totalorder %s22, 0
    %p126 = por %p124, %p125
    %p127 = scmp.ne.s32.totalorder %s119, %s121
    %p128 = scmp.eq.s32.totalorder %s27, 1
    %p129 = por %p127, %p128
    %p130 = scmp.ne.s32.totalorder %s121, %s122
    %p131 = scmp.eq.s32.totalorder %s27, 0
    %p132 = por %p130, %p131
    %p133 = scmp.ne.s32.totalorder %s121, %s122
    %p134 = scmp.eq.s32.totalorder %s28, 1
    %p135 = por %p133, %p134
    %p137 = scmp.ne.s32.totalorder %s122, %s136
    %p138 = scmp.eq.s32.totalorder %s28, 0
    %p139 = por %p137, %p138
    %s141 = sadd.s32 %s140, 1
    %p144 = scmp.eq.s32.totalorder %s22, 1
    %p145 = scmp.ne.s32.totalorder %s140, %s142
    %p146 = scmp.eq.s32.totalorder %s22, 0
    %p147 = por %p145, %p146
    %p148 = scmp.ne.s32.totalorder %s140, %s142
    %p149 = scmp.eq.s32.totalorder %s27, 1
    %p150 = por %p148, %p149
    %p151 = scmp.ne.s32.totalorder %s142, %s143
    %p152 = scmp.eq.s32.totalorder %s27, 0
    %p153 = por %p151, %p152
    %p154 = scmp.ne.s32.totalorder %s142, %s143
    %p155 = scmp.eq.s32.totalorder %s28, 1
    %p156 = por %p154, %p155
    %p158 = scmp.ne.s32.totalorder %s143, %s157
    %p159 = scmp.eq.s32.totalorder %s28, 0
    %p160 = por %p158, %p159
    %s162 = sadd.s32 %s161, 1
    %p165 = scmp.eq.s32.totalorder %s22, 1
    %p166 = scmp.ne.s32.totalorder %s161, %s163
    %p167 = scmp.eq.s32.totalorder %s22, 0
    %p168 = por %p166, %p167
    %p169 = scmp.ne.s32.totalorder %s161, %s163
    %p170 = scmp.eq.s32.totalorder %s27, 1
    %p171 = por %p169, %p170
    %p172 = scmp.ne.s32.totalorder %s163, %s164
    %p173 = scmp.eq.s32.totalorder %s27, 0
    %p174 = por %p172, %p173
    %p175 = scmp.ne.s32.totalorder %s163, %s164
    %p176 = scmp.eq.s32.totalorder %s28, 1
    %p177 = por %p175, %p176
    %p179 = scmp.ne.s32.totalorder %s164, %s178
    %p180 = scmp.eq.s32.totalorder %s28, 0
    %p181 = por %p179, %p180
    %s183 = sadd.s32 %s182, 1
    %p186 = scmp.eq.s32.totalorder %s22, 1
    %p187 = scmp.ne.s32.totalorder %s182, %s184
    %p188 = scmp.eq.s32.totalorder %s22, 0
    %p189 = por %p187, %p188
    %p190 = scmp.ne.s32.totalorder %s182, %s184
    %p191 = scmp.eq.s32.totalorder %s27, 1
    %p192 = por %p190, %p191
    %p193 = scmp.ne.s32.totalorder %s184, %s185
    %p194 = scmp.eq.s32.totalorder %s27, 0
    %p195 = por %p193, %p194
    %p196 = scmp.ne.s32.totalorder %s184, %s185
    %p197 = scmp.eq.s32.totalorder %s28, 1
    %p198 = por %p196, %p197
    %p200 = scmp.ne.s32.totalorder %s185, %s199
    %p201 = scmp.eq.s32.totalorder %s28, 0
    %p202 = por %p200, %p201
    %s204 = sadd.s32 %s203, 1
    %p207 = scmp.eq.s32.totalorder %s22, 1
    %p208 = scmp.ne.s32.totalorder %s203, %s205
    %p209 = scmp.eq.s32.totalorder %s22, 0
    %p210 = por %p208, %p209
    %p211 = scmp.ne.s32.totalorder %s203, %s205
    %p212 = scmp.eq.s32.totalorder %s27, 1
    %p213 = por %p211, %p212
    %p214 = scmp.ne.s32.totalorder %s205, %s206
    %p215 = scmp.eq.s32.totalorder %s27, 0
    %p216 = por %p214, %p215
    %p217 = scmp.ne.s32.totalorder %s205, %s206
    %p218 = scmp.eq.s32.totalorder %s28, 1
    %p219 = por %p217, %p218
    %p221 = scmp.ne.s32.totalorder %s206, %s220
    %p222 = scmp.eq.s32.totalorder %s28, 0
    %p223 = por %p221, %p222
    %s225 = sadd.s32 %s224, 1
    %p228 = scmp.eq.s32.totalorder %s22, 1
    %p229 = scmp.ne.s32.totalorder %s224, %s226
    %p230 = scmp.eq.s32.totalorder %s22, 0
    %p231 = por %p229, %p230
    %p232 = scmp.ne.s32.totalorder %s224, %s226
    %p233 = scmp.eq.s32.totalorder %s27, 1
    %p234 = por %p232, %p233
    %p235 = scmp.ne.s32.totalorder %s226, %s227
    %p236 = scmp.eq.s32.totalorder %s27, 0
    %p237 = por %p235, %p236
    %p238 = scmp.ne.s32.totalorder %s226, %s227
    %p239 = scmp.eq.s32.totalorder %s28, 1
    %p240 = por %p238, %p239
    %p242 = scmp.ne.s32.totalorder %s227, %s241
    %p243 = scmp.eq.s32.totalorder %s28, 0
    %p244 = por %p242, %p243
    %s246 = sadd.s32 %s245, 1
    %p249 = scmp.eq.s32.totalorder %s22, 1
    %p250 = scmp.ne.s32.totalorder %s245, %s247
    %p251 = scmp.eq.s32.totalorder %s22, 0
    %p252 = por %p250, %p251
    %p253 = scmp.ne.s32.totalorder %s245, %s247
    %p254 = scmp.eq.s32.totalorder %s27, 1
    %p255 = por %p253, %p254
    %p256 = scmp.ne.s32.totalorder %s247, %s248
    %p257 = scmp.eq.s32.totalorder %s27, 0
    %p258 = por %p256, %p257
    %p259 = scmp.ne.s32.totalorder %s247, %s248
    %p260 = scmp.eq.s32.totalorder %s28, 1
    %p261 = por %p259, %p260
    %p263 = scmp.ne.s32.totalorder %s248, %s262
    %p264 = scmp.eq.s32.totalorder %s28, 0
    %p265 = por %p263, %p264
    %s267 = sadd.s32 %s266, 1
    %p270 = scmp.eq.s32.totalorder %s22, 1
    %p271 = scmp.ne.s32.totalorder %s266, %s268
    %p272 = scmp.eq.s32.totalorder %s22, 0
    %p273 = por %p271, %p272
    %p274 = scmp.ne.s32.totalorder %s266, %s268
    %p275 = scmp.eq.s32.totalorder %s27, 1
    %p276 = por %p274, %p275
    %p277 = scmp.ne.s32.totalorder %s268, %s269
    %p278 = scmp.eq.s32.totalorder %s27, 0
    %p279 = por %p277, %p278
    %p280 = scmp.ne.s32.totalorder %s268, %s269
    %p281 = scmp.eq.s32.totalorder %s28, 1
    %p282 = por %p280, %p281
    %p284 = scmp.ne.s32.totalorder %s269, %s283
    %p285 = scmp.eq.s32.totalorder %s28, 0
    %p286 = por %p284, %p285
    %s288 = sadd.s32 %s287, 1
    %p291 = scmp.eq.s32.totalorder %s22, 1
    %p292 = scmp.ne.s32.totalorder %s287, %s289
    %p293 = scmp.eq.s32.totalorder %s22, 0
    %p294 = por %p292, %p293
    %p295 = scmp.ne.s32.totalorder %s287, %s289
    %p296 = scmp.eq.s32.totalorder %s27, 1
    %p297 = por %p295, %p296
    %p298 = scmp.ne.s32.totalorder %s289, %s290
    %p299 = scmp.eq.s32.totalorder %s27, 0
    %p300 = por %p298, %p299
    %p301 = scmp.ne.s32.totalorder %s289, %s290
    %p302 = scmp.eq.s32.totalorder %s28, 1
    %p303 = por %p301, %p302
    %p305 = scmp.ne.s32.totalorder %s290, %s304
    %p306 = scmp.eq.s32.totalorder %s28, 0
    %p307 = por %p305, %p306
    %s309 = sadd.s32 %s308, 1
    %p312 = scmp.eq.s32.totalorder %s22, 1
    %p313 = scmp.ne.s32.totalorder %s308, %s310
    %p314 = scmp.eq.s32.totalorder %s22, 0
    %p315 = por %p313, %p314
    %p316 = scmp.ne.s32.totalorder %s308, %s310
    %p317 = scmp.eq.s32.totalorder %s27, 1
    %p318 = por %p316, %p317
    %p319 = scmp.ne.s32.totalorder %s310, %s311
    %p320 = scmp.eq.s32.totalorder %s27, 0
    %p321 = por %p319, %p320
    %p322 = scmp.ne.s32.totalorder %s310, %s311
    %p323 = scmp.eq.s32.totalorder %s28, 1
    %p324 = por %p322, %p323
    %p326 = scmp.ne.s32.totalorder %s311, %s325
    %p327 = scmp.eq.s32.totalorder %s28, 0
    %p328 = por %p326, %p327
    %s330 = sadd.s32 %s329, 1
    %p333 = scmp.eq.s32.totalorder %s22, 1
    %p334 = scmp.ne.s32.totalorder %s329, %s331
    %p335 = scmp.eq.s32.totalorder %s22, 0
    %p336 = por %p334, %p335
    %p337 = scmp.ne.s32.totalorder %s329, %s331
    %p338 = scmp.eq.s32.totalorder %s27, 1
    %p339 = por %p337, %p338
    %p340 = scmp.ne.s32.totalorder %s331, %s332
    %p341 = scmp.eq.s32.totalorder %s27, 0
    %p342 = por %p340, %p341
    %p343 = scmp.ne.s32.totalorder %s331, %s332
    %p344 = scmp.eq.s32.totalorder %s28, 1
    %p345 = por %p343, %p344
    %p347 = scmp.ne.s32.totalorder %s332, %s346
    %p348 = scmp.eq.s32.totalorder %s28, 0
    %p349 = por %p347, %p348
    %s351 = sadd.s32 %s350, 1
    %p354 = scmp.eq.s32.totalorder %s22, 1
    %p355 = scmp.ne.s32.totalorder %s350, %s352
    %p356 = scmp.eq.s32.totalorder %s22, 0
    %p357 = por %p355, %p356
    %p358 = scmp.ne.s32.totalorder %s350, %s352
    %p359 = scmp.eq.s32.totalorder %s27, 1
    %p360 = por %p358, %p359
    %p361 = scmp.ne.s32.totalorder %s352, %s353
    %p362 = scmp.eq.s32.totalorder %s27, 0
    %p363 = por %p361, %p362
    %p364 = scmp.ne.s32.totalorder %s352, %s353
    %p365 = scmp.eq.s32.totalorder %s28, 1
    %p366 = por %p364, %p365
    %p368 = scmp.ne.s32.totalorder %s353, %s367
    %p369 = scmp.eq.s32.totalorder %s28, 0
    %p370 = por %p368, %p369
    %s371 = ssub.s32 %s22, %s29
    %p372 = scmp.eq.s32.totalorder %s371, 0
    %s374 = sadd.s32 %s373, 1
    %s375 = scalar_select %p372, %s373, %s374
    %p378 = pneg %p372
    %p379 = scmp.eq.s32.totalorder %s22, 1
    %p380 = por %p378, %p379
    %p381 = scmp.ne.s32.totalorder %s373, %s376
    %p382 = scmp.eq.s32.totalorder %s22, 0
    %p383 = por %p381, %p382
    %p384 = scmp.ne.s32.totalorder %s373, %s376
    %p385 = scmp.eq.s32.totalorder %s27, 1
    %p386 = por %p384, %p385
    %p387 = scmp.ne.s32.totalorder %s376, %s377
    %p388 = scmp.eq.s32.totalorder %s27, 0
    %p389 = por %p387, %p388
    %p390 = scmp.ne.s32.totalorder %s376, %s377
    %p391 = scmp.eq.s32.totalorder %s28, 1
    %p392 = por %p390, %p391
    %p394 = scmp.ne.s32.totalorder %s377, %s393
    %p395 = scmp.eq.s32.totalorder %s28, 0
    %p396 = por %p394, %p395
    %p397 = scmp.le.s32.totalorder 1, %s22
    %p398 = scmp.lt.s32.totalorder %s22, 3
    %p399 = pnand %p397, %p398
    %p400 = pneg %p399
    // Predicated region
    $region9: #{large_forward.1} parent=5 // pred_check
      _
    $region10: #{large_forward.1} parent=5 // pred_check_branch
      %402 = sbr.rel (%p399) target = $region12
    $region11: #{large_forward.1} parent=5 // pred_region
      %s403 = ssub.s32 %s22, 1
      // Predicated region
      $region13: #{large_forward.1} parent=11 // pred_check
        %p404 = pneg %p69
      $region14: #{large_forward.1} parent=11 // pred_check_branch
        %406 = sbr.rel (%p404) target = $region16
      $region15: #{large_forward.1} parent=11 // pred_region
        _
      $region16: #{large_forward.1} parent=11 // pred_fallthru
        _
      // Predicated region
      $region17: #{large_forward.1} parent=11 // pred_check
        %p407 = pneg %p90
      $region18: #{large_forward.1} parent=11 // pred_check_branch
        %409 = sbr.rel (%p407) target = $region20
      $region19: #{large_forward.1} parent=11 // pred_region
        _
      $region20: #{large_forward.1} parent=11 // pred_fallthru
        _
      // Predicated region
      $region21: #{large_forward.1} parent=11 // pred_check
        %p410 = pneg %p111
      $region22: #{large_forward.1} parent=11 // pred_check_branch
        %412 = sbr.rel (%p410) target = $region24
      $region23: #{large_forward.1} parent=11 // pred_region
        _
      $region24: #{large_forward.1} parent=11 // pred_fallthru
        _
      // Predicated region
      $region25: #{large_forward.1} parent=11 // pred_check
        %p413 = pneg %p132
      $region26: #{large_forward.1} parent=11 // pred_check_branch
        %415 = sbr.rel (%p413) target = $region28
      $region27: #{large_forward.1} parent=11 // pred_region
        _
      $region28: #{large_forward.1} parent=11 // pred_fallthru
        _
      // Predicated region
      $region29: #{large_forward.1} parent=11 // pred_check
        %p416 = pneg %p153
      $region30: #{large_forward.1} parent=11 // pred_check_branch
        %418 = sbr.rel (%p416) target = $region32
      $region31: #{large_forward.1} parent=11 // pred_region
        _
      $region32: #{large_forward.1} parent=11 // pred_fallthru
        _
      // Predicated region
      $region33: #{large_forward.1} parent=11 // pred_check
        %p419 = pneg %p174
      $region34: #{large_forward.1} parent=11 // pred_check_branch
        %421 = sbr.rel (%p419) target = $region36
      $region35: #{large_forward.1} parent=11 // pred_region
        _
      $region36: #{large_forward.1} parent=11 // pred_fallthru
        _
      // Predicated region
      $region37: #{large_forward.1} parent=11 // pred_check
        %p422 = pneg %p195
      $region38: #{large_forward.1} parent=11 // pred_check_branch
        %424 = sbr.rel (%p422) target = $region40
      $region39: #{large_forward.1} parent=11 // pred_region
        _
      $region40: #{large_forward.1} parent=11 // pred_fallthru
        _
      // Predicated region
      $region41: #{large_forward.1} parent=11 // pred_check
        %p425 = pneg %p216
      $region42: #{large_forward.1} parent=11 // pred_check_branch
        %427 = sbr.rel (%p425) target = $region44
      $region43: #{large_forward.1} parent=11 // pred_region
        _
      $region44: #{large_forward.1} parent=11 // pred_fallthru
        _
      // Predicated region
      $region45: #{large_forward.1} parent=11 // pred_check
        %p428 = pneg %p237
      $region46: #{large_forward.1} parent=11 // pred_check_branch
        %430 = sbr.rel (%p428) target = $region48
      $region47: #{large_forward.1} parent=11 // pred_region
        _
      $region48: #{large_forward.1} parent=11 // pred_fallthru
        _
      // Predicated region
      $region49: #{large_forward.1} parent=11 // pred_check
        %p431 = pneg %p258
      $region50: #{large_forward.1} parent=11 // pred_check_branch
        %433 = sbr.rel (%p431) target = $region52
      $region51: #{large_forward.1} parent=11 // pred_region
        _
      $region52: #{large_forward.1} parent=11 // pred_fallthru
        _
      // Predicated region
      $region53: #{large_forward.1} parent=11 // pred_check
        %p434 = pneg %p279
      $region54: #{large_forward.1} parent=11 // pred_check_branch
        %436 = sbr.rel (%p434) target = $region56
      $region55: #{large_forward.1} parent=11 // pred_region
        _
      $region56: #{large_forward.1} parent=11 // pred_fallthru
        _
      // Predicated region
      $region57: #{large_forward.1} parent=11 // pred_check
        %p437 = pneg %p300
      $region58: #{large_forward.1} parent=11 // pred_check_branch
        %439 = sbr.rel (%p437) target = $region60
      $region59: #{large_forward.1} parent=11 // pred_region
        _
      $region60: #{large_forward.1} parent=11 // pred_fallthru
        _
      // Predicated region
      $region61: #{large_forward.1} parent=11 // pred_check
        %p440 = pneg %p321
      $region62: #{large_forward.1} parent=11 // pred_check_branch
        %442 = sbr.rel (%p440) target = $region64
      $region63: #{large_forward.1} parent=11 // pred_region
        _
      $region64: #{large_forward.1} parent=11 // pred_fallthru
        _
      // Predicated region
      $region65: #{large_forward.1} parent=11 // pred_check
        %p443 = pneg %p342
      $region66: #{large_forward.1} parent=11 // pred_check_branch
        %445 = sbr.rel (%p443) target = $region68
      $region67: #{large_forward.1} parent=11 // pred_region
        _
      $region68: #{large_forward.1} parent=11 // pred_fallthru
        _
      // Predicated region
      $region69: #{large_forward.1} parent=11 // pred_check
        %p446 = pneg %p363
      $region70: #{large_forward.1} parent=11 // pred_check_branch
        %448 = sbr.rel (%p446) target = $region72
      $region71: #{large_forward.1} parent=11 // pred_region
        _
      $region72: #{large_forward.1} parent=11 // pred_fallthru
        _
    $region12: #{large_forward.1} parent=5 // pred_fallthru
      _
    %p449 = scmp.lt.s32.totalorder %s22, 2
    // Predicated region
    $region73: #{large_forward.1} parent=5 // pred_check
      %p450 = pneg %p449
    $region74: #{large_forward.1} parent=5 // pred_check_branch
      %452 = sbr.rel (%p450) target = $region76
    $region75: #{large_forward.1} parent=5 // pred_region
      // Predicated region
      $region77: #{large_forward.1} parent=75 // pred_check
        %p453 = pneg %p42
      $region78: #{large_forward.1} parent=75 // pred_check_branch
        %455 = sbr.rel (%p453) target = $region80
      $region79: #{large_forward.1} parent=75 // pred_region
        %p456 = scmp.lt.s32.totalorder %s22, 1
        %s457 = scalar_select %p456, %s22, 1
        %s458 = smul.addr %s457, 72
        %s459 = smul.addr %s458, 4
        %s460 = scalar_lea.vmem %s0, %s459
      $region80: #{large_forward.1} parent=75 // pred_fallthru
        _
    $region76: #{large_forward.1} parent=5 // pred_fallthru
      _
    %p461 = scmp.le.s32.totalorder 1, %s22
    %p462 = scmp.lt.s32.totalorder %s22, 3
    %p463 = pnand %p461, %p462
    %p464 = pneg %p463
    // Predicated region
    $region81: #{large_forward.1} parent=5 // pred_check
      _
    $region82: #{large_forward.1} parent=5 // pred_check_branch
      %466 = sbr.rel (%p463) target = $region84
    $region83: #{large_forward.1} parent=5 // pred_region
      %s467 = ssub.s32 %s22, 1
      %p468 = scmp.lt.s32.totalorder %s27, 1
      %s469 = scalar_select %p468, %s27, 1
      %s470 = smul.addr %s469, 72
      %s471 = smul.addr %s470, 4
      %s472 = scalar_lea.vmem %s0, %s471
      %p473 = pneg %p48
      %p474 = pneg %p45
      %p475 = pneg %p69
      %p476 = pneg %p66
      %p477 = pneg %p90
      %p478 = pneg %p87
      %p479 = pneg %p111
      %p480 = pneg %p108
      %p481 = pneg %p132
      %p482 = pneg %p129
      %p483 = pneg %p153
      %p484 = pneg %p150
      %p485 = pneg %p174
      %p486 = pneg %p171
      %p487 = pneg %p195
      %p488 = pneg %p192
      %p489 = pneg %p216
      %p490 = pneg %p213
      %p491 = pneg %p237
      %p492 = pneg %p234
      %p493 = pneg %p258
      %p494 = pneg %p255
      %p495 = pneg %p279
      %p496 = pneg %p276
      %p497 = pneg %p300
      %p498 = pneg %p297
      %p499 = pneg %p321
      %p500 = pneg %p318
      %p501 = pneg %p342
      %p502 = pneg %p339
      %p503 = pneg %p363
      %p504 = pneg %p360
      %p505 = pneg %p389
      %p506 = pneg %p386
      %p507 = scmp.lt.s32.totalorder %s27, 1
      %s508 = scalar_select %p507, %s27, 1
      %s509 = smul.addr %s508, 8
      %s510 = scalar_lea.vmem %s16, %s509
      %p511 = scmp.lt.s32.totalorder %s27, 1
      %s512 = scalar_select %p511, %s27, 1
      %s513 = smul.addr %s512, 72
      %s514 = smul.addr %s513, 4
      %s515 = scalar_lea.vmem %s0, %s514
      %p516 = scmp.lt.s32.totalorder %s27, 1
      %s517 = scalar_select %p516, %s27, 1
      %s518 = smul.addr %s517, 8
      %s519 = scalar_lea.vmem %s16, %s518
      %v521 = vld [vmem:[%s515] sm:$0xf]
      %v522 = vld [vmem:[%s515 + $0x4] sm:$0xf]
      %v523 = vld [vmem:[%s515 + $0x8] sm:$0xf]
      %v524 = vld [vmem:[%s515 + $0xc] sm:$0xf]
      %v525 = vld [vmem:[%s515 + $0x10] sm:$0xf]
      %v526 = vld [vmem:[%s515 + $0x14] sm:$0xf]
      %v527 = vld [vmem:[%s515 + $0x18] sm:$0xf]
      %v528 = vld [vmem:[%s515 + $0x1c] sm:$0xf]
      %v529 = vld [vmem:[%s515 + $0x20] sm:$0xf]
      %v530 = vld [vmem:[%s515 + $0x24] sm:$0xf]
      %v531 = vld [vmem:[%s515 + $0x28] sm:$0xf]
      %v532 = vld [vmem:[%s515 + $0x2c] sm:$0xf]
      %v533 = vld [vmem:[%s515 + $0x30] sm:$0xf]
      %v534 = vld [vmem:[%s515 + $0x34] sm:$0xf]
      %v535 = vld [vmem:[%s515 + $0x38] sm:$0xf]
      %v536 = vld [vmem:[%s515 + $0x3c] sm:$0xf]
      %v537 = vld [vmem:[%s515 + $0x40] sm:$0xf]
      %v538 = vld [vmem:[%s515 + $0x44] sm:$0xf]
      %v539 = vld [vmem:[%s515 + $0x48] sm:$0xf]
      %v540 = vld [vmem:[%s515 + $0x4c] sm:$0xf]
      %v541 = vld [vmem:[%s515 + $0x50] sm:$0xf]
      %v542 = vld [vmem:[%s515 + $0x54] sm:$0xf]
      %v543 = vld [vmem:[%s515 + $0x58] sm:$0xf]
      %v544 = vld [vmem:[%s515 + $0x5c] sm:$0xf]
      %v545 = vld [vmem:[%s515 + $0x60] sm:$0xf]
      %v546 = vld [vmem:[%s515 + $0x64] sm:$0xf]
      %v547 = vld [vmem:[%s515 + $0x68] sm:$0xf]
      %v548 = vld [vmem:[%s515 + $0x6c] sm:$0xf]
      %v549 = vld [vmem:[%s515 + $0x70] sm:$0xf]
      %v550 = vld [vmem:[%s515 + $0x74] sm:$0xf]
      %v551 = vld [vmem:[%s515 + $0x78] sm:$0xf]
      %v552 = vld [vmem:[%s515 + $0x7c] sm:$0xf]
      %v553 = vld [vmem:[%s515 + $0x80] sm:$0xf]
      %v554 = vld [vmem:[%s515 + $0x84] sm:$0xf]
      %v555 = vld [vmem:[%s515 + $0x88] sm:$0xf]
      %v556 = vld [vmem:[%s515 + $0x8c] sm:$0xf]
      %v557 = vld [vmem:[%s515 + $0x90] sm:$0xf]
      %v558 = vld [vmem:[%s515 + $0x94] sm:$0xf]
      %v559 = vld [vmem:[%s515 + $0x98] sm:$0xf]
      %v560 = vld [vmem:[%s515 + $0x9c] sm:$0xf]
      %v561 = vld [vmem:[%s515 + $0xa0] sm:$0xf]
      %v562 = vld [vmem:[%s515 + $0xa4] sm:$0xf]
      %v563 = vld [vmem:[%s515 + $0xa8] sm:$0xf]
      %v564 = vld [vmem:[%s515 + $0xac] sm:$0xf]
      %v565 = vld [vmem:[%s515 + $0xb0] sm:$0xf]
      %v566 = vld [vmem:[%s515 + $0xb4] sm:$0xf]
      %v567 = vld [vmem:[%s515 + $0xb8] sm:$0xf]
      %v568 = vld [vmem:[%s515 + $0xbc] sm:$0xf]
      %v569 = vld [vmem:[%s515 + $0xc0] sm:$0xf]
      %v570 = vld [vmem:[%s515 + $0xc4] sm:$0xf]
      %v571 = vld [vmem:[%s515 + $0xc8] sm:$0xf]
      %v572 = vld [vmem:[%s515 + $0xcc] sm:$0xf]
      %v573 = vld [vmem:[%s515 + $0xd0] sm:$0xf]
      %v574 = vld [vmem:[%s515 + $0xd4] sm:$0xf]
      %v575 = vld [vmem:[%s515 + $0xd8] sm:$0xf]
      %v576 = vld [vmem:[%s515 + $0xdc] sm:$0xf]
      %v577 = vld [vmem:[%s515 + $0xe0] sm:$0xf]
      %v578 = vld [vmem:[%s515 + $0xe4] sm:$0xf]
      %v579 = vld [vmem:[%s515 + $0xe8] sm:$0xf]
      %v580 = vld [vmem:[%s515 + $0xec] sm:$0xf]
      %v581 = vld [vmem:[%s515 + $0xf0] sm:$0xf]
      %v582 = vld [vmem:[%s515 + $0xf4] sm:$0xf]
      %v583 = vld [vmem:[%s515 + $0xf8] sm:$0xf]
      %v584 = vld [vmem:[%s515 + $0xfc] sm:$0xf]
      %v585 = vld [vmem:[%s515 + $0x100] sm:$0xf]
      %v586 = vld [vmem:[%s515 + $0x104] sm:$0xf]
      %v587 = vld [vmem:[%s515 + $0x108] sm:$0xf]
      %v588 = vld [vmem:[%s515 + $0x10c] sm:$0xf]
      %v589 = vld [vmem:[%s515 + $0x110] sm:$0xf]
      %v590 = vld [vmem:[%s515 + $0x114] sm:$0xf]
      %v591 = vld [vmem:[%s515 + $0x118] sm:$0xf]
      %v592 = vld [vmem:[%s515 + $0x11c] sm:$0xf]
      %v593 = vld [vmem:[%s1] sm:$0xf]
      %v594 = vld [vmem:[%s1 + $0x4] sm:$0xf]
      %v595 = vld [vmem:[%s1 + $0x8] sm:$0xf]
      %v596 = vld [vmem:[%s1 + $0xc] sm:$0xf]
      %v597 = vld [vmem:[%s2] sm:$0x1]
      %v599 = vperm.slane %v597, 0
      %v673 = vunpack.c.l.b16 %v521
      %v674 = vunpack.c.l.b16 %v522
      %v675 = vunpack.c.l.b16 %v523
      %v676 = vunpack.c.l.b16 %v524
      %v677 = vunpack.c.l.b16 %v525
      %v678 = vunpack.c.l.b16 %v526
      %v679 = vunpack.c.l.b16 %v527
      %v680 = vunpack.c.l.b16 %v528
      %v681 = vunpack.c.l.b16 %v529
      %v682 = vunpack.c.l.b16 %v530
      %v683 = vunpack.c.l.b16 %v531
      %v684 = vunpack.c.l.b16 %v532
      %v685 = vunpack.c.l.b16 %v533
      %v686 = vunpack.c.l.b16 %v534
      %v687 = vunpack.c.l.b16 %v535
      %v688 = vunpack.c.l.b16 %v536
      %v689 = vunpack.c.l.b16 %v537
      %v690 = vunpack.c.l.b16 %v538
      %v691 = vunpack.c.l.b16 %v539
      %v692 = vunpack.c.l.b16 %v540
      %v693 = vunpack.c.l.b16 %v541
      %v694 = vunpack.c.l.b16 %v542
      %v695 = vunpack.c.l.b16 %v543
      %v696 = vunpack.c.l.b16 %v544
      %v697 = vunpack.c.l.b16 %v545
      %v698 = vunpack.c.l.b16 %v546
      %v699 = vunpack.c.l.b16 %v547
      %v700 = vunpack.c.l.b16 %v548
      %v701 = vunpack.c.l.b16 %v549
      %v702 = vunpack.c.l.b16 %v550
      %v703 = vunpack.c.l.b16 %v551
      %v704 = vunpack.c.l.b16 %v552
      %v705 = vunpack.c.l.b16 %v553
      %v706 = vunpack.c.l.b16 %v554
      %v707 = vunpack.c.l.b16 %v555
      %v708 = vunpack.c.l.b16 %v556
      %v709 = vunpack.c.l.b16 %v557
      %v710 = vunpack.c.l.b16 %v558
      %v711 = vunpack.c.l.b16 %v559
      %v712 = vunpack.c.l.b16 %v560
      %v713 = vunpack.c.l.b16 %v561
      %v714 = vunpack.c.l.b16 %v562
      %v715 = vunpack.c.l.b16 %v563
      %v716 = vunpack.c.l.b16 %v564
      %v717 = vunpack.c.l.b16 %v565
      %v718 = vunpack.c.l.b16 %v566
      %v719 = vunpack.c.l.b16 %v567
      %v720 = vunpack.c.l.b16 %v568
      %v721 = vunpack.c.l.b16 %v569
      %v722 = vunpack.c.l.b16 %v570
      %v723 = vunpack.c.l.b16 %v571
      %v724 = vunpack.c.l.b16 %v572
      %v725 = vunpack.c.l.b16 %v573
      %v726 = vunpack.c.l.b16 %v574
      %v727 = vunpack.c.l.b16 %v575
      %v728 = vunpack.c.l.b16 %v576
      %v729 = vunpack.c.l.b16 %v577
      %v730 = vunpack.c.l.b16 %v578
      %v731 = vunpack.c.l.b16 %v579
      %v732 = vunpack.c.l.b16 %v580
      %v733 = vunpack.c.l.b16 %v581
      %v734 = vunpack.c.l.b16 %v582
      %v735 = vunpack.c.l.b16 %v583
      %v736 = vunpack.c.l.b16 %v584
      %v737 = vunpack.c.l.b16 %v585
      %v738 = vunpack.c.l.b16 %v586
      %v739 = vunpack.c.l.b16 %v587
      %v740 = vunpack.c.l.b16 %v588
      %v741 = vunpack.c.l.b16 %v589
      %v742 = vunpack.c.l.b16 %v590
      %v743 = vunpack.c.l.b16 %v591
      %v744 = vunpack.c.l.b16 %v592
      %v745 = vpack.c.b16 %v674, %v673
      %v746 = vpack.c.b16 %v676, %v675
      %v747 = vpack.c.b16 %v678, %v677
      %v748 = vpack.c.b16 %v680, %v679
      %v749 = vpack.c.b16 %v682, %v681
      %v750 = vpack.c.b16 %v684, %v683
      %v751 = vpack.c.b16 %v686, %v685
      %v752 = vpack.c.b16 %v688, %v687
      %v753 = vpack.c.b16 %v690, %v689
      %v754 = vpack.c.b16 %v692, %v691
      %v755 = vpack.c.b16 %v694, %v693
      %v756 = vpack.c.b16 %v696, %v695
      %v757 = vpack.c.b16 %v698, %v697
      %v758 = vpack.c.b16 %v700, %v699
      %v759 = vpack.c.b16 %v702, %v701
      %v760 = vpack.c.b16 %v704, %v703
      %v761 = vpack.c.b16 %v706, %v705
      %v762 = vpack.c.b16 %v708, %v707
      %v763 = vpack.c.b16 %v710, %v709
      %v764 = vpack.c.b16 %v712, %v711
      %v765 = vpack.c.b16 %v714, %v713
      %v766 = vpack.c.b16 %v716, %v715
      %v767 = vpack.c.b16 %v718, %v717
      %v768 = vpack.c.b16 %v720, %v719
      %v769 = vpack.c.b16 %v722, %v721
      %v770 = vpack.c.b16 %v724, %v723
      %v771 = vpack.c.b16 %v726, %v725
      %v772 = vpack.c.b16 %v728, %v727
      %v773 = vpack.c.b16 %v730, %v729
      %v774 = vpack.c.b16 %v732, %v731
      %v775 = vpack.c.b16 %v734, %v733
      %v776 = vpack.c.b16 %v736, %v735
      %v777 = vpack.c.b16 %v738, %v737
      %v778 = vpack.c.b16 %v740, %v739
      %v779 = vpack.c.b16 %v742, %v741
      %v780 = vpack.c.b16 %v744, %v743
      %v785 = vunpack.c.l.b16 %v593
      %v786 = vunpack.c.l.b16 %v594
      %v787 = vunpack.c.l.b16 %v595
      %v788 = vunpack.c.l.b16 %v596
      %v789 = vpack.c.b16 %v786, %v785
      %v790 = vpack.c.b16 %v788, %v787
      %vm793 = vcmask 261120
      %v795 = vsel %vm793, %v745, 0
      %v798 = vsel %vm793, %v746, 0
      %v801 = vsel %vm793, %v747, 0
      %v804 = vsel %vm793, %v748, 0
      %v807 = vsel %vm793, %v749, 0
      %v810 = vsel %vm793, %v750, 0
      %v813 = vsel %vm793, %v751, 0
      %v816 = vsel %vm793, %v752, 0
      %v819 = vsel %vm793, %v753, 0
      %v822 = vsel %vm793, %v754, 0
      %v825 = vsel %vm793, %v755, 0
      %v828 = vsel %vm793, %v756, 0
      %v831 = vsel %vm793, %v757, 0
      %v834 = vsel %vm793, %v758, 0
      %v837 = vsel %vm793, %v759, 0
      %v840 = vsel %vm793, %v760, 0
      %v843 = vsel %vm793, %v761, 0
      %v846 = vsel %vm793, %v762, 0
      %v849 = vsel %vm793, %v763, 0
      %v852 = vsel %vm793, %v764, 0
      %v855 = vsel %vm793, %v765, 0
      %v858 = vsel %vm793, %v766, 0
      %v861 = vsel %vm793, %v767, 0
      %v864 = vsel %vm793, %v768, 0
      %v867 = vsel %vm793, %v769, 0
      %v870 = vsel %vm793, %v770, 0
      %v873 = vsel %vm793, %v771, 0
      %v876 = vsel %vm793, %v772, 0
      %v879 = vsel %vm793, %v773, 0
      %v882 = vsel %vm793, %v774, 0
      %v885 = vsel %vm793, %v775, 0
      %v888 = vsel %vm793, %v776, 0
      %v891 = vsel %vm793, %v777, 0
      %v894 = vsel %vm793, %v778, 0
      %v897 = vsel %vm793, %v779, 0
      %v900 = vsel %vm793, %v780, 0
      %902 = vmatpush.bf16.msra.mxu0 0
      %903 = vmatpush.bf16.msra.mxu0 0
      %904 = vmatpush.bf16.msra.mxu0 0
      %905 = vmatpush.bf16.msra.mxu0 0
      %906 = vmatpush.bf16.msra.mxu0 0
      %907 = vmatpush.bf16.msra.mxu0 0
      %908 = vmatpush.bf16.msra.mxu0 %v790
      %909 = vmatpush.bf16.msra.mxu0 %v789
      %910 = vmatmul.bf16.gmra.mxu0 %v795
      %v911 = vpop.f32.mrf.mxu0
      %v912 = vadd.f32 %v599, %v911
      %v913 = vpop.f32.mrf.mxu0
      %v914 = vadd.f32 %v599, %v913
      %915 = vmatmul.bf16.gmra.mxu0 %v798
      %v916 = vpop.f32.mrf.mxu0
      %v917 = vadd.f32 %v599, %v916
      %v918 = vpop.f32.mrf.mxu0
      %v919 = vadd.f32 %v599, %v918
      %920 = vmatmul.bf16.gmra.mxu0 %v801
      %v921 = vpop.f32.mrf.mxu0
      %v922 = vadd.f32 %v599, %v921
      %v923 = vpop.f32.mrf.mxu0
      %v924 = vadd.f32 %v599, %v923
      %925 = vmatmul.bf16.gmra.mxu0 %v804
      %v926 = vpop.f32.mrf.mxu0
      %v927 = vadd.f32 %v599, %v926
      %v928 = vpop.f32.mrf.mxu0
      %v929 = vadd.f32 %v599, %v928
      %930 = vmatmul.bf16.gmra.mxu0 %v807
      %v931 = vpop.f32.mrf.mxu0
      %v932 = vadd.f32 %v599, %v931
      %v933 = vpop.f32.mrf.mxu0
      %v934 = vadd.f32 %v599, %v933
      %935 = vmatmul.bf16.gmra.mxu0 %v810
      %v936 = vpop.f32.mrf.mxu0
      %v937 = vadd.f32 %v599, %v936
      %v938 = vpop.f32.mrf.mxu0
      %v939 = vadd.f32 %v599, %v938
      %940 = vmatmul.bf16.gmra.mxu0 %v813
      %v941 = vpop.f32.mrf.mxu0
      %v942 = vadd.f32 %v599, %v941
      %v943 = vpop.f32.mrf.mxu0
      %v944 = vadd.f32 %v599, %v943
      %945 = vmatmul.bf16.gmra.mxu0 %v816
      %v946 = vpop.f32.mrf.mxu0
      %v947 = vadd.f32 %v599, %v946
      %v948 = vpop.f32.mrf.mxu0
      %v949 = vadd.f32 %v599, %v948
      %950 = vmatmul.bf16.gmra.mxu0 %v819
      %v951 = vpop.f32.mrf.mxu0
      %v952 = vadd.f32 %v599, %v951
      %v953 = vpop.f32.mrf.mxu0
      %v954 = vadd.f32 %v599, %v953
      %955 = vmatmul.bf16.gmra.mxu0 %v822
      %v956 = vpop.f32.mrf.mxu0
      %v957 = vadd.f32 %v599, %v956
      %v958 = vpop.f32.mrf.mxu0
      %v959 = vadd.f32 %v599, %v958
      %960 = vmatmul.bf16.gmra.mxu0 %v825
      %v961 = vpop.f32.mrf.mxu0
      %v962 = vadd.f32 %v599, %v961
      %v963 = vpop.f32.mrf.mxu0
      %v964 = vadd.f32 %v599, %v963
      %965 = vmatmul.bf16.gmra.mxu0 %v828
      %v966 = vpop.f32.mrf.mxu0
      %v967 = vadd.f32 %v599, %v966
      %v968 = vpop.f32.mrf.mxu0
      %v969 = vadd.f32 %v599, %v968
      %970 = vmatmul.bf16.gmra.mxu0 %v831
      %v971 = vpop.f32.mrf.mxu0
      %v972 = vadd.f32 %v599, %v971
      %v973 = vpop.f32.mrf.mxu0
      %v974 = vadd.f32 %v599, %v973
      %975 = vmatmul.bf16.gmra.mxu0 %v834
      %v976 = vpop.f32.mrf.mxu0
      %v977 = vadd.f32 %v599, %v976
      %v978 = vpop.f32.mrf.mxu0
      %v979 = vadd.f32 %v599, %v978
      %980 = vmatmul.bf16.gmra.mxu0 %v837
      %v981 = vpop.f32.mrf.mxu0
      %v982 = vadd.f32 %v599, %v981
      %v983 = vpop.f32.mrf.mxu0
      %v984 = vadd.f32 %v599, %v983
      %985 = vmatmul.bf16.gmra.mxu0 %v840
      %v986 = vpop.f32.mrf.mxu0
      %v987 = vadd.f32 %v599, %v986
      %v988 = vpop.f32.mrf.mxu0
      %v989 = vadd.f32 %v599, %v988
      %990 = vmatmul.bf16.gmra.mxu0 %v843
      %v991 = vpop.f32.mrf.mxu0
      %v992 = vadd.f32 %v599, %v991
      %v993 = vpop.f32.mrf.mxu0
      %v994 = vadd.f32 %v599, %v993
      %995 = vmatmul.bf16.gmra.mxu0 %v846
      %v996 = vpop.f32.mrf.mxu0
      %v997 = vadd.f32 %v599, %v996
      %v998 = vpop.f32.mrf.mxu0
      %v999 = vadd.f32 %v599, %v998
      %1000 = vmatmul.bf16.gmra.mxu0 %v849
      %v1001 = vpop.f32.mrf.mxu0
      %v1002 = vadd.f32 %v599, %v1001
      %v1003 = vpop.f32.mrf.mxu0
      %v1004 = vadd.f32 %v599, %v1003
      %1005 = vmatmul.bf16.gmra.mxu0 %v852
      %v1006 = vpop.f32.mrf.mxu0
      %v1007 = vadd.f32 %v599, %v1006
      %v1008 = vpop.f32.mrf.mxu0
      %v1009 = vadd.f32 %v599, %v1008
      %1010 = vmatmul.bf16.gmra.mxu0 %v855
      %v1011 = vpop.f32.mrf.mxu0
      %v1012 = vadd.f32 %v599, %v1011
      %v1013 = vpop.f32.mrf.mxu0
      %v1014 = vadd.f32 %v599, %v1013
      %1015 = vmatmul.bf16.gmra.mxu0 %v858
      %v1016 = vpop.f32.mrf.mxu0
      %v1017 = vadd.f32 %v599, %v1016
      %v1018 = vpop.f32.mrf.mxu0
      %v1019 = vadd.f32 %v599, %v1018
      %1020 = vmatmul.bf16.gmra.mxu0 %v861
      %v1021 = vpop.f32.mrf.mxu0
      %v1022 = vadd.f32 %v599, %v1021
      %v1023 = vpop.f32.mrf.mxu0
      %v1024 = vadd.f32 %v599, %v1023
      %1025 = vmatmul.bf16.gmra.mxu0 %v864
      %v1026 = vpop.f32.mrf.mxu0
      %v1027 = vadd.f32 %v599, %v1026
      %v1028 = vpop.f32.mrf.mxu0
      %v1029 = vadd.f32 %v599, %v1028
      %1030 = vmatmul.bf16.gmra.mxu0 %v867
      %v1031 = vpop.f32.mrf.mxu0
      %v1032 = vadd.f32 %v599, %v1031
      %v1033 = vpop.f32.mrf.mxu0
      %v1034 = vadd.f32 %v599, %v1033
      %1035 = vmatmul.bf16.gmra.mxu0 %v870
      %v1036 = vpop.f32.mrf.mxu0
      %v1037 = vadd.f32 %v599, %v1036
      %v1038 = vpop.f32.mrf.mxu0
      %v1039 = vadd.f32 %v599, %v1038
      %1040 = vmatmul.bf16.gmra.mxu0 %v873
      %v1041 = vpop.f32.mrf.mxu0
      %v1042 = vadd.f32 %v599, %v1041
      %v1043 = vpop.f32.mrf.mxu0
      %v1044 = vadd.f32 %v599, %v1043
      %1045 = vmatmul.bf16.gmra.mxu0 %v876
      %v1046 = vpop.f32.mrf.mxu0
      %v1047 = vadd.f32 %v599, %v1046
      %v1048 = vpop.f32.mrf.mxu0
      %v1049 = vadd.f32 %v599, %v1048
      %1050 = vmatmul.bf16.gmra.mxu0 %v879
      %v1051 = vpop.f32.mrf.mxu0
      %v1052 = vadd.f32 %v599, %v1051
      %v1053 = vpop.f32.mrf.mxu0
      %v1054 = vadd.f32 %v599, %v1053
      %1055 = vmatmul.bf16.gmra.mxu0 %v882
      %v1056 = vpop.f32.mrf.mxu0
      %v1057 = vadd.f32 %v599, %v1056
      %v1058 = vpop.f32.mrf.mxu0
      %v1059 = vadd.f32 %v599, %v1058
      %1060 = vmatmul.bf16.gmra.mxu0 %v885
      %v1061 = vpop.f32.mrf.mxu0
      %v1062 = vadd.f32 %v599, %v1061
      %v1063 = vpop.f32.mrf.mxu0
      %v1064 = vadd.f32 %v599, %v1063
      %1065 = vmatmul.bf16.gmra.mxu0 %v888
      %v1066 = vpop.f32.mrf.mxu0
      %v1067 = vadd.f32 %v599, %v1066
      %v1068 = vpop.f32.mrf.mxu0
      %v1069 = vadd.f32 %v599, %v1068
      %1070 = vmatmul.bf16.gmra.mxu0 %v891
      %v1071 = vpop.f32.mrf.mxu0
      %v1072 = vadd.f32 %v599, %v1071
      %v1073 = vpop.f32.mrf.mxu0
      %v1074 = vadd.f32 %v599, %v1073
      %1075 = vmatmul.bf16.gmra.mxu0 %v894
      %v1076 = vpop.f32.mrf.mxu0
      %v1077 = vadd.f32 %v599, %v1076
      %v1078 = vpop.f32.mrf.mxu0
      %v1079 = vadd.f32 %v599, %v1078
      %1080 = vmatmul.bf16.gmra.mxu0 %v897
      %v1081 = vpop.f32.mrf.mxu0
      %v1082 = vadd.f32 %v599, %v1081
      %v1083 = vpop.f32.mrf.mxu0
      %v1084 = vadd.f32 %v599, %v1083
      %1085 = vmatmul.bf16.gmra.mxu0 %v900
      %v1086 = vpop.f32.mrf.mxu0
      %v1087 = vadd.f32 %v599, %v1086
      %v1088 = vpop.f32.mrf.mxu0
      %v1089 = vadd.f32 %v599, %v1088
      %1090 = vdwg.mxu0
      %v1091 = vmax.f32 %v912, 0.0
      %v1092 = vmax.f32 %v914, 0.0
      %v1093 = vmax.f32 %v917, 0.0
      %v1094 = vmax.f32 %v919, 0.0
      %v1095 = vmax.f32 %v922, 0.0
      %v1096 = vmax.f32 %v924, 0.0
      %v1097 = vmax.f32 %v927, 0.0
      %v1098 = vmax.f32 %v929, 0.0
      %v1099 = vmax.f32 %v932, 0.0
      %v1100 = vmax.f32 %v934, 0.0
      %v1101 = vmax.f32 %v937, 0.0
      %v1102 = vmax.f32 %v939, 0.0
      %v1103 = vmax.f32 %v942, 0.0
      %v1104 = vmax.f32 %v944, 0.0
      %v1105 = vmax.f32 %v947, 0.0
      %v1106 = vmax.f32 %v949, 0.0
      %v1107 = vmax.f32 %v952, 0.0
      %v1108 = vmax.f32 %v954, 0.0
      %v1109 = vmax.f32 %v957, 0.0
      %v1110 = vmax.f32 %v959, 0.0
      %v1111 = vmax.f32 %v962, 0.0
      %v1112 = vmax.f32 %v964, 0.0
      %v1113 = vmax.f32 %v967, 0.0
      %v1114 = vmax.f32 %v969, 0.0
      %v1115 = vmax.f32 %v972, 0.0
      %v1116 = vmax.f32 %v974, 0.0
      %v1117 = vmax.f32 %v977, 0.0
      %v1118 = vmax.f32 %v979, 0.0
      %v1119 = vmax.f32 %v982, 0.0
      %v1120 = vmax.f32 %v984, 0.0
      %v1121 = vmax.f32 %v987, 0.0
      %v1122 = vmax.f32 %v989, 0.0
      %v1123 = vmax.f32 %v992, 0.0
      %v1124 = vmax.f32 %v994, 0.0
      %v1125 = vmax.f32 %v997, 0.0
      %v1126 = vmax.f32 %v999, 0.0
      %v1127 = vmax.f32 %v1002, 0.0
      %v1128 = vmax.f32 %v1004, 0.0
      %v1129 = vmax.f32 %v1007, 0.0
      %v1130 = vmax.f32 %v1009, 0.0
      %v1131 = vmax.f32 %v1012, 0.0
      %v1132 = vmax.f32 %v1014, 0.0
      %v1133 = vmax.f32 %v1017, 0.0
      %v1134 = vmax.f32 %v1019, 0.0
      %v1135 = vmax.f32 %v1022, 0.0
      %v1136 = vmax.f32 %v1024, 0.0
      %v1137 = vmax.f32 %v1027, 0.0
      %v1138 = vmax.f32 %v1029, 0.0
      %v1139 = vmax.f32 %v1032, 0.0
      %v1140 = vmax.f32 %v1034, 0.0
      %v1141 = vmax.f32 %v1037, 0.0
      %v1142 = vmax.f32 %v1039, 0.0
      %v1143 = vmax.f32 %v1042, 0.0
      %v1144 = vmax.f32 %v1044, 0.0
      %v1145 = vmax.f32 %v1047, 0.0
      %v1146 = vmax.f32 %v1049, 0.0
      %v1147 = vmax.f32 %v1052, 0.0
      %v1148 = vmax.f32 %v1054, 0.0
      %v1149 = vmax.f32 %v1057, 0.0
      %v1150 = vmax.f32 %v1059, 0.0
      %v1151 = vmax.f32 %v1062, 0.0
      %v1152 = vmax.f32 %v1064, 0.0
      %v1153 = vmax.f32 %v1067, 0.0
      %v1154 = vmax.f32 %v1069, 0.0
      %v1155 = vmax.f32 %v1072, 0.0
      %v1156 = vmax.f32 %v1074, 0.0
      %v1157 = vmax.f32 %v1077, 0.0
      %v1158 = vmax.f32 %v1079, 0.0
      %v1159 = vmax.f32 %v1082, 0.0
      %v1160 = vmax.f32 %v1084, 0.0
      %v1161 = vmax.f32 %v1087, 0.0
      %v1162 = vmax.f32 %v1089, 0.0
      %vm1235 = vcmask 1046528
      %v1236 = vrot.slane %v1091, 1
      %v1237 = vrot.slane %v1092, 1
      %v1238 = vsel %vm1235, %v1236, %v1237
      %v1239 = vrot.slane %v1093, 1
      %v1240 = vsel %vm1235, %v1237, %v1239
      %v1241 = vrot.slane %v1094, 1
      %v1242 = vsel %vm1235, %v1239, %v1241
      %v1243 = vrot.slane %v1095, 1
      %v1244 = vsel %vm1235, %v1241, %v1243
      %v1245 = vrot.slane %v1096, 1
      %v1246 = vsel %vm1235, %v1243, %v1245
      %v1247 = vrot.slane %v1097, 1
      %v1248 = vsel %vm1235, %v1245, %v1247
      %v1249 = vrot.slane %v1098, 1
      %v1250 = vsel %vm1235, %v1247, %v1249
      %v1251 = vrot.slane %v1099, 1
      %v1252 = vsel %vm1235, %v1249, %v1251
      %v1253 = vrot.slane %v1100, 1
      %v1254 = vsel %vm1235, %v1251, %v1253
      %v1255 = vrot.slane %v1101, 1
      %v1256 = vsel %vm1235, %v1253, %v1255
      %v1257 = vrot.slane %v1102, 1
      %v1258 = vsel %vm1235, %v1255, %v1257
      %v1259 = vrot.slane %v1103, 1
      %v1260 = vsel %vm1235, %v1257, %v1259
      %v1261 = vrot.slane %v1104, 1
      %v1262 = vsel %vm1235, %v1259, %v1261
      %v1263 = vrot.slane %v1105, 1
      %v1264 = vsel %vm1235, %v1261, %v1263
      %v1265 = vrot.slane %v1106, 1
      %v1266 = vsel %vm1235, %v1263, %v1265
      %v1267 = vrot.slane %v1107, 1
      %v1268 = vsel %vm1235, %v1265, %v1267
      %v1269 = vrot.slane %v1108, 1
      %v1270 = vsel %vm1235, %v1267, %v1269
      %v1271 = vrot.slane %v1109, 1
      %v1272 = vsel %vm1235, %v1269, %v1271
      %v1273 = vrot.slane %v1110, 1
      %v1274 = vsel %vm1235, %v1271, %v1273
      %v1275 = vrot.slane %v1111, 1
      %v1276 = vsel %vm1235, %v1273, %v1275
      %v1277 = vrot.slane %v1112, 1
      %v1278 = vsel %vm1235, %v1275, %v1277
      %v1279 = vrot.slane %v1113, 1
      %v1280 = vsel %vm1235, %v1277, %v1279
      %v1281 = vrot.slane %v1114, 1
      %v1282 = vsel %vm1235, %v1279, %v1281
      %v1283 = vrot.slane %v1115, 1
      %v1284 = vsel %vm1235, %v1281, %v1283
      %v1285 = vrot.slane %v1116, 1
      %v1286 = vsel %vm1235, %v1283, %v1285
      %v1287 = vrot.slane %v1117, 1
      %v1288 = vsel %vm1235, %v1285, %v1287
      %v1289 = vrot.slane %v1118, 1
      %v1290 = vsel %vm1235, %v1287, %v1289
      %v1291 = vrot.slane %v1119, 1
      %v1292 = vsel %vm1235, %v1289, %v1291
      %v1293 = vrot.slane %v1120, 1
      %v1294 = vsel %vm1235, %v1291, %v1293
      %v1295 = vrot.slane %v1121, 1
      %v1296 = vsel %vm1235, %v1293, %v1295
      %v1297 = vrot.slane %v1122, 1
      %v1298 = vsel %vm1235, %v1295, %v1297
      %v1299 = vrot.slane %v1123, 1
      %v1300 = vsel %vm1235, %v1297, %v1299
      %v1301 = vrot.slane %v1124, 1
      %v1302 = vsel %vm1235, %v1299, %v1301
      %v1303 = vrot.slane %v1125, 1
      %v1304 = vsel %vm1235, %v1301, %v1303
      %v1305 = vrot.slane %v1126, 1
      %v1306 = vsel %vm1235, %v1303, %v1305
      %v1307 = vrot.slane %v1127, 1
      %v1308 = vsel %vm1235, %v1305, %v1307
      %v1309 = vrot.slane %v1128, 1
      %v1310 = vsel %vm1235, %v1307, %v1309
      %v1311 = vrot.slane %v1129, 1
      %v1312 = vsel %vm1235, %v1309, %v1311
      %v1313 = vrot.slane %v1130, 1
      %v1314 = vsel %vm1235, %v1311, %v1313
      %v1315 = vrot.slane %v1131, 1
      %v1316 = vsel %vm1235, %v1313, %v1315
      %v1317 = vrot.slane %v1132, 1
      %v1318 = vsel %vm1235, %v1315, %v1317
      %v1319 = vrot.slane %v1133, 1
      %v1320 = vsel %vm1235, %v1317, %v1319
      %v1321 = vrot.slane %v1134, 1
      %v1322 = vsel %vm1235, %v1319, %v1321
      %v1323 = vrot.slane %v1135, 1
      %v1324 = vsel %vm1235, %v1321, %v1323
      %v1325 = vrot.slane %v1136, 1
      %v1326 = vsel %vm1235, %v1323, %v1325
      %v1327 = vrot.slane %v1137, 1
      %v1328 = vsel %vm1235, %v1325, %v1327
      %v1329 = vrot.slane %v1138, 1
      %v1330 = vsel %vm1235, %v1327, %v1329
      %v1331 = vrot.slane %v1139, 1
      %v1332 = vsel %vm1235, %v1329, %v1331
      %v1333 = vrot.slane %v1140, 1
      %v1334 = vsel %vm1235, %v1331, %v1333
      %v1335 = vrot.slane %v1141, 1
      %v1336 = vsel %vm1235, %v1333, %v1335
      %v1337 = vrot.slane %v1142, 1
      %v1338 = vsel %vm1235, %v1335, %v1337
      %v1339 = vrot.slane %v1143, 1
      %v1340 = vsel %vm1235, %v1337, %v1339
      %v1341 = vrot.slane %v1144, 1
      %v1342 = vsel %vm1235, %v1339, %v1341
      %v1343 = vrot.slane %v1145, 1
      %v1344 = vsel %vm1235, %v1341, %v1343
      %v1345 = vrot.slane %v1146, 1
      %v1346 = vsel %vm1235, %v1343, %v1345
      %v1347 = vrot.slane %v1147, 1
      %v1348 = vsel %vm1235, %v1345, %v1347
      %v1349 = vrot.slane %v1148, 1
      %v1350 = vsel %vm1235, %v1347, %v1349
      %v1351 = vrot.slane %v1149, 1
      %v1352 = vsel %vm1235, %v1349, %v1351
      %v1353 = vrot.slane %v1150, 1
      %v1354 = vsel %vm1235, %v1351, %v1353
      %v1355 = vrot.slane %v1151, 1
      %v1356 = vsel %vm1235, %v1353, %v1355
      %v1357 = vrot.slane %v1152, 1
      %v1358 = vsel %vm1235, %v1355, %v1357
      %v1359 = vrot.slane %v1153, 1
      %v1360 = vsel %vm1235, %v1357, %v1359
      %v1361 = vrot.slane %v1154, 1
      %v1362 = vsel %vm1235, %v1359, %v1361
      %v1363 = vrot.slane %v1155, 1
      %v1364 = vsel %vm1235, %v1361, %v1363
      %v1365 = vrot.slane %v1156, 1
      %v1366 = vsel %vm1235, %v1363, %v1365
      %v1367 = vrot.slane %v1157, 1
      %v1368 = vsel %vm1235, %v1365, %v1367
      %v1369 = vrot.slane %v1158, 1
      %v1370 = vsel %vm1235, %v1367, %v1369
      %v1371 = vrot.slane %v1159, 1
      %v1372 = vsel %vm1235, %v1369, %v1371
      %v1373 = vrot.slane %v1160, 1
      %v1374 = vsel %vm1235, %v1371, %v1373
      %v1375 = vrot.slane %v1161, 1
      %v1376 = vsel %vm1235, %v1373, %v1375
      %v1377 = vrot.slane %v1162, 1
      %v1378 = vsel %vm1235, %v1375, %v1377
      %v1451 = vmax.f32 %v1091, %v1238
      %v1452 = vmax.f32 %v1092, %v1240
      %v1453 = vmax.f32 %v1093, %v1242
      %v1454 = vmax.f32 %v1094, %v1244
      %v1455 = vmax.f32 %v1095, %v1246
      %v1456 = vmax.f32 %v1096, %v1248
      %v1457 = vmax.f32 %v1097, %v1250
      %v1458 = vmax.f32 %v1098, %v1252
      %v1459 = vmax.f32 %v1099, %v1254
      %v1460 = vmax.f32 %v1100, %v1256
      %v1461 = vmax.f32 %v1101, %v1258
      %v1462 = vmax.f32 %v1102, %v1260
      %v1463 = vmax.f32 %v1103, %v1262
      %v1464 = vmax.f32 %v1104, %v1264
      %v1465 = vmax.f32 %v1105, %v1266
      %v1466 = vmax.f32 %v1106, %v1268
      %v1467 = vmax.f32 %v1107, %v1270
      %v1468 = vmax.f32 %v1108, %v1272
      %v1469 = vmax.f32 %v1109, %v1274
      %v1470 = vmax.f32 %v1110, %v1276
      %v1471 = vmax.f32 %v1111, %v1278
      %v1472 = vmax.f32 %v1112, %v1280
      %v1473 = vmax.f32 %v1113, %v1282
      %v1474 = vmax.f32 %v1114, %v1284
      %v1475 = vmax.f32 %v1115, %v1286
      %v1476 = vmax.f32 %v1116, %v1288
      %v1477 = vmax.f32 %v1117, %v1290
      %v1478 = vmax.f32 %v1118, %v1292
      %v1479 = vmax.f32 %v1119, %v1294
      %v1480 = vmax.f32 %v1120, %v1296
      %v1481 = vmax.f32 %v1121, %v1298
      %v1482 = vmax.f32 %v1122, %v1300
      %v1483 = vmax.f32 %v1123, %v1302
      %v1484 = vmax.f32 %v1124, %v1304
      %v1485 = vmax.f32 %v1125, %v1306
      %v1486 = vmax.f32 %v1126, %v1308
      %v1487 = vmax.f32 %v1127, %v1310
      %v1488 = vmax.f32 %v1128, %v1312
      %v1489 = vmax.f32 %v1129, %v1314
      %v1490 = vmax.f32 %v1130, %v1316
      %v1491 = vmax.f32 %v1131, %v1318
      %v1492 = vmax.f32 %v1132, %v1320
      %v1493 = vmax.f32 %v1133, %v1322
      %v1494 = vmax.f32 %v1134, %v1324
      %v1495 = vmax.f32 %v1135, %v1326
      %v1496 = vmax.f32 %v1136, %v1328
      %v1497 = vmax.f32 %v1137, %v1330
      %v1498 = vmax.f32 %v1138, %v1332
      %v1499 = vmax.f32 %v1139, %v1334
      %v1500 = vmax.f32 %v1140, %v1336
      %v1501 = vmax.f32 %v1141, %v1338
      %v1502 = vmax.f32 %v1142, %v1340
      %v1503 = vmax.f32 %v1143, %v1342
      %v1504 = vmax.f32 %v1144, %v1344
      %v1505 = vmax.f32 %v1145, %v1346
      %v1506 = vmax.f32 %v1146, %v1348
      %v1507 = vmax.f32 %v1147, %v1350
      %v1508 = vmax.f32 %v1148, %v1352
      %v1509 = vmax.f32 %v1149, %v1354
      %v1510 = vmax.f32 %v1150, %v1356
      %v1511 = vmax.f32 %v1151, %v1358
      %v1512 = vmax.f32 %v1152, %v1360
      %v1513 = vmax.f32 %v1153, %v1362
      %v1514 = vmax.f32 %v1154, %v1364
      %v1515 = vmax.f32 %v1155, %v1366
      %v1516 = vmax.f32 %v1156, %v1368
      %v1517 = vmax.f32 %v1157, %v1370
      %v1518 = vmax.f32 %v1158, %v1372
      %v1519 = vmax.f32 %v1159, %v1374
      %v1520 = vmax.f32 %v1160, %v1376
      %v1521 = vmax.f32 %v1161, %v1378
      %v1522 = vmax.f32 %v1162, %v1377
      %v1523 = vmax.f32 %v1451, %v1454
      %v1524 = vmax.f32 %v1452, %v1455
      %v1525 = vmax.f32 %v1453, %v1456
      %v1526 = vmax.f32 %v1454, %v1457
      %v1527 = vmax.f32 %v1455, %v1458
      %v1528 = vmax.f32 %v1456, %v1459
      %v1529 = vmax.f32 %v1457, %v1460
      %v1530 = vmax.f32 %v1458, %v1461
      %v1531 = vmax.f32 %v1459, %v1462
      %v1532 = vmax.f32 %v1460, %v1463
      %v1533 = vmax.f32 %v1461, %v1464
      %v1534 = vmax.f32 %v1462, %v1465
      %v1535 = vmax.f32 %v1463, %v1466
      %v1536 = vmax.f32 %v1464, %v1467
      %v1537 = vmax.f32 %v1465, %v1468
      %v1538 = vmax.f32 %v1466, %v1469
      %v1539 = vmax.f32 %v1467, %v1470
      %v1540 = vmax.f32 %v1468, %v1471
      %v1541 = vmax.f32 %v1469, %v1472
      %v1542 = vmax.f32 %v1470, %v1473
      %v1543 = vmax.f32 %v1471, %v1474
      %v1544 = vmax.f32 %v1472, %v1475
      %v1545 = vmax.f32 %v1473, %v1476
      %v1546 = vmax.f32 %v1474, %v1477
      %v1547 = vmax.f32 %v1475, %v1478
      %v1548 = vmax.f32 %v1476, %v1479
      %v1549 = vmax.f32 %v1477, %v1480
      %v1550 = vmax.f32 %v1478, %v1481
      %v1551 = vmax.f32 %v1479, %v1482
      %v1552 = vmax.f32 %v1480, %v1483
      %v1553 = vmax.f32 %v1481, %v1484
      %v1554 = vmax.f32 %v1482, %v1485
      %v1555 = vmax.f32 %v1483, %v1486
      %v1556 = vmax.f32 %v1484, %v1487
      %v1557 = vmax.f32 %v1485, %v1488
      %v1558 = vmax.f32 %v1486, %v1489
      %v1559 = vmax.f32 %v1487, %v1490
      %v1560 = vmax.f32 %v1488, %v1491
      %v1561 = vmax.f32 %v1489, %v1492
      %v1562 = vmax.f32 %v1490, %v1493
      %v1563 = vmax.f32 %v1491, %v1494
      %v1564 = vmax.f32 %v1492, %v1495
      %v1565 = vmax.f32 %v1493, %v1496
      %v1566 = vmax.f32 %v1494, %v1497
      %v1567 = vmax.f32 %v1495, %v1498
      %v1568 = vmax.f32 %v1496, %v1499
      %v1569 = vmax.f32 %v1497, %v1500
      %v1570 = vmax.f32 %v1498, %v1501
      %v1571 = vmax.f32 %v1499, %v1502
      %v1572 = vmax.f32 %v1500, %v1503
      %v1573 = vmax.f32 %v1501, %v1504
      %v1574 = vmax.f32 %v1502, %v1505
      %v1575 = vmax.f32 %v1503, %v1506
      %v1576 = vmax.f32 %v1504, %v1507
      %v1577 = vmax.f32 %v1505, %v1508
      %v1578 = vmax.f32 %v1506, %v1509
      %v1579 = vmax.f32 %v1507, %v1510
      %v1580 = vmax.f32 %v1508, %v1511
      %v1581 = vmax.f32 %v1509, %v1512
      %v1582 = vmax.f32 %v1510, %v1513
      %v1583 = vmax.f32 %v1511, %v1514
      %v1584 = vmax.f32 %v1512, %v1515
      %v1585 = vmax.f32 %v1513, %v1516
      %v1586 = vmax.f32 %v1514, %v1517
      %v1587 = vmax.f32 %v1515, %v1518
      %v1588 = vmax.f32 %v1516, %v1519
      %v1589 = vmax.f32 %v1517, %v1520
      %v1590 = vmax.f32 %v1518, %v1521
      %v1591 = vmax.f32 %v1519, %v1522
      %v1592 = vld [vmem:[%s3] sm:$0xff]
      %v1593 = vld [vmem:[%s3 + $0x8] sm:$0xff]
      %v1594 = vld [vmem:[%s3 + $0x10] sm:$0xf]
      %v1595 = vld [vmem:[%s3 + $0x14] sm:$0xff]
      %v1596 = vld [vmem:[%s3 + $0x1c] sm:$0xff]
      %v1597 = vld [vmem:[%s3 + $0x24] sm:$0xf]
      %v1598 = vld [vmem:[%s3 + $0x28] sm:$0xff]
      %v1599 = vld [vmem:[%s3 + $0x30] sm:$0xff]
      %v1600 = vld [vmem:[%s3 + $0x38] sm:$0xf]
      %v1601 = vld [vmem:[%s3 + $0x3c] sm:$0xff]
      %v1602 = vld [vmem:[%s3 + $0x44] sm:$0xff]
      %v1603 = vld [vmem:[%s3 + $0x4c] sm:$0xf]
      %v1604 = vld [vmem:[%s3 + $0x50] sm:$0xff]
      %v1605 = vld [vmem:[%s3 + $0x58] sm:$0xff]
      %v1606 = vld [vmem:[%s3 + $0x60] sm:$0xf]
      %v1607 = vld [vmem:[%s3 + $0x64] sm:$0xff]
      %v1608 = vld [vmem:[%s3 + $0x6c] sm:$0xff]
      %v1609 = vld [vmem:[%s3 + $0x74] sm:$0xf]
      %v1610 = vld [vmem:[%s3 + $0x78] sm:$0xff]
      %v1611 = vld [vmem:[%s3 + $0x80] sm:$0xff]
      %v1612 = vld [vmem:[%s3 + $0x88] sm:$0xf]
      %v1613 = vld [vmem:[%s3 + $0x8c] sm:$0xff]
      %v1614 = vld [vmem:[%s3 + $0x94] sm:$0xff]
      %v1615 = vld [vmem:[%s3 + $0x9c] sm:$0xf]
      %v1616 = vld [vmem:[%s3 + $0xa0] sm:$0xff]
      %v1617 = vld [vmem:[%s3 + $0xa8] sm:$0xff]
      %v1618 = vld [vmem:[%s3 + $0xb0] sm:$0xf]
      %v1619 = vld [vmem:[%s3 + $0xb4] sm:$0xff]
      %v1620 = vld [vmem:[%s3 + $0xbc] sm:$0xff]
      %v1621 = vld [vmem:[%s3 + $0xc4] sm:$0xf]
      %v1622 = vld [vmem:[%s3 + $0xc8] sm:$0xff]
      %v1623 = vld [vmem:[%s3 + $0xd0] sm:$0xff]
      %v1624 = vld [vmem:[%s3 + $0xd8] sm:$0xf]
      %v1625 = vld [vmem:[%s3 + $0xdc] sm:$0xff]
      %v1626 = vld [vmem:[%s3 + $0xe4] sm:$0xff]
      %v1627 = vld [vmem:[%s3 + $0xec] sm:$0xf]
      %v1628 = vld [vmem:[%s3 + $0xf0] sm:$0xff]
      %v1629 = vld [vmem:[%s3 + $0xf8] sm:$0xff]
      %v1630 = vld [vmem:[%s3 + $0x100] sm:$0xf]
      %v1631 = vld [vmem:[%s3 + $0x104] sm:$0xff]
      %v1632 = vld [vmem:[%s3 + $0x10c] sm:$0xff]
      %v1633 = vld [vmem:[%s3 + $0x114] sm:$0xf]
      %v1634 = vld [vmem:[%s3 + $0x118] sm:$0xff]
      %v1635 = vld [vmem:[%s3 + $0x120] sm:$0xff]
      %v1636 = vld [vmem:[%s3 + $0x128] sm:$0xf]
      %v1637 = vld [vmem:[%s3 + $0x12c] sm:$0xff]
      %v1638 = vld [vmem:[%s3 + $0x134] sm:$0xff]
      %v1639 = vld [vmem:[%s3 + $0x13c] sm:$0xf]
      %v1640 = vld [vmem:[%s3 + $0x140] sm:$0xff]
      %v1641 = vld [vmem:[%s3 + $0x148] sm:$0xff]
      %v1642 = vld [vmem:[%s3 + $0x150] sm:$0xf]
      %v1643 = vld [vmem:[%s3 + $0x154] sm:$0xff]
      %v1644 = vld [vmem:[%s3 + $0x15c] sm:$0xff]
      %v1645 = vld [vmem:[%s3 + $0x164] sm:$0xf]
      %v1646 = vpack.c.bf16 %v1524, %v1523
      %v1647 = vpack.c.bf16 %v1526, %v1525
      %v1648 = vpack.c.bf16 %v1528, %v1527
      %v1649 = vpack.c.bf16 %v1530, %v1529
      %v1650 = vpack.c.bf16 %v1532, %v1531
      %v1651 = vpack.c.bf16 %v1534, %v1533
      %v1652 = vpack.c.bf16 %v1536, %v1535
      %v1653 = vpack.c.bf16 %v1538, %v1537
      %v1654 = vpack.c.bf16 %v1540, %v1539
      %v1655 = vpack.c.bf16 %v1542, %v1541
      %v1656 = vpack.c.bf16 %v1544, %v1543
      %v1657 = vpack.c.bf16 %v1546, %v1545
      %v1658 = vpack.c.bf16 %v1548, %v1547
      %v1659 = vpack.c.bf16 %v1550, %v1549
      %v1660 = vpack.c.bf16 %v1552, %v1551
      %v1661 = vpack.c.bf16 %v1554, %v1553
      %v1662 = vpack.c.bf16 %v1556, %v1555
      %v1663 = vpack.c.bf16 %v1558, %v1557
      %v1664 = vpack.c.bf16 %v1560, %v1559
      %v1665 = vpack.c.bf16 %v1562, %v1561
      %v1666 = vpack.c.bf16 %v1564, %v1563
      %v1667 = vpack.c.bf16 %v1566, %v1565
      %v1668 = vpack.c.bf16 %v1568, %v1567
      %v1669 = vpack.c.bf16 %v1570, %v1569
      %v1670 = vpack.c.bf16 %v1572, %v1571
      %v1671 = vpack.c.bf16 %v1574, %v1573
      %v1672 = vpack.c.bf16 %v1576, %v1575
      %v1673 = vpack.c.bf16 %v1578, %v1577
      %v1674 = vpack.c.bf16 %v1580, %v1579
      %v1675 = vpack.c.bf16 %v1582, %v1581
      %v1676 = vpack.c.bf16 %v1584, %v1583
      %v1677 = vpack.c.bf16 %v1586, %v1585
      %v1678 = vpack.c.bf16 %v1588, %v1587
      %v1679 = vpack.c.bf16 %v1590, %v1589
      %v1680 = vpack.c.bf16 %v1591, %v1591
      %v1735 = vunpack.c.l.b16 %v1592
      %v1736 = vunpack.c.h.b16 %v1592
      %v1737 = vunpack.c.l.b16 %v1593
      %v1738 = vunpack.c.h.b16 %v1593
      %v1739 = vunpack.c.l.b16 %v1594
      %v1740 = vunpack.c.l.b16 %v1595
      %v1741 = vunpack.c.h.b16 %v1595
      %v1742 = vunpack.c.l.b16 %v1596
      %v1743 = vunpack.c.h.b16 %v1596
      %v1744 = vunpack.c.l.b16 %v1597
      %v1745 = vunpack.c.l.b16 %v1598
      %v1746 = vunpack.c.h.b16 %v1598
      %v1747 = vunpack.c.l.b16 %v1599
      %v1748 = vunpack.c.h.b16 %v1599
      %v1749 = vunpack.c.l.b16 %v1600
      %v1750 = vunpack.c.l.b16 %v1601
      %v1751 = vunpack.c.h.b16 %v1601
      %v1752 = vunpack.c.l.b16 %v1602
      %v1753 = vunpack.c.h.b16 %v1602
      %v1754 = vunpack.c.l.b16 %v1603
      %v1755 = vunpack.c.l.b16 %v1604
      %v1756 = vunpack.c.h.b16 %v1604
      %v1757 = vunpack.c.l.b16 %v1605
      %v1758 = vunpack.c.h.b16 %v1605
      %v1759 = vunpack.c.l.b16 %v1606
      %v1760 = vunpack.c.l.b16 %v1607
      %v1761 = vunpack.c.h.b16 %v1607
      %v1762 = vunpack.c.l.b16 %v1608
      %v1763 = vunpack.c.h.b16 %v1608
      %v1764 = vunpack.c.l.b16 %v1609
      %v1765 = vunpack.c.l.b16 %v1610
      %v1766 = vunpack.c.h.b16 %v1610
      %v1767 = vunpack.c.l.b16 %v1611
      %v1768 = vunpack.c.h.b16 %v1611
      %v1769 = vunpack.c.l.b16 %v1612
      %v1770 = vunpack.c.l.b16 %v1613
      %v1771 = vunpack.c.h.b16 %v1613
      %v1772 = vunpack.c.l.b16 %v1614
      %v1773 = vunpack.c.h.b16 %v1614
      %v1774 = vunpack.c.l.b16 %v1615
      %v1775 = vunpack.c.l.b16 %v1616
      %v1776 = vunpack.c.h.b16 %v1616
      %v1777 = vunpack.c.l.b16 %v1617
      %v1778 = vunpack.c.h.b16 %v1617
      %v1779 = vunpack.c.l.b16 %v1618
      %v1780 = vunpack.c.l.b16 %v1619
      %v1781 = vunpack.c.h.b16 %v1619
      %v1782 = vunpack.c.l.b16 %v1620
      %v1783 = vunpack.c.h.b16 %v1620
      %v1784 = vunpack.c.l.b16 %v1621
      %v1785 = vunpack.c.l.b16 %v1622
      %v1786 = vunpack.c.h.b16 %v1622
      %v1787 = vunpack.c.l.b16 %v1623
      %v1788 = vunpack.c.h.b16 %v1623
      %v1789 = vunpack.c.l.b16 %v1624
      %v1790 = vunpack.c.l.b16 %v1625
      %v1791 = vunpack.c.h.b16 %v1625
      %v1792 = vunpack.c.l.b16 %v1626
      %v1793 = vunpack.c.h.b16 %v1626
      %v1794 = vunpack.c.l.b16 %v1627
      %v1795 = vunpack.c.l.b16 %v1628
      %v1796 = vunpack.c.h.b16 %v1628
      %v1797 = vunpack.c.l.b16 %v1629
      %v1798 = vunpack.c.h.b16 %v1629
      %v1799 = vunpack.c.l.b16 %v1630
      %v1800 = vunpack.c.l.b16 %v1631
      %v1801 = vunpack.c.h.b16 %v1631
      %v1802 = vunpack.c.l.b16 %v1632
      %v1803 = vunpack.c.h.b16 %v1632
      %v1804 = vunpack.c.l.b16 %v1633
      %v1805 = vunpack.c.l.b16 %v1634
      %v1806 = vunpack.c.h.b16 %v1634
      %v1807 = vunpack.c.l.b16 %v1635
      %v1808 = vunpack.c.h.b16 %v1635
      %v1809 = vunpack.c.l.b16 %v1636
      %v1810 = vunpack.c.l.b16 %v1637
      %v1811 = vunpack.c.h.b16 %v1637
      %v1812 = vunpack.c.l.b16 %v1638
      %v1813 = vunpack.c.h.b16 %v1638
      %v1814 = vunpack.c.l.b16 %v1639
      %v1815 = vunpack.c.l.b16 %v1640
      %v1816 = vunpack.c.h.b16 %v1640
      %v1817 = vunpack.c.l.b16 %v1641
      %v1818 = vunpack.c.h.b16 %v1641
      %v1819 = vunpack.c.l.b16 %v1642
      %v1820 = vunpack.c.l.b16 %v1643
      %v1821 = vunpack.c.h.b16 %v1643
      %v1822 = vunpack.c.l.b16 %v1644
      %v1823 = vunpack.c.h.b16 %v1644
      %v1824 = vunpack.c.l.b16 %v1645
      %v1825 = vpack.c.b16 %v1740, %v1735
      %v1826 = vpack.c.b16 %v1741, %v1736
      %v1827 = vpack.c.b16 %v1742, %v1737
      %v1828 = vpack.c.b16 %v1743, %v1738
      %v1829 = vpack.c.b16 %v1744, %v1739
      %v1830 = vpack.c.b16 %v1750, %v1745
      %v1831 = vpack.c.b16 %v1751, %v1746
      %v1832 = vpack.c.b16 %v1752, %v1747
      %v1833 = vpack.c.b16 %v1753, %v1748
      %v1834 = vpack.c.b16 %v1754, %v1749
      %v1835 = vpack.c.b16 %v1760, %v1755
      %v1836 = vpack.c.b16 %v1761, %v1756
      %v1837 = vpack.c.b16 %v1762, %v1757
      %v1838 = vpack.c.b16 %v1763, %v1758
      %v1839 = vpack.c.b16 %v1764, %v1759
      %v1840 = vpack.c.b16 %v1770, %v1765
      %v1841 = vpack.c.b16 %v1771, %v1766
      %v1842 = vpack.c.b16 %v1772, %v1767
      %v1843 = vpack.c.b16 %v1773, %v1768
      %v1844 = vpack.c.b16 %v1774, %v1769
      %v1845 = vpack.c.b16 %v1780, %v1775
      %v1846 = vpack.c.b16 %v1781, %v1776
      %v1847 = vpack.c.b16 %v1782, %v1777
      %v1848 = vpack.c.b16 %v1783, %v1778
      %v1849 = vpack.c.b16 %v1784, %v1779
      %v1850 = vpack.c.b16 %v1790, %v1785
      %v1851 = vpack.c.b16 %v1791, %v1786
      %v1852 = vpack.c.b16 %v1792, %v1787
      %v1853 = vpack.c.b16 %v1793, %v1788
      %v1854 = vpack.c.b16 %v1794, %v1789
      %v1855 = vpack.c.b16 %v1800, %v1795
      %v1856 = vpack.c.b16 %v1801, %v1796
      %v1857 = vpack.c.b16 %v1802, %v1797
      %v1858 = vpack.c.b16 %v1803, %v1798
      %v1859 = vpack.c.b16 %v1804, %v1799
      %v1860 = vpack.c.b16 %v1810, %v1805
      %v1861 = vpack.c.b16 %v1811, %v1806
      %v1862 = vpack.c.b16 %v1812, %v1807
      %v1863 = vpack.c.b16 %v1813, %v1808
      %v1864 = vpack.c.b16 %v1814, %v1809
      %v1865 = vpack.c.b16 %v1820, %v1815
      %v1866 = vpack.c.b16 %v1821, %v1816
      %v1867 = vpack.c.b16 %v1822, %v1817
      %v1868 = vpack.c.b16 %v1823, %v1818
      %v1869 = vpack.c.b16 %v1824, %v1819
      %vm1906 = vcmask 318464
      %v1908 = vsel %vm1906, %v1829, 0
      %v1911 = vsel %vm1906, %v1834, 0
      %v1914 = vsel %vm1906, %v1839, 0
      %v1917 = vsel %vm1906, %v1844, 0
      %v1920 = vsel %vm1906, %v1849, 0
      %v1923 = vsel %vm1906, %v1854, 0
      %v1926 = vsel %vm1906, %v1859, 0
      %v1929 = vsel %vm1906, %v1864, 0
      %v1932 = vsel %vm1906, %v1869, 0
      %vm1934 = vcmask 1042432
      %vm1935 = vcmask 1043456
      %v1936 = vsel %vm1934, 4294967295, 65535
      %v1937 = vsel %vm1935, %v1936, 0
      %v1939 = vand.u32 %v1680, %v1937
      %1941 = vmatpush.bf16.msra.mxu0 %v1653
      %1942 = vmatpush.bf16.msra.mxu0 %v1652
      %1943 = vmatpush.bf16.msra.mxu0 %v1651
      %1944 = vmatpush.bf16.msra.mxu0 %v1650
      %1945 = vmatpush.bf16.msra.mxu0 %v1649
      %1946 = vmatpush.bf16.msra.mxu0 %v1648
      %1947 = vmatpush.bf16.msra.mxu0 %v1647
      %1948 = vmatpush.bf16.msra.mxu0 %v1646
      %1949 = vmatmul.bf16.gmra.mxu0 %v1825
      %v1950 = vpop.f32.mrf.mxu0
      %v1951 = vadd.f32 0.0, %v1950
      %v1952 = vpop.f32.mrf.mxu0
      %v1953 = vadd.f32 0.0, %v1952
      %1954 = vmatmul.bf16.gmra.mxu0 %v1830
      %v1955 = vpop.f32.mrf.mxu0
      %v1956 = vadd.f32 0.0, %v1955
      %v1957 = vpop.f32.mrf.mxu0
      %v1958 = vadd.f32 0.0, %v1957
      %1959 = vmatmul.bf16.gmra.mxu0 %v1835
      %v1960 = vpop.f32.mrf.mxu0
      %v1961 = vadd.f32 0.0, %v1960
      %v1962 = vpop.f32.mrf.mxu0
      %v1963 = vadd.f32 0.0, %v1962
      %1964 = vmatmul.bf16.gmra.mxu0 %v1840
      %v1965 = vpop.f32.mrf.mxu0
      %v1966 = vadd.f32 0.0, %v1965
      %v1967 = vpop.f32.mrf.mxu0
      %v1968 = vadd.f32 0.0, %v1967
      %1969 = vmatmul.bf16.gmra.mxu0 %v1845
      %v1970 = vpop.f32.mrf.mxu0
      %v1971 = vadd.f32 0.0, %v1970
      %v1972 = vpop.f32.mrf.mxu0
      %v1973 = vadd.f32 0.0, %v1972
      %1974 = vmatmul.bf16.gmra.mxu0 %v1850
      %v1975 = vpop.f32.mrf.mxu0
      %v1976 = vadd.f32 0.0, %v1975
      %v1977 = vpop.f32.mrf.mxu0
      %v1978 = vadd.f32 0.0, %v1977
      %1979 = vmatmul.bf16.gmra.mxu0 %v1855
      %v1980 = vpop.f32.mrf.mxu0
      %v1981 = vadd.f32 0.0, %v1980
      %v1982 = vpop.f32.mrf.mxu0
      %v1983 = vadd.f32 0.0, %v1982
      %1984 = vmatmul.bf16.gmra.mxu0 %v1860
      %v1985 = vpop.f32.mrf.mxu0
      %v1986 = vadd.f32 0.0, %v1985
      %v1987 = vpop.f32.mrf.mxu0
      %v1988 = vadd.f32 0.0, %v1987
      %1989 = vmatmul.bf16.gmra.mxu0 %v1865
      %v1990 = vpop.f32.mrf.mxu0
      %v1991 = vadd.f32 0.0, %v1990
      %v1992 = vpop.f32.mrf.mxu0
      %v1993 = vadd.f32 0.0, %v1992
      %1994 = vdwg.mxu0
      %1995 = vmatpush.bf16.msra.mxu0 %v1661
      %1996 = vmatpush.bf16.msra.mxu0 %v1660
      %1997 = vmatpush.bf16.msra.mxu0 %v1659
      %1998 = vmatpush.bf16.msra.mxu0 %v1658
      %1999 = vmatpush.bf16.msra.mxu0 %v1657
      %2000 = vmatpush.bf16.msra.mxu0 %v1656
      %2001 = vmatpush.bf16.msra.mxu0 %v1655
      %2002 = vmatpush.bf16.msra.mxu0 %v1654
      %2003 = vmatmul.bf16.gmra.mxu0 %v1826
      %v2004 = vpop.f32.mrf.mxu0
      %v2005 = vadd.f32 %v1951, %v2004
      %v2006 = vpop.f32.mrf.mxu0
      %v2007 = vadd.f32 %v1953, %v2006
      %2008 = vmatmul.bf16.gmra.mxu0 %v1831
      %v2009 = vpop.f32.mrf.mxu0
      %v2010 = vadd.f32 %v1956, %v2009
      %v2011 = vpop.f32.mrf.mxu0
      %v2012 = vadd.f32 %v1958, %v2011
      %2013 = vmatmul.bf16.gmra.mxu0 %v1836
      %v2014 = vpop.f32.mrf.mxu0
      %v2015 = vadd.f32 %v1961, %v2014
      %v2016 = vpop.f32.mrf.mxu0
      %v2017 = vadd.f32 %v1963, %v2016
      %2018 = vmatmul.bf16.gmra.mxu0 %v1841
      %v2019 = vpop.f32.mrf.mxu0
      %v2020 = vadd.f32 %v1966, %v2019
      %v2021 = vpop.f32.mrf.mxu0
      %v2022 = vadd.f32 %v1968, %v2021
      %2023 = vmatmul.bf16.gmra.mxu0 %v1846
      %v2024 = vpop.f32.mrf.mxu0
      %v2025 = vadd.f32 %v1971, %v2024
      %v2026 = vpop.f32.mrf.mxu0
      %v2027 = vadd.f32 %v1973, %v2026
      %2028 = vmatmul.bf16.gmra.mxu0 %v1851
      %v2029 = vpop.f32.mrf.mxu0
      %v2030 = vadd.f32 %v1976, %v2029
      %v2031 = vpop.f32.mrf.mxu0
      %v2032 = vadd.f32 %v1978, %v2031
      %2033 = vmatmul.bf16.gmra.mxu0 %v1856
      %v2034 = vpop.f32.mrf.mxu0
      %v2035 = vadd.f32 %v1981, %v2034
      %v2036 = vpop.f32.mrf.mxu0
      %v2037 = vadd.f32 %v1983, %v2036
      %2038 = vmatmul.bf16.gmra.mxu0 %v1861
      %v2039 = vpop.f32.mrf.mxu0
      %v2040 = vadd.f32 %v1986, %v2039
      %v2041 = vpop.f32.mrf.mxu0
      %v2042 = vadd.f32 %v1988, %v2041
      %2043 = vmatmul.bf16.gmra.mxu0 %v1866
      %v2044 = vpop.f32.mrf.mxu0
      %v2045 = vadd.f32 %v1991, %v2044
      %v2046 = vpop.f32.mrf.mxu0
      %v2047 = vadd.f32 %v1993, %v2046
      %2048 = vdwg.mxu0
      %2049 = vmatpush.bf16.msra.mxu0 %v1669
      %2050 = vmatpush.bf16.msra.mxu0 %v1668
      %2051 = vmatpush.bf16.msra.mxu0 %v1667
      %2052 = vmatpush.bf16.msra.mxu0 %v1666
      %2053 = vmatpush.bf16.msra.mxu0 %v1665
      %2054 = vmatpush.bf16.msra.mxu0 %v1664
      %2055 = vmatpush.bf16.msra.mxu0 %v1663
      %2056 = vmatpush.bf16.msra.mxu0 %v1662
      %2057 = vmatmul.bf16.gmra.mxu0 %v1827
      %v2058 = vpop.f32.mrf.mxu0
      %v2059 = vadd.f32 %v2005, %v2058
      %v2060 = vpop.f32.mrf.mxu0
      %v2061 = vadd.f32 %v2007, %v2060
      %2062 = vmatmul.bf16.gmra.mxu0 %v1832
      %v2063 = vpop.f32.mrf.mxu0
      %v2064 = vadd.f32 %v2010, %v2063
      %v2065 = vpop.f32.mrf.mxu0
      %v2066 = vadd.f32 %v2012, %v2065
      %2067 = vmatmul.bf16.gmra.mxu0 %v1837
      %v2068 = vpop.f32.mrf.mxu0
      %v2069 = vadd.f32 %v2015, %v2068
      %v2070 = vpop.f32.mrf.mxu0
      %v2071 = vadd.f32 %v2017, %v2070
      %2072 = vmatmul.bf16.gmra.mxu0 %v1842
      %v2073 = vpop.f32.mrf.mxu0
      %v2074 = vadd.f32 %v2020, %v2073
      %v2075 = vpop.f32.mrf.mxu0
      %v2076 = vadd.f32 %v2022, %v2075
      %2077 = vmatmul.bf16.gmra.mxu0 %v1847
      %v2078 = vpop.f32.mrf.mxu0
      %v2079 = vadd.f32 %v2025, %v2078
      %v2080 = vpop.f32.mrf.mxu0
      %v2081 = vadd.f32 %v2027, %v2080
      %2082 = vmatmul.bf16.gmra.mxu0 %v1852
      %v2083 = vpop.f32.mrf.mxu0
      %v2084 = vadd.f32 %v2030, %v2083
      %v2085 = vpop.f32.mrf.mxu0
      %v2086 = vadd.f32 %v2032, %v2085
      %2087 = vmatmul.bf16.gmra.mxu0 %v1857
      %v2088 = vpop.f32.mrf.mxu0
      %v2089 = vadd.f32 %v2035, %v2088
      %v2090 = vpop.f32.mrf.mxu0
      %v2091 = vadd.f32 %v2037, %v2090
      %2092 = vmatmul.bf16.gmra.mxu0 %v1862
      %v2093 = vpop.f32.mrf.mxu0
      %v2094 = vadd.f32 %v2040, %v2093
      %v2095 = vpop.f32.mrf.mxu0
      %v2096 = vadd.f32 %v2042, %v2095
      %2097 = vmatmul.bf16.gmra.mxu0 %v1867
      %v2098 = vpop.f32.mrf.mxu0
      %v2099 = vadd.f32 %v2045, %v2098
      %v2100 = vpop.f32.mrf.mxu0
      %v2101 = vadd.f32 %v2047, %v2100
      %2102 = vdwg.mxu0
      %2103 = vmatpush.bf16.msra.mxu0 %v1677
      %2104 = vmatpush.bf16.msra.mxu0 %v1676
      %2105 = vmatpush.bf16.msra.mxu0 %v1675
      %2106 = vmatpush.bf16.msra.mxu0 %v1674
      %2107 = vmatpush.bf16.msra.mxu0 %v1673
      %2108 = vmatpush.bf16.msra.mxu0 %v1672
      %2109 = vmatpush.bf16.msra.mxu0 %v1671
      %2110 = vmatpush.bf16.msra.mxu0 %v1670
      %2111 = vmatmul.bf16.gmra.mxu0 %v1828
      %v2112 = vpop.f32.mrf.mxu0
      %v2113 = vadd.f32 %v2059, %v2112
      %v2114 = vpop.f32.mrf.mxu0
      %v2115 = vadd.f32 %v2061, %v2114
      %2116 = vmatmul.bf16.gmra.mxu0 %v1833
      %v2117 = vpop.f32.mrf.mxu0
      %v2118 = vadd.f32 %v2064, %v2117
      %v2119 = vpop.f32.mrf.mxu0
      %v2120 = vadd.f32 %v2066, %v2119
      %2121 = vmatmul.bf16.gmra.mxu0 %v1838
      %v2122 = vpop.f32.mrf.mxu0
      %v2123 = vadd.f32 %v2069, %v2122
      %v2124 = vpop.f32.mrf.mxu0
      %v2125 = vadd.f32 %v2071, %v2124
      %2126 = vmatmul.bf16.gmra.mxu0 %v1843
      %v2127 = vpop.f32.mrf.mxu0
      %v2128 = vadd.f32 %v2074, %v2127
      %v2129 = vpop.f32.mrf.mxu0
      %v2130 = vadd.f32 %v2076, %v2129
      %2131 = vmatmul.bf16.gmra.mxu0 %v1848
      %v2132 = vpop.f32.mrf.mxu0
      %v2133 = vadd.f32 %v2079, %v2132
      %v2134 = vpop.f32.mrf.mxu0
      %v2135 = vadd.f32 %v2081, %v2134
      %2136 = vmatmul.bf16.gmra.mxu0 %v1853
      %v2137 = vpop.f32.mrf.mxu0
      %v2138 = vadd.f32 %v2084, %v2137
      %v2139 = vpop.f32.mrf.mxu0
      %v2140 = vadd.f32 %v2086, %v2139
      %2141 = vmatmul.bf16.gmra.mxu0 %v1858
      %v2142 = vpop.f32.mrf.mxu0
      %v2143 = vadd.f32 %v2089, %v2142
      %v2144 = vpop.f32.mrf.mxu0
      %v2145 = vadd.f32 %v2091, %v2144
      %2146 = vmatmul.bf16.gmra.mxu0 %v1863
      %v2147 = vpop.f32.mrf.mxu0
      %v2148 = vadd.f32 %v2094, %v2147
      %v2149 = vpop.f32.mrf.mxu0
      %v2150 = vadd.f32 %v2096, %v2149
      %2151 = vmatmul.bf16.gmra.mxu0 %v1868
      %v2152 = vpop.f32.mrf.mxu0
      %v2153 = vadd.f32 %v2099, %v2152
      %v2154 = vpop.f32.mrf.mxu0
      %v2155 = vadd.f32 %v2101, %v2154
      %2156 = vdwg.mxu0
      %2157 = vmatpush.bf16.msra.mxu0 0
      %2158 = vmatpush.bf16.msra.mxu0 0
      %2159 = vmatpush.bf16.msra.mxu0 0
      %2160 = vmatpush.bf16.msra.mxu0 0
      %2161 = vmatpush.bf16.msra.mxu0 0
      %2162 = vmatpush.bf16.msra.mxu0 %v1939
      %2163 = vmatpush.bf16.msra.mxu0 %v1679
      %2164 = vmatpush.bf16.msra.mxu0 %v1678
      %2165 = vmatmul.bf16.gmra.mxu0 %v1908
      %v2166 = vpop.f32.mrf.mxu0
      %v2167 = vadd.f32 %v2113, %v2166
      %v2168 = vpop.f32.mrf.mxu0
      %v2169 = vadd.f32 %v2115, %v2168
      %2170 = vmatmul.bf16.gmra.mxu0 %v1911
      %v2171 = vpop.f32.mrf.mxu0
      %v2172 = vadd.f32 %v2118, %v2171
      %v2173 = vpop.f32.mrf.mxu0
      %v2174 = vadd.f32 %v2120, %v2173
      %2175 = vmatmul.bf16.gmra.mxu0 %v1914
      %v2176 = vpop.f32.mrf.mxu0
      %v2177 = vadd.f32 %v2123, %v2176
      %v2178 = vpop.f32.mrf.mxu0
      %v2179 = vadd.f32 %v2125, %v2178
      %2180 = vmatmul.bf16.gmra.mxu0 %v1917
      %v2181 = vpop.f32.mrf.mxu0
      %v2182 = vadd.f32 %v2128, %v2181
      %v2183 = vpop.f32.mrf.mxu0
      %v2184 = vadd.f32 %v2130, %v2183
      %2185 = vmatmul.bf16.gmra.mxu0 %v1920
      %v2186 = vpop.f32.mrf.mxu0
      %v2187 = vadd.f32 %v2133, %v2186
      %v2188 = vpop.f32.mrf.mxu0
      %v2189 = vadd.f32 %v2135, %v2188
      %2190 = vmatmul.bf16.gmra.mxu0 %v1923
      %v2191 = vpop.f32.mrf.mxu0
      %v2192 = vadd.f32 %v2138, %v2191
      %v2193 = vpop.f32.mrf.mxu0
      %v2194 = vadd.f32 %v2140, %v2193
      %2195 = vmatmul.bf16.gmra.mxu0 %v1926
      %v2196 = vpop.f32.mrf.mxu0
      %v2197 = vadd.f32 %v2143, %v2196
      %v2198 = vpop.f32.mrf.mxu0
      %v2199 = vadd.f32 %v2145, %v2198
      %2200 = vmatmul.bf16.gmra.mxu0 %v1929
      %v2201 = vpop.f32.mrf.mxu0
      %v2202 = vadd.f32 %v2148, %v2201
      %v2203 = vpop.f32.mrf.mxu0
      %v2204 = vadd.f32 %v2150, %v2203
      %2205 = vmatmul.bf16.gmra.mxu0 %v1932
      %v2206 = vpop.f32.mrf.mxu0
      %v2207 = vadd.f32 %v2153, %v2206
      %v2208 = vpop.f32.mrf.mxu0
      %v2209 = vadd.f32 %v2155, %v2208
      %2210 = vdwg.mxu0
      %v2211 = vpack.c.bf16 %v2167, %v2167
      %v2212 = vpack.c.bf16 %v2169, %v2169
      %v2213 = vpack.c.bf16 %v2172, %v2172
      %v2214 = vpack.c.bf16 %v2174, %v2174
      %v2215 = vpack.c.bf16 %v2177, %v2177
      %v2216 = vpack.c.bf16 %v2179, %v2179
      %v2217 = vpack.c.bf16 %v2182, %v2182
      %v2218 = vpack.c.bf16 %v2184, %v2184
      %v2219 = vpack.c.bf16 %v2187, %v2187
      %v2220 = vpack.c.bf16 %v2189, %v2189
      %v2221 = vpack.c.bf16 %v2192, %v2192
      %v2222 = vpack.c.bf16 %v2194, %v2194
      %v2223 = vpack.c.bf16 %v2197, %v2197
      %v2224 = vpack.c.bf16 %v2199, %v2199
      %v2225 = vpack.c.bf16 %v2202, %v2202
      %v2226 = vpack.c.bf16 %v2204, %v2204
      %v2227 = vpack.c.bf16 %v2207, %v2207
      %v2228 = vpack.c.bf16 %v2209, %v2209
      %v2229 = vld [vmem:[%s5] sm:$0x1]
      %v2230 = vld [vmem:[%s4] sm:$0xf]
      %v2231 = vld [vmem:[%s4 + $0x4] sm:$0xf]
      %v2232 = vld [vmem:[%s4 + $0x8] sm:$0xf]
      %v2233 = vld [vmem:[%s4 + $0xc] sm:$0xf]
      %s2234 = scalar_lea.vmem %s4, 16
      %v2235 = vld [vmem:[%s2234] sm:$0xf]
      %v2236 = vld [vmem:[%s2234 + $0x4] sm:$0xf]
      %v2237 = vld [vmem:[%s2234 + $0x8] sm:$0xf]
      %v2238 = vld [vmem:[%s2234 + $0xc] sm:$0xf]
      %v2251 = vunpack.c.l.b16 %v2211
      %v2252 = vunpack.c.l.b16 %v2212
      %v2253 = vunpack.c.l.b16 %v2213
      %v2254 = vunpack.c.l.b16 %v2214
      %v2255 = vunpack.c.l.b16 %v2215
      %v2256 = vunpack.c.l.b16 %v2216
      %v2257 = vunpack.c.l.b16 %v2217
      %v2258 = vunpack.c.l.b16 %v2218
      %v2259 = vunpack.c.l.b16 %v2219
      %v2260 = vunpack.c.l.b16 %v2220
      %v2261 = vunpack.c.l.b16 %v2221
      %v2262 = vunpack.c.l.b16 %v2222
      %v2263 = vpack.c.b16 %v2252, %v2251
      %v2264 = vpack.c.b16 %v2254, %v2253
      %v2265 = vpack.c.b16 %v2256, %v2255
      %v2266 = vpack.c.b16 %v2258, %v2257
      %v2267 = vpack.c.b16 %v2260, %v2259
      %v2268 = vpack.c.b16 %v2262, %v2261
      %vm2269 = vsmask.f32 7424
      %v2271 = vshrl.u32 %v2263, 16
      %v2273 = vshll.u32 %v2263, 16
      %v2275 = vrot.slane %v2273, 1
      %v2276 = vor.u32 %v2271, %v2275
      %v2278 = vshll.u32 %v2264, 16
      %v2280 = vrot.slane %v2278, 1
      %v2281 = vsel %vm2269, %v2276, %v2280
      %v2282 = vshrl.u32 %v2264, 16
      %v2284 = vor.u32 %v2282, %v2280
      %v2286 = vshll.u32 %v2265, 16
      %v2288 = vrot.slane %v2286, 1
      %v2289 = vsel %vm2269, %v2284, %v2288
      %v2290 = vshrl.u32 %v2265, 16
      %v2292 = vor.u32 %v2290, %v2288
      %v2294 = vshll.u32 %v2266, 16
      %v2296 = vrot.slane %v2294, 1
      %v2297 = vsel %vm2269, %v2292, %v2296
      %v2298 = vshrl.u32 %v2266, 16
      %v2300 = vor.u32 %v2298, %v2296
      %v2302 = vshll.u32 %v2267, 16
      %v2304 = vrot.slane %v2302, 1
      %v2305 = vsel %vm2269, %v2300, %v2304
      %v2306 = vshrl.u32 %v2267, 16
      %v2308 = vor.u32 %v2306, %v2304
      %v2310 = vshll.u32 %v2268, 16
      %v2312 = vrot.slane %v2310, 1
      %v2313 = vsel %vm2269, %v2308, %v2312
      %v2314 = vshrl.u32 %v2268, 16
      %v2316 = vor.u32 %v2314, %v2312
      %v2321 = vunpack.c.l.b16 %v2235
      %v2322 = vunpack.c.l.b16 %v2236
      %v2323 = vunpack.c.l.b16 %v2237
      %v2324 = vunpack.c.l.b16 %v2238
      %v2325 = vpack.c.b16 %v2322, %v2321
      %v2326 = vpack.c.b16 %v2324, %v2323
      %v2330 = vsel %vm793, %v2281, 0
      %v2333 = vsel %vm793, %v2289, 0
      %v2336 = vsel %vm793, %v2297, 0
      %v2339 = vsel %vm793, %v2305, 0
      %v2342 = vsel %vm793, %v2313, 0
      %v2345 = vsel %vm793, %v2316, 0
      %2347 = vmatpush.bf16.msra.mxu0 0
      %2348 = vmatpush.bf16.msra.mxu0 0
      %2349 = vmatpush.bf16.msra.mxu0 0
      %2350 = vmatpush.bf16.msra.mxu0 0
      %2351 = vmatpush.bf16.msra.mxu0 0
      %2352 = vmatpush.bf16.msra.mxu0 0
      %2353 = vmatpush.bf16.msra.mxu0 %v2326
      %2354 = vmatpush.bf16.msra.mxu0 %v2325
      %2355 = vmatmul.bf16.gmra.mxu0 %v2330
      %v2356 = vpop.f32.mrf.mxu0
      %v2357 = vadd.f32 0.0, %v2356
      %v2358 = vpop.f32.mrf.mxu0
      %v2359 = vadd.f32 0.0, %v2358
      %2360 = vmatmul.bf16.gmra.mxu0 %v2333
      %v2361 = vpop.f32.mrf.mxu0
      %v2362 = vadd.f32 0.0, %v2361
      %v2363 = vpop.f32.mrf.mxu0
      %v2364 = vadd.f32 0.0, %v2363
      %2365 = vmatmul.bf16.gmra.mxu0 %v2336
      %v2366 = vpop.f32.mrf.mxu0
      %v2367 = vadd.f32 0.0, %v2366
      %v2368 = vpop.f32.mrf.mxu0
      %v2369 = vadd.f32 0.0, %v2368
      %2370 = vmatmul.bf16.gmra.mxu0 %v2339
      %v2371 = vpop.f32.mrf.mxu0
      %v2372 = vadd.f32 0.0, %v2371
      %v2373 = vpop.f32.mrf.mxu0
      %v2374 = vadd.f32 0.0, %v2373
      %2375 = vmatmul.bf16.gmra.mxu0 %v2342
      %v2376 = vpop.f32.mrf.mxu0
      %v2377 = vadd.f32 0.0, %v2376
      %v2378 = vpop.f32.mrf.mxu0
      %v2379 = vadd.f32 0.0, %v2378
      %2380 = vmatmul.bf16.gmra.mxu0 %v2345
      %v2381 = vpop.f32.mrf.mxu0
      %v2382 = vadd.f32 0.0, %v2381
      %v2383 = vpop.f32.mrf.mxu0
      %v2384 = vadd.f32 0.0, %v2383
      %2385 = vdwg.mxu0
      %v2390 = vunpack.c.l.b16 %v2230
      %v2391 = vunpack.c.l.b16 %v2231
      %v2392 = vunpack.c.l.b16 %v2232
      %v2393 = vunpack.c.l.b16 %v2233
      %v2394 = vpack.c.b16 %v2391, %v2390
      %v2395 = vpack.c.b16 %v2393, %v2392
      %v2398 = vsel %vm793, %v2263, 0
      %v2400 = vsel %vm793, %v2264, 0
      %v2402 = vsel %vm793, %v2265, 0
      %v2404 = vsel %vm793, %v2266, 0
      %v2406 = vsel %vm793, %v2267, 0
      %v2408 = vsel %vm793, %v2268, 0
      %2410 = vmatpush.bf16.msra.mxu0 0
      %2411 = vmatpush.bf16.msra.mxu0 0
      %2412 = vmatpush.bf16.msra.mxu0 0
      %2413 = vmatpush.bf16.msra.mxu0 0
      %2414 = vmatpush.bf16.msra.mxu0 0
      %2415 = vmatpush.bf16.msra.mxu0 0
      %2416 = vmatpush.bf16.msra.mxu0 %v2395
      %2417 = vmatpush.bf16.msra.mxu0 %v2394
      %2418 = vmatmul.bf16.gmra.mxu0 %v2398
      %v2419 = vpop.f32.mrf.mxu0
      %v2420 = vadd.f32 %v2357, %v2419
      %v2421 = vpop.f32.mrf.mxu0
      %v2422 = vadd.f32 %v2359, %v2421
      %2423 = vmatmul.bf16.gmra.mxu0 %v2400
      %v2424 = vpop.f32.mrf.mxu0
      %v2425 = vadd.f32 %v2362, %v2424
      %v2426 = vpop.f32.mrf.mxu0
      %v2427 = vadd.f32 %v2364, %v2426
      %2428 = vmatmul.bf16.gmra.mxu0 %v2402
      %v2429 = vpop.f32.mrf.mxu0
      %v2430 = vadd.f32 %v2367, %v2429
      %v2431 = vpop.f32.mrf.mxu0
      %v2432 = vadd.f32 %v2369, %v2431
      %2433 = vmatmul.bf16.gmra.mxu0 %v2404
      %v2434 = vpop.f32.mrf.mxu0
      %v2435 = vadd.f32 %v2372, %v2434
      %v2436 = vpop.f32.mrf.mxu0
      %v2437 = vadd.f32 %v2374, %v2436
      %2438 = vmatmul.bf16.gmra.mxu0 %v2406
      %v2439 = vpop.f32.mrf.mxu0
      %v2440 = vadd.f32 %v2377, %v2439
      %v2441 = vpop.f32.mrf.mxu0
      %v2442 = vadd.f32 %v2379, %v2441
      %2443 = vmatmul.bf16.gmra.mxu0 %v2408
      %v2444 = vpop.f32.mrf.mxu0
      %v2445 = vadd.f32 %v2382, %v2444
      %v2446 = vpop.f32.mrf.mxu0
      %v2447 = vadd.f32 %v2384, %v2446
      %2448 = vdwg.mxu0
      %s2449 = scalar_lea.vmem %s4, 32
      %v2450 = vld [vmem:[%s2449] sm:$0xf]
      %v2451 = vld [vmem:[%s2449 + $0x4] sm:$0xf]
      %v2452 = vld [vmem:[%s2449 + $0x8] sm:$0xf]
      %v2453 = vld [vmem:[%s2449 + $0xc] sm:$0xf]
      %vm2454 = vcmask 1046528
      %v2455 = vrot.slane %v2263, 1
      %v2456 = vrot.slane %v2264, 1
      %v2457 = vsel %vm2454, %v2455, %v2456
      %v2458 = vrot.slane %v2265, 1
      %v2459 = vsel %vm2454, %v2456, %v2458
      %v2460 = vrot.slane %v2266, 1
      %v2461 = vsel %vm2454, %v2458, %v2460
      %v2462 = vrot.slane %v2267, 1
      %v2463 = vsel %vm2454, %v2460, %v2462
      %v2464 = vrot.slane %v2268, 1
      %v2465 = vsel %vm2454, %v2462, %v2464
      %v2470 = vunpack.c.l.b16 %v2450
      %v2471 = vunpack.c.l.b16 %v2451
      %v2472 = vunpack.c.l.b16 %v2452
      %v2473 = vunpack.c.l.b16 %v2453
      %v2474 = vpack.c.b16 %v2471, %v2470
      %v2475 = vpack.c.b16 %v2473, %v2472
      %v2479 = vsel %vm793, %v2457, 0
      %v2482 = vsel %vm793, %v2459, 0
      %v2485 = vsel %vm793, %v2461, 0
      %v2488 = vsel %vm793, %v2463, 0
      %v2491 = vsel %vm793, %v2465, 0
      %v2494 = vsel %vm793, %v2464, 0
      %2496 = vmatpush.bf16.msra.mxu0 0
      %2497 = vmatpush.bf16.msra.mxu0 0
      %2498 = vmatpush.bf16.msra.mxu0 0
      %2499 = vmatpush.bf16.msra.mxu0 0
      %2500 = vmatpush.bf16.msra.mxu0 0
      %2501 = vmatpush.bf16.msra.mxu0 0
      %2502 = vmatpush.bf16.msra.mxu0 %v2475
      %2503 = vmatpush.bf16.msra.mxu0 %v2474
      %2504 = vmatmul.bf16.gmra.mxu0 %v2479
      %v2505 = vpop.f32.mrf.mxu0
      %v2506 = vadd.f32 0.0, %v2505
      %v2507 = vpop.f32.mrf.mxu0
      %v2508 = vadd.f32 0.0, %v2507
      %2509 = vmatmul.bf16.gmra.mxu0 %v2482
      %v2510 = vpop.f32.mrf.mxu0
      %v2511 = vadd.f32 0.0, %v2510
      %v2512 = vpop.f32.mrf.mxu0
      %v2513 = vadd.f32 0.0, %v2512
      %2514 = vmatmul.bf16.gmra.mxu0 %v2485
      %v2515 = vpop.f32.mrf.mxu0
      %v2516 = vadd.f32 0.0, %v2515
      %v2517 = vpop.f32.mrf.mxu0
      %v2518 = vadd.f32 0.0, %v2517
      %2519 = vmatmul.bf16.gmra.mxu0 %v2488
      %v2520 = vpop.f32.mrf.mxu0
      %v2521 = vadd.f32 0.0, %v2520
      %v2522 = vpop.f32.mrf.mxu0
      %v2523 = vadd.f32 0.0, %v2522
      %2524 = vmatmul.bf16.gmra.mxu0 %v2491
      %v2525 = vpop.f32.mrf.mxu0
      %v2526 = vadd.f32 0.0, %v2525
      %v2527 = vpop.f32.mrf.mxu0
      %v2528 = vadd.f32 0.0, %v2527
      %2529 = vmatmul.bf16.gmra.mxu0 %v2494
      %v2530 = vpop.f32.mrf.mxu0
      %v2531 = vadd.f32 0.0, %v2530
      %v2532 = vpop.f32.mrf.mxu0
      %v2533 = vadd.f32 0.0, %v2532
      %2534 = vdwg.mxu0
      %v2535 = vadd.f32 %v2420, %v2506
      %v2536 = vadd.f32 %v2422, %v2508
      %v2537 = vadd.f32 %v2425, %v2511
      %v2538 = vadd.f32 %v2427, %v2513
      %v2539 = vadd.f32 %v2430, %v2516
      %v2540 = vadd.f32 %v2432, %v2518
      %v2541 = vadd.f32 %v2435, %v2521
      %v2542 = vadd.f32 %v2437, %v2523
      %v2543 = vadd.f32 %v2440, %v2526
      %v2544 = vadd.f32 %v2442, %v2528
      %v2545 = vadd.f32 %v2445, %v2531
      %v2546 = vadd.f32 %v2447, %v2533
      %s2547 = scalar_lea.vmem %s4, 48
      %v2548 = vld [vmem:[%s2547] sm:$0xf]
      %v2549 = vld [vmem:[%s2547 + $0x4] sm:$0xf]
      %v2550 = vld [vmem:[%s2547 + $0x8] sm:$0xf]
      %v2551 = vld [vmem:[%s2547 + $0xc] sm:$0xf]
      %vm2552 = vsmask.f32 6400
      %v2553 = vrot.slane %v2271, 1
      %v2554 = vrot.slane %v2273, 2
      %v2555 = vor.u32 %v2553, %v2554
      %v2556 = vrot.slane %v2282, 1
      %v2557 = vrot.slane %v2278, 2
      %v2558 = vor.u32 %v2556, %v2557
      %v2559 = vsel %vm2552, %v2555, %v2558
      %v2560 = vrot.slane %v2290, 1
      %v2561 = vrot.slane %v2286, 2
      %v2562 = vor.u32 %v2560, %v2561
      %v2563 = vsel %vm2552, %v2558, %v2562
      %v2564 = vrot.slane %v2298, 1
      %v2565 = vrot.slane %v2294, 2
      %v2566 = vor.u32 %v2564, %v2565
      %v2567 = vsel %vm2552, %v2562, %v2566
      %v2568 = vrot.slane %v2306, 1
      %v2569 = vrot.slane %v2302, 2
      %v2570 = vor.u32 %v2568, %v2569
      %v2571 = vsel %vm2552, %v2566, %v2570
      %v2572 = vrot.slane %v2314, 1
      %v2573 = vrot.slane %v2310, 2
      %v2574 = vor.u32 %v2572, %v2573
      %v2575 = vsel %vm2552, %v2570, %v2574
      %v2580 = vunpack.c.l.b16 %v2548
      %v2581 = vunpack.c.l.b16 %v2549
      %v2582 = vunpack.c.l.b16 %v2550
      %v2583 = vunpack.c.l.b16 %v2551
      %v2584 = vpack.c.b16 %v2581, %v2580
      %v2585 = vpack.c.b16 %v2583, %v2582
      %v2589 = vsel %vm793, %v2559, 0
      %v2592 = vsel %vm793, %v2563, 0
      %v2595 = vsel %vm793, %v2567, 0
      %v2598 = vsel %vm793, %v2571, 0
      %v2601 = vsel %vm793, %v2575, 0
      %v2604 = vsel %vm793, %v2574, 0
      %2606 = vmatpush.bf16.msra.mxu0 0
      %2607 = vmatpush.bf16.msra.mxu0 0
      %2608 = vmatpush.bf16.msra.mxu0 0
      %2609 = vmatpush.bf16.msra.mxu0 0
      %2610 = vmatpush.bf16.msra.mxu0 0
      %2611 = vmatpush.bf16.msra.mxu0 0
      %2612 = vmatpush.bf16.msra.mxu0 %v2585
      %2613 = vmatpush.bf16.msra.mxu0 %v2584
      %2614 = vmatmul.bf16.gmra.mxu0 %v2589
      %v2615 = vpop.f32.mrf.mxu0
      %v2616 = vadd.f32 0.0, %v2615
      %v2617 = vpop.f32.mrf.mxu0
      %v2618 = vadd.f32 0.0, %v2617
      %2619 = vmatmul.bf16.gmra.mxu0 %v2592
      %v2620 = vpop.f32.mrf.mxu0
      %v2621 = vadd.f32 0.0, %v2620
      %v2622 = vpop.f32.mrf.mxu0
      %v2623 = vadd.f32 0.0, %v2622
      %2624 = vmatmul.bf16.gmra.mxu0 %v2595
      %v2625 = vpop.f32.mrf.mxu0
      %v2626 = vadd.f32 0.0, %v2625
      %v2627 = vpop.f32.mrf.mxu0
      %v2628 = vadd.f32 0.0, %v2627
      %2629 = vmatmul.bf16.gmra.mxu0 %v2598
      %v2630 = vpop.f32.mrf.mxu0
      %v2631 = vadd.f32 0.0, %v2630
      %v2632 = vpop.f32.mrf.mxu0
      %v2633 = vadd.f32 0.0, %v2632
      %2634 = vmatmul.bf16.gmra.mxu0 %v2601
      %v2635 = vpop.f32.mrf.mxu0
      %v2636 = vadd.f32 0.0, %v2635
      %v2637 = vpop.f32.mrf.mxu0
      %v2638 = vadd.f32 0.0, %v2637
      %2639 = vmatmul.bf16.gmra.mxu0 %v2604
      %v2640 = vpop.f32.mrf.mxu0
      %v2641 = vadd.f32 0.0, %v2640
      %v2642 = vpop.f32.mrf.mxu0
      %v2643 = vadd.f32 0.0, %v2642
      %2644 = vdwg.mxu0
      %v2645 = vadd.f32 %v2535, %v2616
      %v2646 = vadd.f32 %v2536, %v2618
      %v2647 = vadd.f32 %v2537, %v2621
      %v2648 = vadd.f32 %v2538, %v2623
      %v2649 = vadd.f32 %v2539, %v2626
      %v2650 = vadd.f32 %v2540, %v2628
      %v2651 = vadd.f32 %v2541, %v2631
      %v2652 = vadd.f32 %v2542, %v2633
      %v2653 = vadd.f32 %v2543, %v2636
      %v2654 = vadd.f32 %v2544, %v2638
      %v2655 = vadd.f32 %v2545, %v2641
      %v2656 = vadd.f32 %v2546, %v2643
      %s2657 = scalar_lea.vmem %s4, 64
      %v2658 = vld [vmem:[%s2657] sm:$0xf]
      %v2659 = vld [vmem:[%s2657 + $0x4] sm:$0xf]
      %v2660 = vld [vmem:[%s2657 + $0x8] sm:$0xf]
      %v2661 = vld [vmem:[%s2657 + $0xc] sm:$0xf]
      %vm2662 = vcmask 1045504
      %v2663 = vrot.slane %v2263, 2
      %v2664 = vrot.slane %v2264, 2
      %v2665 = vsel %vm2662, %v2663, %v2664
      %v2666 = vrot.slane %v2265, 2
      %v2667 = vsel %vm2662, %v2664, %v2666
      %v2668 = vrot.slane %v2266, 2
      %v2669 = vsel %vm2662, %v2666, %v2668
      %v2670 = vrot.slane %v2267, 2
      %v2671 = vsel %vm2662, %v2668, %v2670
      %v2672 = vrot.slane %v2268, 2
      %v2673 = vsel %vm2662, %v2670, %v2672
      %v2678 = vunpack.c.l.b16 %v2658
      %v2679 = vunpack.c.l.b16 %v2659
      %v2680 = vunpack.c.l.b16 %v2660
      %v2681 = vunpack.c.l.b16 %v2661
      %v2682 = vpack.c.b16 %v2679, %v2678
      %v2683 = vpack.c.b16 %v2681, %v2680
      %v2687 = vsel %vm793, %v2665, 0
      %v2690 = vsel %vm793, %v2667, 0
      %v2693 = vsel %vm793, %v2669, 0
      %v2696 = vsel %vm793, %v2671, 0
      %v2699 = vsel %vm793, %v2673, 0
      %v2702 = vsel %vm793, %v2672, 0
      %2704 = vmatpush.bf16.msra.mxu0 0
      %2705 = vmatpush.bf16.msra.mxu0 0
      %2706 = vmatpush.bf16.msra.mxu0 0
      %2707 = vmatpush.bf16.msra.mxu0 0
      %2708 = vmatpush.bf16.msra.mxu0 0
      %2709 = vmatpush.bf16.msra.mxu0 0
      %2710 = vmatpush.bf16.msra.mxu0 %v2683
      %2711 = vmatpush.bf16.msra.mxu0 %v2682
      %2712 = vmatmul.bf16.gmra.mxu0 %v2687
      %v2713 = vpop.f32.mrf.mxu0
      %v2714 = vadd.f32 0.0, %v2713
      %v2715 = vpop.f32.mrf.mxu0
      %v2716 = vadd.f32 0.0, %v2715
      %2717 = vmatmul.bf16.gmra.mxu0 %v2690
      %v2718 = vpop.f32.mrf.mxu0
      %v2719 = vadd.f32 0.0, %v2718
      %v2720 = vpop.f32.mrf.mxu0
      %v2721 = vadd.f32 0.0, %v2720
      %2722 = vmatmul.bf16.gmra.mxu0 %v2693
      %v2723 = vpop.f32.mrf.mxu0
      %v2724 = vadd.f32 0.0, %v2723
      %v2725 = vpop.f32.mrf.mxu0
      %v2726 = vadd.f32 0.0, %v2725
      %2727 = vmatmul.bf16.gmra.mxu0 %v2696
      %v2728 = vpop.f32.mrf.mxu0
      %v2729 = vadd.f32 0.0, %v2728
      %v2730 = vpop.f32.mrf.mxu0
      %v2731 = vadd.f32 0.0, %v2730
      %2732 = vmatmul.bf16.gmra.mxu0 %v2699
      %v2733 = vpop.f32.mrf.mxu0
      %v2734 = vadd.f32 0.0, %v2733
      %v2735 = vpop.f32.mrf.mxu0
      %v2736 = vadd.f32 0.0, %v2735
      %2737 = vmatmul.bf16.gmra.mxu0 %v2702
      %v2738 = vpop.f32.mrf.mxu0
      %v2739 = vadd.f32 0.0, %v2738
      %v2740 = vpop.f32.mrf.mxu0
      %v2741 = vadd.f32 0.0, %v2740
      %2742 = vdwg.mxu0
      %v2743 = vadd.f32 %v2645, %v2714
      %v2744 = vadd.f32 %v2646, %v2716
      %v2745 = vadd.f32 %v2647, %v2719
      %v2746 = vadd.f32 %v2648, %v2721
      %v2747 = vadd.f32 %v2649, %v2724
      %v2748 = vadd.f32 %v2650, %v2726
      %v2749 = vadd.f32 %v2651, %v2729
      %v2750 = vadd.f32 %v2652, %v2731
      %v2751 = vadd.f32 %v2653, %v2734
      %v2752 = vadd.f32 %v2654, %v2736
      %v2753 = vadd.f32 %v2655, %v2739
      %v2754 = vadd.f32 %v2656, %v2741
      %s2755 = scalar_lea.vmem %s4, 80
      %v2756 = vld [vmem:[%s2755] sm:$0xf]
      %v2757 = vld [vmem:[%s2755 + $0x4] sm:$0xf]
      %v2758 = vld [vmem:[%s2755 + $0x8] sm:$0xf]
      %v2759 = vld [vmem:[%s2755 + $0xc] sm:$0xf]
      %v2761 = vunpack.c.l.b16 %v2223
      %v2762 = vpack.c.b16 %v2253, %v2252
      %v2763 = vpack.c.b16 %v2255, %v2254
      %v2764 = vpack.c.b16 %v2257, %v2256
      %v2765 = vpack.c.b16 %v2259, %v2258
      %v2766 = vpack.c.b16 %v2261, %v2260
      %v2767 = vpack.c.b16 %v2761, %v2262
      %v2768 = vrot.slane %v2762, 2
      %v2769 = vrot.slane %v2763, 2
      %v2770 = vsel %vm2662, %v2768, %v2769
      %v2771 = vrot.slane %v2764, 2
      %v2772 = vsel %vm2662, %v2769, %v2771
      %v2773 = vrot.slane %v2765, 2
      %v2774 = vsel %vm2662, %v2771, %v2773
      %v2775 = vrot.slane %v2766, 2
      %v2776 = vsel %vm2662, %v2773, %v2775
      %v2777 = vrot.slane %v2767, 2
      %v2778 = vsel %vm2662, %v2775, %v2777
      %v2783 = vunpack.c.l.b16 %v2756
      %v2784 = vunpack.c.l.b16 %v2757
      %v2785 = vunpack.c.l.b16 %v2758
      %v2786 = vunpack.c.l.b16 %v2759
      %v2787 = vpack.c.b16 %v2784, %v2783
      %v2788 = vpack.c.b16 %v2786, %v2785
      %v2792 = vsel %vm793, %v2770, 0
      %v2795 = vsel %vm793, %v2772, 0
      %v2798 = vsel %vm793, %v2774, 0
      %v2801 = vsel %vm793, %v2776, 0
      %v2804 = vsel %vm793, %v2778, 0
      %v2807 = vsel %vm793, %v2777, 0
      %2809 = vmatpush.bf16.msra.mxu0 0
      %2810 = vmatpush.bf16.msra.mxu0 0
      %2811 = vmatpush.bf16.msra.mxu0 0
      %2812 = vmatpush.bf16.msra.mxu0 0
      %2813 = vmatpush.bf16.msra.mxu0 0
      %2814 = vmatpush.bf16.msra.mxu0 0
      %2815 = vmatpush.bf16.msra.mxu0 %v2788
      %2816 = vmatpush.bf16.msra.mxu0 %v2787
      %2817 = vmatmul.bf16.gmra.mxu0 %v2792
      %v2818 = vpop.f32.mrf.mxu0
      %v2819 = vadd.f32 0.0, %v2818
      %v2820 = vpop.f32.mrf.mxu0
      %v2821 = vadd.f32 0.0, %v2820
      %2822 = vmatmul.bf16.gmra.mxu0 %v2795
      %v2823 = vpop.f32.mrf.mxu0
      %v2824 = vadd.f32 0.0, %v2823
      %v2825 = vpop.f32.mrf.mxu0
      %v2826 = vadd.f32 0.0, %v2825
      %2827 = vmatmul.bf16.gmra.mxu0 %v2798
      %v2828 = vpop.f32.mrf.mxu0
      %v2829 = vadd.f32 0.0, %v2828
      %v2830 = vpop.f32.mrf.mxu0
      %v2831 = vadd.f32 0.0, %v2830
      %2832 = vmatmul.bf16.gmra.mxu0 %v2801
      %v2833 = vpop.f32.mrf.mxu0
      %v2834 = vadd.f32 0.0, %v2833
      %v2835 = vpop.f32.mrf.mxu0
      %v2836 = vadd.f32 0.0, %v2835
      %2837 = vmatmul.bf16.gmra.mxu0 %v2804
      %v2838 = vpop.f32.mrf.mxu0
      %v2839 = vadd.f32 0.0, %v2838
      %v2840 = vpop.f32.mrf.mxu0
      %v2841 = vadd.f32 0.0, %v2840
      %2842 = vmatmul.bf16.gmra.mxu0 %v2807
      %v2843 = vpop.f32.mrf.mxu0
      %v2844 = vadd.f32 0.0, %v2843
      %v2845 = vpop.f32.mrf.mxu0
      %v2846 = vadd.f32 0.0, %v2845
      %2847 = vdwg.mxu0
      %v2848 = vadd.f32 %v2743, %v2819
      %v2849 = vadd.f32 %v2744, %v2821
      %v2850 = vadd.f32 %v2745, %v2824
      %v2851 = vadd.f32 %v2746, %v2826
      %v2852 = vadd.f32 %v2747, %v2829
      %v2853 = vadd.f32 %v2748, %v2831
      %v2854 = vadd.f32 %v2749, %v2834
      %v2855 = vadd.f32 %v2750, %v2836
      %v2856 = vadd.f32 %v2751, %v2839
      %v2857 = vadd.f32 %v2752, %v2841
      %v2858 = vadd.f32 %v2753, %v2844
      %v2859 = vadd.f32 %v2754, %v2846
      %s2860 = scalar_lea.vmem %s4, 96
      %v2861 = vld [vmem:[%s2860] sm:$0xf]
      %v2862 = vld [vmem:[%s2860 + $0x4] sm:$0xf]
      %v2863 = vld [vmem:[%s2860 + $0x8] sm:$0xf]
      %v2864 = vld [vmem:[%s2860 + $0xc] sm:$0xf]
      %v2866 = vunpack.c.l.b16 %v2224
      %v2867 = vpack.c.b16 %v2866, %v2866
      %vm2868 = vsmask.f32 5376
      %v2870 = vshrl.u32 %v2762, 16
      %v2872 = vrot.slane %v2870, 2
      %v2873 = vshll.u32 %v2762, 16
      %v2875 = vrot.slane %v2873, 3
      %v2876 = vor.u32 %v2872, %v2875
      %v2878 = vshrl.u32 %v2763, 16
      %v2880 = vrot.slane %v2878, 2
      %v2881 = vshll.u32 %v2763, 16
      %v2883 = vrot.slane %v2881, 3
      %v2884 = vor.u32 %v2880, %v2883
      %v2885 = vsel %vm2868, %v2876, %v2884
      %v2887 = vshrl.u32 %v2764, 16
      %v2889 = vrot.slane %v2887, 2
      %v2890 = vshll.u32 %v2764, 16
      %v2892 = vrot.slane %v2890, 3
      %v2893 = vor.u32 %v2889, %v2892
      %v2894 = vsel %vm2868, %v2884, %v2893
      %v2896 = vshrl.u32 %v2765, 16
      %v2898 = vrot.slane %v2896, 2
      %v2899 = vshll.u32 %v2765, 16
      %v2901 = vrot.slane %v2899, 3
      %v2902 = vor.u32 %v2898, %v2901
      %v2903 = vsel %vm2868, %v2893, %v2902
      %v2905 = vshrl.u32 %v2766, 16
      %v2907 = vrot.slane %v2905, 2
      %v2908 = vshll.u32 %v2766, 16
      %v2910 = vrot.slane %v2908, 3
      %v2911 = vor.u32 %v2907, %v2910
      %v2912 = vsel %vm2868, %v2902, %v2911
      %v2914 = vshrl.u32 %v2767, 16
      %v2916 = vrot.slane %v2914, 2
      %v2917 = vshll.u32 %v2767, 16
      %v2919 = vrot.slane %v2917, 3
      %v2920 = vor.u32 %v2916, %v2919
      %v2921 = vsel %vm2868, %v2911, %v2920
      %v2923 = vshll.u32 %v2867, 16
      %v2925 = vrot.slane %v2923, 3
      %v2926 = vsel %vm2868, %v2920, %v2925
      %v2931 = vunpack.c.l.b16 %v2861
      %v2932 = vunpack.c.l.b16 %v2862
      %v2933 = vunpack.c.l.b16 %v2863
      %v2934 = vunpack.c.l.b16 %v2864
      %v2935 = vpack.c.b16 %v2932, %v2931
      %v2936 = vpack.c.b16 %v2934, %v2933
      %v2940 = vsel %vm793, %v2885, 0
      %v2943 = vsel %vm793, %v2894, 0
      %v2946 = vsel %vm793, %v2903, 0
      %v2949 = vsel %vm793, %v2912, 0
      %v2952 = vsel %vm793, %v2921, 0
      %v2955 = vsel %vm793, %v2926, 0
      %2957 = vmatpush.bf16.msra.mxu0 0
      %2958 = vmatpush.bf16.msra.mxu0 0
      %2959 = vmatpush.bf16.msra.mxu0 0
      %2960 = vmatpush.bf16.msra.mxu0 0
      %2961 = vmatpush.bf16.msra.mxu0 0
      %2962 = vmatpush.bf16.msra.mxu0 0
      %2963 = vmatpush.bf16.msra.mxu0 %v2936
      %2964 = vmatpush.bf16.msra.mxu0 %v2935
      %2965 = vmatmul.bf16.gmra.mxu0 %v2940
      %v2966 = vpop.f32.mrf.mxu0
      %v2967 = vadd.f32 0.0, %v2966
      %v2968 = vpop.f32.mrf.mxu0
      %v2969 = vadd.f32 0.0, %v2968
      %2970 = vmatmul.bf16.gmra.mxu0 %v2943
      %v2971 = vpop.f32.mrf.mxu0
      %v2972 = vadd.f32 0.0, %v2971
      %v2973 = vpop.f32.mrf.mxu0
      %v2974 = vadd.f32 0.0, %v2973
      %2975 = vmatmul.bf16.gmra.mxu0 %v2946
      %v2976 = vpop.f32.mrf.mxu0
      %v2977 = vadd.f32 0.0, %v2976
      %v2978 = vpop.f32.mrf.mxu0
      %v2979 = vadd.f32 0.0, %v2978
      %2980 = vmatmul.bf16.gmra.mxu0 %v2949
      %v2981 = vpop.f32.mrf.mxu0
      %v2982 = vadd.f32 0.0, %v2981
      %v2983 = vpop.f32.mrf.mxu0
      %v2984 = vadd.f32 0.0, %v2983
      %2985 = vmatmul.bf16.gmra.mxu0 %v2952
      %v2986 = vpop.f32.mrf.mxu0
      %v2987 = vadd.f32 0.0, %v2986
      %v2988 = vpop.f32.mrf.mxu0
      %v2989 = vadd.f32 0.0, %v2988
      %2990 = vmatmul.bf16.gmra.mxu0 %v2955
      %v2991 = vpop.f32.mrf.mxu0
      %v2992 = vadd.f32 0.0, %v2991
      %v2993 = vpop.f32.mrf.mxu0
      %v2994 = vadd.f32 0.0, %v2993
      %2995 = vdwg.mxu0
      %v2996 = vadd.f32 %v2848, %v2967
      %v2997 = vadd.f32 %v2849, %v2969
      %v2998 = vadd.f32 %v2850, %v2972
      %v2999 = vadd.f32 %v2851, %v2974
      %v3000 = vadd.f32 %v2852, %v2977
      %v3001 = vadd.f32 %v2853, %v2979
      %v3002 = vadd.f32 %v2854, %v2982
      %v3003 = vadd.f32 %v2855, %v2984
      %v3004 = vadd.f32 %v2856, %v2987
      %v3005 = vadd.f32 %v2857, %v2989
      %v3006 = vadd.f32 %v2858, %v2992
      %v3007 = vadd.f32 %v2859, %v2994
      %s3008 = scalar_lea.vmem %s4, 112
      %v3009 = vld [vmem:[%s3008] sm:$0xf]
      %v3010 = vld [vmem:[%s3008 + $0x4] sm:$0xf]
      %v3011 = vld [vmem:[%s3008 + $0x8] sm:$0xf]
      %v3012 = vld [vmem:[%s3008 + $0xc] sm:$0xf]
      %vm3013 = vcmask 1044480
      %v3014 = vrot.slane %v2762, 3
      %v3015 = vrot.slane %v2763, 3
      %v3016 = vsel %vm3013, %v3014, %v3015
      %v3017 = vrot.slane %v2764, 3
      %v3018 = vsel %vm3013, %v3015, %v3017
      %v3019 = vrot.slane %v2765, 3
      %v3020 = vsel %vm3013, %v3017, %v3019
      %v3021 = vrot.slane %v2766, 3
      %v3022 = vsel %vm3013, %v3019, %v3021
      %v3023 = vrot.slane %v2767, 3
      %v3024 = vsel %vm3013, %v3021, %v3023
      %v3025 = vrot.slane %v2867, 3
      %v3026 = vsel %vm3013, %v3023, %v3025
      %v3031 = vunpack.c.l.b16 %v3009
      %v3032 = vunpack.c.l.b16 %v3010
      %v3033 = vunpack.c.l.b16 %v3011
      %v3034 = vunpack.c.l.b16 %v3012
      %v3035 = vpack.c.b16 %v3032, %v3031
      %v3036 = vpack.c.b16 %v3034, %v3033
      %v3040 = vsel %vm793, %v3016, 0
      %v3043 = vsel %vm793, %v3018, 0
      %v3046 = vsel %vm793, %v3020, 0
      %v3049 = vsel %vm793, %v3022, 0
      %v3052 = vsel %vm793, %v3024, 0
      %v3055 = vsel %vm793, %v3026, 0
      %3057 = vmatpush.bf16.msra.mxu0 0
      %3058 = vmatpush.bf16.msra.mxu0 0
      %3059 = vmatpush.bf16.msra.mxu0 0
      %3060 = vmatpush.bf16.msra.mxu0 0
      %3061 = vmatpush.bf16.msra.mxu0 0
      %3062 = vmatpush.bf16.msra.mxu0 0
      %3063 = vmatpush.bf16.msra.mxu0 %v3036
      %3064 = vmatpush.bf16.msra.mxu0 %v3035
      %3065 = vmatmul.bf16.gmra.mxu0 %v3040
      %v3066 = vpop.f32.mrf.mxu0
      %v3067 = vadd.f32 0.0, %v3066
      %v3068 = vpop.f32.mrf.mxu0
      %v3069 = vadd.f32 0.0, %v3068
      %3070 = vmatmul.bf16.gmra.mxu0 %v3043
      %v3071 = vpop.f32.mrf.mxu0
      %v3072 = vadd.f32 0.0, %v3071
      %v3073 = vpop.f32.mrf.mxu0
      %v3074 = vadd.f32 0.0, %v3073
      %3075 = vmatmul.bf16.gmra.mxu0 %v3046
      %v3076 = vpop.f32.mrf.mxu0
      %v3077 = vadd.f32 0.0, %v3076
      %v3078 = vpop.f32.mrf.mxu0
      %v3079 = vadd.f32 0.0, %v3078
      %3080 = vmatmul.bf16.gmra.mxu0 %v3049
      %v3081 = vpop.f32.mrf.mxu0
      %v3082 = vadd.f32 0.0, %v3081
      %v3083 = vpop.f32.mrf.mxu0
      %v3084 = vadd.f32 0.0, %v3083
      %3085 = vmatmul.bf16.gmra.mxu0 %v3052
      %v3086 = vpop.f32.mrf.mxu0
      %v3087 = vadd.f32 0.0, %v3086
      %v3088 = vpop.f32.mrf.mxu0
      %v3089 = vadd.f32 0.0, %v3088
      %3090 = vmatmul.bf16.gmra.mxu0 %v3055
      %v3091 = vpop.f32.mrf.mxu0
      %v3092 = vadd.f32 0.0, %v3091
      %v3093 = vpop.f32.mrf.mxu0
      %v3094 = vadd.f32 0.0, %v3093
      %3095 = vdwg.mxu0
      %v3096 = vadd.f32 %v2996, %v3067
      %v3097 = vadd.f32 %v2997, %v3069
      %v3098 = vadd.f32 %v2998, %v3072
      %v3099 = vadd.f32 %v2999, %v3074
      %v3100 = vadd.f32 %v3000, %v3077
      %v3101 = vadd.f32 %v3001, %v3079
      %v3102 = vadd.f32 %v3002, %v3082
      %v3103 = vadd.f32 %v3003, %v3084
      %v3104 = vadd.f32 %v3004, %v3087
      %v3105 = vadd.f32 %v3005, %v3089
      %v3106 = vadd.f32 %v3006, %v3092
      %v3107 = vadd.f32 %v3007, %v3094
      %s3108 = scalar_lea.vmem %s4, 128
      %v3109 = vld [vmem:[%s3108] sm:$0xf]
      %v3110 = vld [vmem:[%s3108 + $0x4] sm:$0xf]
      %v3111 = vld [vmem:[%s3108 + $0x8] sm:$0xf]
      %v3112 = vld [vmem:[%s3108 + $0xc] sm:$0xf]
      %vm3113 = vsmask.f32 4352
      %v3114 = vrot.slane %v2870, 3
      %v3115 = vrot.slane %v2873, 4
      %v3116 = vor.u32 %v3114, %v3115
      %v3117 = vrot.slane %v2878, 3
      %v3118 = vrot.slane %v2881, 4
      %v3119 = vor.u32 %v3117, %v3118
      %v3120 = vsel %vm3113, %v3116, %v3119
      %v3121 = vrot.slane %v2887, 3
      %v3122 = vrot.slane %v2890, 4
      %v3123 = vor.u32 %v3121, %v3122
      %v3124 = vsel %vm3113, %v3119, %v3123
      %v3125 = vrot.slane %v2896, 3
      %v3126 = vrot.slane %v2899, 4
      %v3127 = vor.u32 %v3125, %v3126
      %v3128 = vsel %vm3113, %v3123, %v3127
      %v3129 = vrot.slane %v2905, 3
      %v3130 = vrot.slane %v2908, 4
      %v3131 = vor.u32 %v3129, %v3130
      %v3132 = vsel %vm3113, %v3127, %v3131
      %v3133 = vrot.slane %v2914, 3
      %v3134 = vrot.slane %v2917, 4
      %v3135 = vor.u32 %v3133, %v3134
      %v3136 = vsel %vm3113, %v3131, %v3135
      %v3137 = vshrl.u32 %v2867, 16
      %v3139 = vrot.slane %v3137, 3
      %v3140 = vrot.slane %v2923, 4
      %v3141 = vor.u32 %v3139, %v3140
      %v3142 = vsel %vm3113, %v3135, %v3141
      %v3147 = vunpack.c.l.b16 %v3109
      %v3148 = vunpack.c.l.b16 %v3110
      %v3149 = vunpack.c.l.b16 %v3111
      %v3150 = vunpack.c.l.b16 %v3112
      %v3151 = vpack.c.b16 %v3148, %v3147
      %v3152 = vpack.c.b16 %v3150, %v3149
      %v3156 = vsel %vm793, %v3120, 0
      %v3159 = vsel %vm793, %v3124, 0
      %v3162 = vsel %vm793, %v3128, 0
      %v3165 = vsel %vm793, %v3132, 0
      %v3168 = vsel %vm793, %v3136, 0
      %v3171 = vsel %vm793, %v3142, 0
      %3173 = vmatpush.bf16.msra.mxu0 0
      %3174 = vmatpush.bf16.msra.mxu0 0
      %3175 = vmatpush.bf16.msra.mxu0 0
      %3176 = vmatpush.bf16.msra.mxu0 0
      %3177 = vmatpush.bf16.msra.mxu0 0
      %3178 = vmatpush.bf16.msra.mxu0 0
      %3179 = vmatpush.bf16.msra.mxu0 %v3152
      %3180 = vmatpush.bf16.msra.mxu0 %v3151
      %3181 = vmatmul.bf16.gmra.mxu0 %v3156
      %v3182 = vpop.f32.mrf.mxu0
      %v3183 = vadd.f32 0.0, %v3182
      %v3184 = vpop.f32.mrf.mxu0
      %v3185 = vadd.f32 0.0, %v3184
      %3186 = vmatmul.bf16.gmra.mxu0 %v3159
      %v3187 = vpop.f32.mrf.mxu0
      %v3188 = vadd.f32 0.0, %v3187
      %v3189 = vpop.f32.mrf.mxu0
      %v3190 = vadd.f32 0.0, %v3189
      %3191 = vmatmul.bf16.gmra.mxu0 %v3162
      %v3192 = vpop.f32.mrf.mxu0
      %v3193 = vadd.f32 0.0, %v3192
      %v3194 = vpop.f32.mrf.mxu0
      %v3195 = vadd.f32 0.0, %v3194
      %3196 = vmatmul.bf16.gmra.mxu0 %v3165
      %v3197 = vpop.f32.mrf.mxu0
      %v3198 = vadd.f32 0.0, %v3197
      %v3199 = vpop.f32.mrf.mxu0
      %v3200 = vadd.f32 0.0, %v3199
      %3201 = vmatmul.bf16.gmra.mxu0 %v3168
      %v3202 = vpop.f32.mrf.mxu0
      %v3203 = vadd.f32 0.0, %v3202
      %v3204 = vpop.f32.mrf.mxu0
      %v3205 = vadd.f32 0.0, %v3204
      %3206 = vmatmul.bf16.gmra.mxu0 %v3171
      %v3207 = vpop.f32.mrf.mxu0
      %v3208 = vadd.f32 0.0, %v3207
      %v3209 = vpop.f32.mrf.mxu0
      %v3210 = vadd.f32 0.0, %v3209
      %3211 = vdwg.mxu0
      %v3212 = vadd.f32 %v3096, %v3183
      %v3213 = vadd.f32 %v3097, %v3185
      %v3214 = vadd.f32 %v3098, %v3188
      %v3215 = vadd.f32 %v3099, %v3190
      %v3216 = vadd.f32 %v3100, %v3193
      %v3217 = vadd.f32 %v3101, %v3195
      %v3218 = vadd.f32 %v3102, %v3198
      %v3219 = vadd.f32 %v3103, %v3200
      %v3220 = vadd.f32 %v3104, %v3203
      %v3221 = vadd.f32 %v3105, %v3205
      %v3222 = vadd.f32 %v3106, %v3208
      %v3223 = vadd.f32 %v3107, %v3210
      %s3224 = scalar_lea.vmem %s4, 144
      %v3225 = vld [vmem:[%s3224] sm:$0xf]
      %v3226 = vld [vmem:[%s3224 + $0x4] sm:$0xf]
      %v3227 = vld [vmem:[%s3224 + $0x8] sm:$0xf]
      %v3228 = vld [vmem:[%s3224 + $0xc] sm:$0xf]
      %v3229 = vpack.c.b16 %v2866, %v2761
      %v3234 = vunpack.c.l.b16 %v3225
      %v3235 = vunpack.c.l.b16 %v3226
      %v3236 = vunpack.c.l.b16 %v3227
      %v3237 = vunpack.c.l.b16 %v3228
      %v3238 = vpack.c.b16 %v3235, %v3234
      %v3239 = vpack.c.b16 %v3237, %v3236
      %v3243 = vsel %vm793, %v3229, 0
      %3245 = vmatpush.bf16.msra.mxu0 0
      %3246 = vmatpush.bf16.msra.mxu0 0
      %3247 = vmatpush.bf16.msra.mxu0 0
      %3248 = vmatpush.bf16.msra.mxu0 0
      %3249 = vmatpush.bf16.msra.mxu0 0
      %3250 = vmatpush.bf16.msra.mxu0 0
      %3251 = vmatpush.bf16.msra.mxu0 %v3239
      %3252 = vmatpush.bf16.msra.mxu0 %v3238
      %3253 = vmatmul.bf16.gmra.mxu0 %v2400
      %v3254 = vpop.f32.mrf.mxu0
      %v3255 = vadd.f32 0.0, %v3254
      %v3256 = vpop.f32.mrf.mxu0
      %v3257 = vadd.f32 0.0, %v3256
      %3258 = vmatmul.bf16.gmra.mxu0 %v2402
      %v3259 = vpop.f32.mrf.mxu0
      %v3260 = vadd.f32 0.0, %v3259
      %v3261 = vpop.f32.mrf.mxu0
      %v3262 = vadd.f32 0.0, %v3261
      %3263 = vmatmul.bf16.gmra.mxu0 %v2404
      %v3264 = vpop.f32.mrf.mxu0
      %v3265 = vadd.f32 0.0, %v3264
      %v3266 = vpop.f32.mrf.mxu0
      %v3267 = vadd.f32 0.0, %v3266
      %3268 = vmatmul.bf16.gmra.mxu0 %v2406
      %v3269 = vpop.f32.mrf.mxu0
      %v3270 = vadd.f32 0.0, %v3269
      %v3271 = vpop.f32.mrf.mxu0
      %v3272 = vadd.f32 0.0, %v3271
      %3273 = vmatmul.bf16.gmra.mxu0 %v2408
      %v3274 = vpop.f32.mrf.mxu0
      %v3275 = vadd.f32 0.0, %v3274
      %v3276 = vpop.f32.mrf.mxu0
      %v3277 = vadd.f32 0.0, %v3276
      %3278 = vmatmul.bf16.gmra.mxu0 %v3243
      %v3279 = vpop.f32.mrf.mxu0
      %v3280 = vadd.f32 0.0, %v3279
      %v3281 = vpop.f32.mrf.mxu0
      %v3282 = vadd.f32 0.0, %v3281
      %3283 = vdwg.mxu0
      %v3284 = vadd.f32 %v3212, %v3255
      %v3285 = vadd.f32 %v3213, %v3257
      %v3286 = vadd.f32 %v3214, %v3260
      %v3287 = vadd.f32 %v3215, %v3262
      %v3288 = vadd.f32 %v3216, %v3265
      %v3289 = vadd.f32 %v3217, %v3267
      %v3290 = vadd.f32 %v3218, %v3270
      %v3291 = vadd.f32 %v3219, %v3272
      %v3292 = vadd.f32 %v3220, %v3275
      %v3293 = vadd.f32 %v3221, %v3277
      %v3294 = vadd.f32 %v3222, %v3280
      %v3295 = vadd.f32 %v3223, %v3282
      %s3296 = scalar_lea.vmem %s4, 160
      %v3297 = vld [vmem:[%s3296] sm:$0xf]
      %v3298 = vld [vmem:[%s3296 + $0x4] sm:$0xf]
      %v3299 = vld [vmem:[%s3296 + $0x8] sm:$0xf]
      %v3300 = vld [vmem:[%s3296 + $0xc] sm:$0xf]
      %v3302 = vunpack.c.l.b16 %v2225
      %v3303 = vpack.c.b16 %v3302, %v2866
      %v3308 = vunpack.c.l.b16 %v3297
      %v3309 = vunpack.c.l.b16 %v3298
      %v3310 = vunpack.c.l.b16 %v3299
      %v3311 = vunpack.c.l.b16 %v3300
      %v3312 = vpack.c.b16 %v3309, %v3308
      %v3313 = vpack.c.b16 %v3311, %v3310
      %v3316 = vsel %vm793, %v2763, 0
      %v3318 = vsel %vm793, %v2764, 0
      %v3320 = vsel %vm793, %v2765, 0
      %v3322 = vsel %vm793, %v2766, 0
      %v3324 = vsel %vm793, %v2767, 0
      %v3327 = vsel %vm793, %v3303, 0
      %3329 = vmatpush.bf16.msra.mxu0 0
      %3330 = vmatpush.bf16.msra.mxu0 0
      %3331 = vmatpush.bf16.msra.mxu0 0
      %3332 = vmatpush.bf16.msra.mxu0 0
      %3333 = vmatpush.bf16.msra.mxu0 0
      %3334 = vmatpush.bf16.msra.mxu0 0
      %3335 = vmatpush.bf16.msra.mxu0 %v3313
      %3336 = vmatpush.bf16.msra.mxu0 %v3312
      %3337 = vmatmul.bf16.gmra.mxu0 %v3316
      %v3338 = vpop.f32.mrf.mxu0
      %v3339 = vadd.f32 0.0, %v3338
      %v3340 = vpop.f32.mrf.mxu0
      %v3341 = vadd.f32 0.0, %v3340
      %3342 = vmatmul.bf16.gmra.mxu0 %v3318
      %v3343 = vpop.f32.mrf.mxu0
      %v3344 = vadd.f32 0.0, %v3343
      %v3345 = vpop.f32.mrf.mxu0
      %v3346 = vadd.f32 0.0, %v3345
      %3347 = vmatmul.bf16.gmra.mxu0 %v3320
      %v3348 = vpop.f32.mrf.mxu0
      %v3349 = vadd.f32 0.0, %v3348
      %v3350 = vpop.f32.mrf.mxu0
      %v3351 = vadd.f32 0.0, %v3350
      %3352 = vmatmul.bf16.gmra.mxu0 %v3322
      %v3353 = vpop.f32.mrf.mxu0
      %v3354 = vadd.f32 0.0, %v3353
      %v3355 = vpop.f32.mrf.mxu0
      %v3356 = vadd.f32 0.0, %v3355
      %3357 = vmatmul.bf16.gmra.mxu0 %v3324
      %v3358 = vpop.f32.mrf.mxu0
      %v3359 = vadd.f32 0.0, %v3358
      %v3360 = vpop.f32.mrf.mxu0
      %v3361 = vadd.f32 0.0, %v3360
      %3362 = vmatmul.bf16.gmra.mxu0 %v3327
      %v3363 = vpop.f32.mrf.mxu0
      %v3364 = vadd.f32 0.0, %v3363
      %v3365 = vpop.f32.mrf.mxu0
      %v3366 = vadd.f32 0.0, %v3365
      %3367 = vdwg.mxu0
      %v3368 = vadd.f32 %v3284, %v3339
      %v3369 = vadd.f32 %v3285, %v3341
      %v3370 = vadd.f32 %v3286, %v3344
      %v3371 = vadd.f32 %v3287, %v3346
      %v3372 = vadd.f32 %v3288, %v3349
      %v3373 = vadd.f32 %v3289, %v3351
      %v3374 = vadd.f32 %v3290, %v3354
      %v3375 = vadd.f32 %v3291, %v3356
      %v3376 = vadd.f32 %v3292, %v3359
      %v3377 = vadd.f32 %v3293, %v3361
      %v3378 = vadd.f32 %v3294, %v3364
      %v3379 = vadd.f32 %v3295, %v3366
      %s3380 = scalar_lea.vmem %s4, 176
      %v3381 = vld [vmem:[%s3380] sm:$0xf]
      %v3382 = vld [vmem:[%s3380 + $0x4] sm:$0xf]
      %v3383 = vld [vmem:[%s3380 + $0x8] sm:$0xf]
      %v3384 = vld [vmem:[%s3380 + $0xc] sm:$0xf]
      %v3385 = vrot.slane %v2881, 1
      %v3386 = vor.u32 %v2878, %v3385
      %v3387 = vrot.slane %v2890, 1
      %v3388 = vsel %vm2269, %v3386, %v3387
      %v3389 = vor.u32 %v2887, %v3387
      %v3390 = vrot.slane %v2899, 1
      %v3391 = vsel %vm2269, %v3389, %v3390
      %v3392 = vor.u32 %v2896, %v3390
      %v3393 = vrot.slane %v2908, 1
      %v3394 = vsel %vm2269, %v3392, %v3393
      %v3395 = vor.u32 %v2905, %v3393
      %v3396 = vrot.slane %v2917, 1
      %v3397 = vsel %vm2269, %v3395, %v3396
      %v3398 = vor.u32 %v2914, %v3396
      %v3399 = vshll.u32 %v3303, 16
      %v3401 = vrot.slane %v3399, 1
      %v3402 = vsel %vm2269, %v3398, %v3401
      %v3403 = vshrl.u32 %v3303, 16
      %v3405 = vor.u32 %v3403, %v3401
      %v3410 = vunpack.c.l.b16 %v3381
      %v3411 = vunpack.c.l.b16 %v3382
      %v3412 = vunpack.c.l.b16 %v3383
      %v3413 = vunpack.c.l.b16 %v3384
      %v3414 = vpack.c.b16 %v3411, %v3410
      %v3415 = vpack.c.b16 %v3413, %v3412
      %v3419 = vsel %vm793, %v3388, 0
      %v3422 = vsel %vm793, %v3391, 0
      %v3425 = vsel %vm793, %v3394, 0
      %v3428 = vsel %vm793, %v3397, 0
      %v3431 = vsel %vm793, %v3402, 0
      %v3434 = vsel %vm793, %v3405, 0
      %3436 = vmatpush.bf16.msra.mxu0 0
      %3437 = vmatpush.bf16.msra.mxu0 0
      %3438 = vmatpush.bf16.msra.mxu0 0
      %3439 = vmatpush.bf16.msra.mxu0 0
      %3440 = vmatpush.bf16.msra.mxu0 0
      %3441 = vmatpush.bf16.msra.mxu0 0
      %3442 = vmatpush.bf16.msra.mxu0 %v3415
      %3443 = vmatpush.bf16.msra.mxu0 %v3414
      %3444 = vmatmul.bf16.gmra.mxu0 %v3419
      %v3445 = vpop.f32.mrf.mxu0
      %v3446 = vadd.f32 0.0, %v3445
      %v3447 = vpop.f32.mrf.mxu0
      %v3448 = vadd.f32 0.0, %v3447
      %3449 = vmatmul.bf16.gmra.mxu0 %v3422
      %v3450 = vpop.f32.mrf.mxu0
      %v3451 = vadd.f32 0.0, %v3450
      %v3452 = vpop.f32.mrf.mxu0
      %v3453 = vadd.f32 0.0, %v3452
      %3454 = vmatmul.bf16.gmra.mxu0 %v3425
      %v3455 = vpop.f32.mrf.mxu0
      %v3456 = vadd.f32 0.0, %v3455
      %v3457 = vpop.f32.mrf.mxu0
      %v3458 = vadd.f32 0.0, %v3457
      %3459 = vmatmul.bf16.gmra.mxu0 %v3428
      %v3460 = vpop.f32.mrf.mxu0
      %v3461 = vadd.f32 0.0, %v3460
      %v3462 = vpop.f32.mrf.mxu0
      %v3463 = vadd.f32 0.0, %v3462
      %3464 = vmatmul.bf16.gmra.mxu0 %v3431
      %v3465 = vpop.f32.mrf.mxu0
      %v3466 = vadd.f32 0.0, %v3465
      %v3467 = vpop.f32.mrf.mxu0
      %v3468 = vadd.f32 0.0, %v3467
      %3469 = vmatmul.bf16.gmra.mxu0 %v3434
      %v3470 = vpop.f32.mrf.mxu0
      %v3471 = vadd.f32 0.0, %v3470
      %v3472 = vpop.f32.mrf.mxu0
      %v3473 = vadd.f32 0.0, %v3472
      %3474 = vdwg.mxu0
      %v3475 = vadd.f32 %v3368, %v3446
      %v3476 = vadd.f32 %v3369, %v3448
      %v3477 = vadd.f32 %v3370, %v3451
      %v3478 = vadd.f32 %v3371, %v3453
      %v3479 = vadd.f32 %v3372, %v3456
      %v3480 = vadd.f32 %v3373, %v3458
      %v3481 = vadd.f32 %v3374, %v3461
      %v3482 = vadd.f32 %v3375, %v3463
      %v3483 = vadd.f32 %v3376, %v3466
      %v3484 = vadd.f32 %v3377, %v3468
      %v3485 = vadd.f32 %v3378, %v3471
      %v3486 = vadd.f32 %v3379, %v3473
      %s3487 = scalar_lea.vmem %s4, 192
      %v3488 = vld [vmem:[%s3487] sm:$0xf]
      %v3489 = vld [vmem:[%s3487 + $0x4] sm:$0xf]
      %v3490 = vld [vmem:[%s3487 + $0x8] sm:$0xf]
      %v3491 = vld [vmem:[%s3487 + $0xc] sm:$0xf]
      %v3492 = vrot.slane %v2763, 1
      %v3493 = vrot.slane %v2764, 1
      %v3494 = vsel %vm2454, %v3492, %v3493
      %v3495 = vrot.slane %v2765, 1
      %v3496 = vsel %vm2454, %v3493, %v3495
      %v3497 = vrot.slane %v2766, 1
      %v3498 = vsel %vm2454, %v3495, %v3497
      %v3499 = vrot.slane %v2767, 1
      %v3500 = vsel %vm2454, %v3497, %v3499
      %v3501 = vrot.slane %v3303, 1
      %v3502 = vsel %vm2454, %v3499, %v3501
      %v3507 = vunpack.c.l.b16 %v3488
      %v3508 = vunpack.c.l.b16 %v3489
      %v3509 = vunpack.c.l.b16 %v3490
      %v3510 = vunpack.c.l.b16 %v3491
      %v3511 = vpack.c.b16 %v3508, %v3507
      %v3512 = vpack.c.b16 %v3510, %v3509
      %v3516 = vsel %vm793, %v3494, 0
      %v3519 = vsel %vm793, %v3496, 0
      %v3522 = vsel %vm793, %v3498, 0
      %v3525 = vsel %vm793, %v3500, 0
      %v3528 = vsel %vm793, %v3502, 0
      %v3531 = vsel %vm793, %v3501, 0
      %3533 = vmatpush.bf16.msra.mxu0 0
      %3534 = vmatpush.bf16.msra.mxu0 0
      %3535 = vmatpush.bf16.msra.mxu0 0
      %3536 = vmatpush.bf16.msra.mxu0 0
      %3537 = vmatpush.bf16.msra.mxu0 0
      %3538 = vmatpush.bf16.msra.mxu0 0
      %3539 = vmatpush.bf16.msra.mxu0 %v3512
      %3540 = vmatpush.bf16.msra.mxu0 %v3511
      %3541 = vmatmul.bf16.gmra.mxu0 %v3516
      %v3542 = vpop.f32.mrf.mxu0
      %v3543 = vadd.f32 0.0, %v3542
      %v3544 = vpop.f32.mrf.mxu0
      %v3545 = vadd.f32 0.0, %v3544
      %3546 = vmatmul.bf16.gmra.mxu0 %v3519
      %v3547 = vpop.f32.mrf.mxu0
      %v3548 = vadd.f32 0.0, %v3547
      %v3549 = vpop.f32.mrf.mxu0
      %v3550 = vadd.f32 0.0, %v3549
      %3551 = vmatmul.bf16.gmra.mxu0 %v3522
      %v3552 = vpop.f32.mrf.mxu0
      %v3553 = vadd.f32 0.0, %v3552
      %v3554 = vpop.f32.mrf.mxu0
      %v3555 = vadd.f32 0.0, %v3554
      %3556 = vmatmul.bf16.gmra.mxu0 %v3525
      %v3557 = vpop.f32.mrf.mxu0
      %v3558 = vadd.f32 0.0, %v3557
      %v3559 = vpop.f32.mrf.mxu0
      %v3560 = vadd.f32 0.0, %v3559
      %3561 = vmatmul.bf16.gmra.mxu0 %v3528
      %v3562 = vpop.f32.mrf.mxu0
      %v3563 = vadd.f32 0.0, %v3562
      %v3564 = vpop.f32.mrf.mxu0
      %v3565 = vadd.f32 0.0, %v3564
      %3566 = vmatmul.bf16.gmra.mxu0 %v3531
      %v3567 = vpop.f32.mrf.mxu0
      %v3568 = vadd.f32 0.0, %v3567
      %v3569 = vpop.f32.mrf.mxu0
      %v3570 = vadd.f32 0.0, %v3569
      %3571 = vdwg.mxu0
      %v3572 = vadd.f32 %v3475, %v3543
      %v3573 = vadd.f32 %v3476, %v3545
      %v3574 = vadd.f32 %v3477, %v3548
      %v3575 = vadd.f32 %v3478, %v3550
      %v3576 = vadd.f32 %v3479, %v3553
      %v3577 = vadd.f32 %v3480, %v3555
      %v3578 = vadd.f32 %v3481, %v3558
      %v3579 = vadd.f32 %v3482, %v3560
      %v3580 = vadd.f32 %v3483, %v3563
      %v3581 = vadd.f32 %v3484, %v3565
      %v3582 = vadd.f32 %v3485, %v3568
      %v3583 = vadd.f32 %v3486, %v3570
      %s3584 = scalar_lea.vmem %s4, 208
      %v3585 = vld [vmem:[%s3584] sm:$0xf]
      %v3586 = vld [vmem:[%s3584 + $0x4] sm:$0xf]
      %v3587 = vld [vmem:[%s3584 + $0x8] sm:$0xf]
      %v3588 = vld [vmem:[%s3584 + $0xc] sm:$0xf]
      %v3589 = vrot.slane %v2878, 1
      %v3590 = vrot.slane %v2881, 2
      %v3591 = vor.u32 %v3589, %v3590
      %v3592 = vrot.slane %v2887, 1
      %v3593 = vrot.slane %v2890, 2
      %v3594 = vor.u32 %v3592, %v3593
      %v3595 = vsel %vm2552, %v3591, %v3594
      %v3596 = vrot.slane %v2896, 1
      %v3597 = vrot.slane %v2899, 2
      %v3598 = vor.u32 %v3596, %v3597
      %v3599 = vsel %vm2552, %v3594, %v3598
      %v3600 = vrot.slane %v2905, 1
      %v3601 = vrot.slane %v2908, 2
      %v3602 = vor.u32 %v3600, %v3601
      %v3603 = vsel %vm2552, %v3598, %v3602
      %v3604 = vrot.slane %v2914, 1
      %v3605 = vrot.slane %v2917, 2
      %v3606 = vor.u32 %v3604, %v3605
      %v3607 = vsel %vm2552, %v3602, %v3606
      %v3608 = vrot.slane %v3403, 1
      %v3609 = vrot.slane %v3399, 2
      %v3610 = vor.u32 %v3608, %v3609
      %v3611 = vsel %vm2552, %v3606, %v3610
      %v3616 = vunpack.c.l.b16 %v3585
      %v3617 = vunpack.c.l.b16 %v3586
      %v3618 = vunpack.c.l.b16 %v3587
      %v3619 = vunpack.c.l.b16 %v3588
      %v3620 = vpack.c.b16 %v3617, %v3616
      %v3621 = vpack.c.b16 %v3619, %v3618
      %v3625 = vsel %vm793, %v3595, 0
      %v3628 = vsel %vm793, %v3599, 0
      %v3631 = vsel %vm793, %v3603, 0
      %v3634 = vsel %vm793, %v3607, 0
      %v3637 = vsel %vm793, %v3611, 0
      %v3640 = vsel %vm793, %v3610, 0
      %3642 = vmatpush.bf16.msra.mxu0 0
      %3643 = vmatpush.bf16.msra.mxu0 0
      %3644 = vmatpush.bf16.msra.mxu0 0
      %3645 = vmatpush.bf16.msra.mxu0 0
      %3646 = vmatpush.bf16.msra.mxu0 0
      %3647 = vmatpush.bf16.msra.mxu0 0
      %3648 = vmatpush.bf16.msra.mxu0 %v3621
      %3649 = vmatpush.bf16.msra.mxu0 %v3620
      %3650 = vmatmul.bf16.gmra.mxu0 %v3625
      %v3651 = vpop.f32.mrf.mxu0
      %v3652 = vadd.f32 0.0, %v3651
      %v3653 = vpop.f32.mrf.mxu0
      %v3654 = vadd.f32 0.0, %v3653
      %3655 = vmatmul.bf16.gmra.mxu0 %v3628
      %v3656 = vpop.f32.mrf.mxu0
      %v3657 = vadd.f32 0.0, %v3656
      %v3658 = vpop.f32.mrf.mxu0
      %v3659 = vadd.f32 0.0, %v3658
      %3660 = vmatmul.bf16.gmra.mxu0 %v3631
      %v3661 = vpop.f32.mrf.mxu0
      %v3662 = vadd.f32 0.0, %v3661
      %v3663 = vpop.f32.mrf.mxu0
      %v3664 = vadd.f32 0.0, %v3663
      %3665 = vmatmul.bf16.gmra.mxu0 %v3634
      %v3666 = vpop.f32.mrf.mxu0
      %v3667 = vadd.f32 0.0, %v3666
      %v3668 = vpop.f32.mrf.mxu0
      %v3669 = vadd.f32 0.0, %v3668
      %3670 = vmatmul.bf16.gmra.mxu0 %v3637
      %v3671 = vpop.f32.mrf.mxu0
      %v3672 = vadd.f32 0.0, %v3671
      %v3673 = vpop.f32.mrf.mxu0
      %v3674 = vadd.f32 0.0, %v3673
      %3675 = vmatmul.bf16.gmra.mxu0 %v3640
      %v3676 = vpop.f32.mrf.mxu0
      %v3677 = vadd.f32 0.0, %v3676
      %v3678 = vpop.f32.mrf.mxu0
      %v3679 = vadd.f32 0.0, %v3678
      %3680 = vdwg.mxu0
      %v3681 = vadd.f32 %v3572, %v3652
      %v3682 = vadd.f32 %v3573, %v3654
      %v3683 = vadd.f32 %v3574, %v3657
      %v3684 = vadd.f32 %v3575, %v3659
      %v3685 = vadd.f32 %v3576, %v3662
      %v3686 = vadd.f32 %v3577, %v3664
      %v3687 = vadd.f32 %v3578, %v3667
      %v3688 = vadd.f32 %v3579, %v3669
      %v3689 = vadd.f32 %v3580, %v3672
      %v3690 = vadd.f32 %v3581, %v3674
      %v3691 = vadd.f32 %v3582, %v3677
      %v3692 = vadd.f32 %v3583, %v3679
      %s3693 = scalar_lea.vmem %s4, 224
      %v3694 = vld [vmem:[%s3693] sm:$0xf]
      %v3695 = vld [vmem:[%s3693 + $0x4] sm:$0xf]
      %v3696 = vld [vmem:[%s3693 + $0x8] sm:$0xf]
      %v3697 = vld [vmem:[%s3693 + $0xc] sm:$0xf]
      %v3698 = vrot.slane %v3303, 2
      %v3699 = vsel %vm2662, %v2777, %v3698
      %v3704 = vunpack.c.l.b16 %v3694
      %v3705 = vunpack.c.l.b16 %v3695
      %v3706 = vunpack.c.l.b16 %v3696
      %v3707 = vunpack.c.l.b16 %v3697
      %v3708 = vpack.c.b16 %v3705, %v3704
      %v3709 = vpack.c.b16 %v3707, %v3706
      %v3713 = vsel %vm793, %v3699, 0
      %v3716 = vsel %vm793, %v3698, 0
      %3718 = vmatpush.bf16.msra.mxu0 0
      %3719 = vmatpush.bf16.msra.mxu0 0
      %3720 = vmatpush.bf16.msra.mxu0 0
      %3721 = vmatpush.bf16.msra.mxu0 0
      %3722 = vmatpush.bf16.msra.mxu0 0
      %3723 = vmatpush.bf16.msra.mxu0 0
      %3724 = vmatpush.bf16.msra.mxu0 %v3709
      %3725 = vmatpush.bf16.msra.mxu0 %v3708
      %3726 = vmatmul.bf16.gmra.mxu0 %v2795
      %v3727 = vpop.f32.mrf.mxu0
      %v3728 = vadd.f32 0.0, %v3727
      %v3729 = vpop.f32.mrf.mxu0
      %v3730 = vadd.f32 0.0, %v3729
      %3731 = vmatmul.bf16.gmra.mxu0 %v2798
      %v3732 = vpop.f32.mrf.mxu0
      %v3733 = vadd.f32 0.0, %v3732
      %v3734 = vpop.f32.mrf.mxu0
      %v3735 = vadd.f32 0.0, %v3734
      %3736 = vmatmul.bf16.gmra.mxu0 %v2801
      %v3737 = vpop.f32.mrf.mxu0
      %v3738 = vadd.f32 0.0, %v3737
      %v3739 = vpop.f32.mrf.mxu0
      %v3740 = vadd.f32 0.0, %v3739
      %3741 = vmatmul.bf16.gmra.mxu0 %v2804
      %v3742 = vpop.f32.mrf.mxu0
      %v3743 = vadd.f32 0.0, %v3742
      %v3744 = vpop.f32.mrf.mxu0
      %v3745 = vadd.f32 0.0, %v3744
      %3746 = vmatmul.bf16.gmra.mxu0 %v3713
      %v3747 = vpop.f32.mrf.mxu0
      %v3748 = vadd.f32 0.0, %v3747
      %v3749 = vpop.f32.mrf.mxu0
      %v3750 = vadd.f32 0.0, %v3749
      %3751 = vmatmul.bf16.gmra.mxu0 %v3716
      %v3752 = vpop.f32.mrf.mxu0
      %v3753 = vadd.f32 0.0, %v3752
      %v3754 = vpop.f32.mrf.mxu0
      %v3755 = vadd.f32 0.0, %v3754
      %3756 = vdwg.mxu0
      %v3757 = vadd.f32 %v3681, %v3728
      %v3758 = vadd.f32 %v3682, %v3730
      %v3759 = vadd.f32 %v3683, %v3733
      %v3760 = vadd.f32 %v3684, %v3735
      %v3761 = vadd.f32 %v3685, %v3738
      %v3762 = vadd.f32 %v3686, %v3740
      %v3763 = vadd.f32 %v3687, %v3743
      %v3764 = vadd.f32 %v3688, %v3745
      %v3765 = vadd.f32 %v3689, %v3748
      %v3766 = vadd.f32 %v3690, %v3750
      %v3767 = vadd.f32 %v3691, %v3753
      %v3768 = vadd.f32 %v3692, %v3755
      %s3769 = scalar_lea.vmem %s4, 240
      %v3770 = vld [vmem:[%s3769] sm:$0xf]
      %v3771 = vld [vmem:[%s3769 + $0x4] sm:$0xf]
      %v3772 = vld [vmem:[%s3769 + $0x8] sm:$0xf]
      %v3773 = vld [vmem:[%s3769 + $0xc] sm:$0xf]
      %v3775 = vunpack.c.l.b16 %v2226
      %v3776 = vpack.c.b16 %v3775, %v3302
      %v3777 = vrot.slane %v3229, 2
      %v3778 = vsel %vm2662, %v2672, %v3777
      %v3779 = vrot.slane %v3776, 2
      %v3780 = vsel %vm2662, %v3777, %v3779
      %v3785 = vunpack.c.l.b16 %v3770
      %v3786 = vunpack.c.l.b16 %v3771
      %v3787 = vunpack.c.l.b16 %v3772
      %v3788 = vunpack.c.l.b16 %v3773
      %v3789 = vpack.c.b16 %v3786, %v3785
      %v3790 = vpack.c.b16 %v3788, %v3787
      %v3794 = vsel %vm793, %v3778, 0
      %v3797 = vsel %vm793, %v3780, 0
      %v3800 = vsel %vm793, %v3779, 0
      %3802 = vmatpush.bf16.msra.mxu0 0
      %3803 = vmatpush.bf16.msra.mxu0 0
      %3804 = vmatpush.bf16.msra.mxu0 0
      %3805 = vmatpush.bf16.msra.mxu0 0
      %3806 = vmatpush.bf16.msra.mxu0 0
      %3807 = vmatpush.bf16.msra.mxu0 0
      %3808 = vmatpush.bf16.msra.mxu0 %v3790
      %3809 = vmatpush.bf16.msra.mxu0 %v3789
      %3810 = vmatmul.bf16.gmra.mxu0 %v2693
      %v3811 = vpop.f32.mrf.mxu0
      %v3812 = vadd.f32 0.0, %v3811
      %v3813 = vpop.f32.mrf.mxu0
      %v3814 = vadd.f32 0.0, %v3813
      %3815 = vmatmul.bf16.gmra.mxu0 %v2696
      %v3816 = vpop.f32.mrf.mxu0
      %v3817 = vadd.f32 0.0, %v3816
      %v3818 = vpop.f32.mrf.mxu0
      %v3819 = vadd.f32 0.0, %v3818
      %3820 = vmatmul.bf16.gmra.mxu0 %v2699
      %v3821 = vpop.f32.mrf.mxu0
      %v3822 = vadd.f32 0.0, %v3821
      %v3823 = vpop.f32.mrf.mxu0
      %v3824 = vadd.f32 0.0, %v3823
      %3825 = vmatmul.bf16.gmra.mxu0 %v3794
      %v3826 = vpop.f32.mrf.mxu0
      %v3827 = vadd.f32 0.0, %v3826
      %v3828 = vpop.f32.mrf.mxu0
      %v3829 = vadd.f32 0.0, %v3828
      %3830 = vmatmul.bf16.gmra.mxu0 %v3797
      %v3831 = vpop.f32.mrf.mxu0
      %v3832 = vadd.f32 0.0, %v3831
      %v3833 = vpop.f32.mrf.mxu0
      %v3834 = vadd.f32 0.0, %v3833
      %3835 = vmatmul.bf16.gmra.mxu0 %v3800
      %v3836 = vpop.f32.mrf.mxu0
      %v3837 = vadd.f32 0.0, %v3836
      %v3838 = vpop.f32.mrf.mxu0
      %v3839 = vadd.f32 0.0, %v3838
      %3840 = vdwg.mxu0
      %v3841 = vadd.f32 %v3757, %v3812
      %v3842 = vadd.f32 %v3758, %v3814
      %v3843 = vadd.f32 %v3759, %v3817
      %v3844 = vadd.f32 %v3760, %v3819
      %v3845 = vadd.f32 %v3761, %v3822
      %v3846 = vadd.f32 %v3762, %v3824
      %v3847 = vadd.f32 %v3763, %v3827
      %v3848 = vadd.f32 %v3764, %v3829
      %v3849 = vadd.f32 %v3765, %v3832
      %v3850 = vadd.f32 %v3766, %v3834
      %v3851 = vadd.f32 %v3767, %v3837
      %v3852 = vadd.f32 %v3768, %v3839
      %s3853 = scalar_lea.vmem %s4, 256
      %v3854 = vld [vmem:[%s3853] sm:$0xf]
      %v3855 = vld [vmem:[%s3853 + $0x4] sm:$0xf]
      %v3856 = vld [vmem:[%s3853 + $0x8] sm:$0xf]
      %v3857 = vld [vmem:[%s3853 + $0xc] sm:$0xf]
      %v3859 = vunpack.c.l.b16 %v2227
      %v3860 = vpack.c.b16 %v3859, %v3859
      %v3861 = vrot.slane %v2290, 2
      %v3862 = vrot.slane %v2286, 3
      %v3863 = vor.u32 %v3861, %v3862
      %v3864 = vrot.slane %v2298, 2
      %v3865 = vrot.slane %v2294, 3
      %v3866 = vor.u32 %v3864, %v3865
      %v3867 = vsel %vm2868, %v3863, %v3866
      %v3868 = vrot.slane %v2306, 2
      %v3869 = vrot.slane %v2302, 3
      %v3870 = vor.u32 %v3868, %v3869
      %v3871 = vsel %vm2868, %v3866, %v3870
      %v3872 = vrot.slane %v2314, 2
      %v3873 = vrot.slane %v2310, 3
      %v3874 = vor.u32 %v3872, %v3873
      %v3875 = vsel %vm2868, %v3870, %v3874
      %v3876 = vshrl.u32 %v3229, 16
      %v3878 = vrot.slane %v3876, 2
      %v3879 = vshll.u32 %v3229, 16
      %v3881 = vrot.slane %v3879, 3
      %v3882 = vor.u32 %v3878, %v3881
      %v3883 = vsel %vm2868, %v3874, %v3882
      %v3885 = vshrl.u32 %v3776, 16
      %v3887 = vrot.slane %v3885, 2
      %v3888 = vshll.u32 %v3776, 16
      %v3890 = vrot.slane %v3888, 3
      %v3891 = vor.u32 %v3887, %v3890
      %v3892 = vsel %vm2868, %v3882, %v3891
      %v3894 = vshll.u32 %v3860, 16
      %v3896 = vrot.slane %v3894, 3
      %v3897 = vsel %vm2868, %v3891, %v3896
      %v3902 = vunpack.c.l.b16 %v3854
      %v3903 = vunpack.c.l.b16 %v3855
      %v3904 = vunpack.c.l.b16 %v3856
      %v3905 = vunpack.c.l.b16 %v3857
      %v3906 = vpack.c.b16 %v3903, %v3902
      %v3907 = vpack.c.b16 %v3905, %v3904
      %v3911 = vsel %vm793, %v3867, 0
      %v3914 = vsel %vm793, %v3871, 0
      %v3917 = vsel %vm793, %v3875, 0
      %v3920 = vsel %vm793, %v3883, 0
      %v3923 = vsel %vm793, %v3892, 0
      %v3926 = vsel %vm793, %v3897, 0
      %3928 = vmatpush.bf16.msra.mxu0 0
      %3929 = vmatpush.bf16.msra.mxu0 0
      %3930 = vmatpush.bf16.msra.mxu0 0
      %3931 = vmatpush.bf16.msra.mxu0 0
      %3932 = vmatpush.bf16.msra.mxu0 0
      %3933 = vmatpush.bf16.msra.mxu0 0
      %3934 = vmatpush.bf16.msra.mxu0 %v3907
      %3935 = vmatpush.bf16.msra.mxu0 %v3906
      %3936 = vmatmul.bf16.gmra.mxu0 %v3911
      %v3937 = vpop.f32.mrf.mxu0
      %v3938 = vadd.f32 0.0, %v3937
      %v3939 = vpop.f32.mrf.mxu0
      %v3940 = vadd.f32 0.0, %v3939
      %3941 = vmatmul.bf16.gmra.mxu0 %v3914
      %v3942 = vpop.f32.mrf.mxu0
      %v3943 = vadd.f32 0.0, %v3942
      %v3944 = vpop.f32.mrf.mxu0
      %v3945 = vadd.f32 0.0, %v3944
      %3946 = vmatmul.bf16.gmra.mxu0 %v3917
      %v3947 = vpop.f32.mrf.mxu0
      %v3948 = vadd.f32 0.0, %v3947
      %v3949 = vpop.f32.mrf.mxu0
      %v3950 = vadd.f32 0.0, %v3949
      %3951 = vmatmul.bf16.gmra.mxu0 %v3920
      %v3952 = vpop.f32.mrf.mxu0
      %v3953 = vadd.f32 0.0, %v3952
      %v3954 = vpop.f32.mrf.mxu0
      %v3955 = vadd.f32 0.0, %v3954
      %3956 = vmatmul.bf16.gmra.mxu0 %v3923
      %v3957 = vpop.f32.mrf.mxu0
      %v3958 = vadd.f32 0.0, %v3957
      %v3959 = vpop.f32.mrf.mxu0
      %v3960 = vadd.f32 0.0, %v3959
      %3961 = vmatmul.bf16.gmra.mxu0 %v3926
      %v3962 = vpop.f32.mrf.mxu0
      %v3963 = vadd.f32 0.0, %v3962
      %v3964 = vpop.f32.mrf.mxu0
      %v3965 = vadd.f32 0.0, %v3964
      %3966 = vdwg.mxu0
      %v3967 = vadd.f32 %v3841, %v3938
      %v3968 = vadd.f32 %v3842, %v3940
      %v3969 = vadd.f32 %v3843, %v3943
      %v3970 = vadd.f32 %v3844, %v3945
      %v3971 = vadd.f32 %v3845, %v3948
      %v3972 = vadd.f32 %v3846, %v3950
      %v3973 = vadd.f32 %v3847, %v3953
      %v3974 = vadd.f32 %v3848, %v3955
      %v3975 = vadd.f32 %v3849, %v3958
      %v3976 = vadd.f32 %v3850, %v3960
      %v3977 = vadd.f32 %v3851, %v3963
      %v3978 = vadd.f32 %v3852, %v3965
      %s3979 = scalar_lea.vmem %s4, 272
      %v3980 = vld [vmem:[%s3979] sm:$0xf]
      %v3981 = vld [vmem:[%s3979 + $0x4] sm:$0xf]
      %v3982 = vld [vmem:[%s3979 + $0x8] sm:$0xf]
      %v3983 = vld [vmem:[%s3979 + $0xc] sm:$0xf]
      %v3984 = vrot.slane %v2265, 3
      %v3985 = vrot.slane %v2266, 3
      %v3986 = vsel %vm3013, %v3984, %v3985
      %v3987 = vrot.slane %v2267, 3
      %v3988 = vsel %vm3013, %v3985, %v3987
      %v3989 = vrot.slane %v2268, 3
      %v3990 = vsel %vm3013, %v3987, %v3989
      %v3991 = vrot.slane %v3229, 3
      %v3992 = vsel %vm3013, %v3989, %v3991
      %v3993 = vrot.slane %v3776, 3
      %v3994 = vsel %vm3013, %v3991, %v3993
      %v3995 = vrot.slane %v3860, 3
      %v3996 = vsel %vm3013, %v3993, %v3995
      %v4001 = vunpack.c.l.b16 %v3980
      %v4002 = vunpack.c.l.b16 %v3981
      %v4003 = vunpack.c.l.b16 %v3982
      %v4004 = vunpack.c.l.b16 %v3983
      %v4005 = vpack.c.b16 %v4002, %v4001
      %v4006 = vpack.c.b16 %v4004, %v4003
      %v4010 = vsel %vm793, %v3986, 0
      %v4013 = vsel %vm793, %v3988, 0
      %v4016 = vsel %vm793, %v3990, 0
      %v4019 = vsel %vm793, %v3992, 0
      %v4022 = vsel %vm793, %v3994, 0
      %v4025 = vsel %vm793, %v3996, 0
      %4027 = vmatpush.bf16.msra.mxu0 0
      %4028 = vmatpush.bf16.msra.mxu0 0
      %4029 = vmatpush.bf16.msra.mxu0 0
      %4030 = vmatpush.bf16.msra.mxu0 0
      %4031 = vmatpush.bf16.msra.mxu0 0
      %4032 = vmatpush.bf16.msra.mxu0 0
      %4033 = vmatpush.bf16.msra.mxu0 %v4006
      %4034 = vmatpush.bf16.msra.mxu0 %v4005
      %4035 = vmatmul.bf16.gmra.mxu0 %v4010
      %v4036 = vpop.f32.mrf.mxu0
      %v4037 = vadd.f32 0.0, %v4036
      %v4038 = vpop.f32.mrf.mxu0
      %v4039 = vadd.f32 0.0, %v4038
      %4040 = vmatmul.bf16.gmra.mxu0 %v4013
      %v4041 = vpop.f32.mrf.mxu0
      %v4042 = vadd.f32 0.0, %v4041
      %v4043 = vpop.f32.mrf.mxu0
      %v4044 = vadd.f32 0.0, %v4043
      %4045 = vmatmul.bf16.gmra.mxu0 %v4016
      %v4046 = vpop.f32.mrf.mxu0
      %v4047 = vadd.f32 0.0, %v4046
      %v4048 = vpop.f32.mrf.mxu0
      %v4049 = vadd.f32 0.0, %v4048
      %4050 = vmatmul.bf16.gmra.mxu0 %v4019
      %v4051 = vpop.f32.mrf.mxu0
      %v4052 = vadd.f32 0.0, %v4051
      %v4053 = vpop.f32.mrf.mxu0
      %v4054 = vadd.f32 0.0, %v4053
      %4055 = vmatmul.bf16.gmra.mxu0 %v4022
      %v4056 = vpop.f32.mrf.mxu0
      %v4057 = vadd.f32 0.0, %v4056
      %v4058 = vpop.f32.mrf.mxu0
      %v4059 = vadd.f32 0.0, %v4058
      %4060 = vmatmul.bf16.gmra.mxu0 %v4025
      %v4061 = vpop.f32.mrf.mxu0
      %v4062 = vadd.f32 0.0, %v4061
      %v4063 = vpop.f32.mrf.mxu0
      %v4064 = vadd.f32 0.0, %v4063
      %4065 = vdwg.mxu0
      %v4066 = vadd.f32 %v3967, %v4037
      %v4067 = vadd.f32 %v3968, %v4039
      %v4068 = vadd.f32 %v3969, %v4042
      %v4069 = vadd.f32 %v3970, %v4044
      %v4070 = vadd.f32 %v3971, %v4047
      %v4071 = vadd.f32 %v3972, %v4049
      %v4072 = vadd.f32 %v3973, %v4052
      %v4073 = vadd.f32 %v3974, %v4054
      %v4074 = vadd.f32 %v3975, %v4057
      %v4075 = vadd.f32 %v3976, %v4059
      %v4076 = vadd.f32 %v3977, %v4062
      %v4077 = vadd.f32 %v3978, %v4064
      %s4078 = scalar_lea.vmem %s4, 288
      %v4079 = vld [vmem:[%s4078] sm:$0xf]
      %v4080 = vld [vmem:[%s4078 + $0x4] sm:$0xf]
      %v4081 = vld [vmem:[%s4078 + $0x8] sm:$0xf]
      %v4082 = vld [vmem:[%s4078 + $0xc] sm:$0xf]
      %v4083 = vrot.slane %v2290, 3
      %v4084 = vrot.slane %v2286, 4
      %v4085 = vor.u32 %v4083, %v4084
      %v4086 = vrot.slane %v2298, 3
      %v4087 = vrot.slane %v2294, 4
      %v4088 = vor.u32 %v4086, %v4087
      %v4089 = vsel %vm3113, %v4085, %v4088
      %v4090 = vrot.slane %v2306, 3
      %v4091 = vrot.slane %v2302, 4
      %v4092 = vor.u32 %v4090, %v4091
      %v4093 = vsel %vm3113, %v4088, %v4092
      %v4094 = vrot.slane %v2314, 3
      %v4095 = vrot.slane %v2310, 4
      %v4096 = vor.u32 %v4094, %v4095
      %v4097 = vsel %vm3113, %v4092, %v4096
      %v4098 = vrot.slane %v3876, 3
      %v4099 = vrot.slane %v3879, 4
      %v4100 = vor.u32 %v4098, %v4099
      %v4101 = vsel %vm3113, %v4096, %v4100
      %v4102 = vrot.slane %v3885, 3
      %v4103 = vrot.slane %v3888, 4
      %v4104 = vor.u32 %v4102, %v4103
      %v4105 = vsel %vm3113, %v4100, %v4104
      %v4106 = vshrl.u32 %v3860, 16
      %v4108 = vrot.slane %v4106, 3
      %v4109 = vrot.slane %v3894, 4
      %v4110 = vor.u32 %v4108, %v4109
      %v4111 = vsel %vm3113, %v4104, %v4110
      %v4116 = vunpack.c.l.b16 %v4079
      %v4117 = vunpack.c.l.b16 %v4080
      %v4118 = vunpack.c.l.b16 %v4081
      %v4119 = vunpack.c.l.b16 %v4082
      %v4120 = vpack.c.b16 %v4117, %v4116
      %v4121 = vpack.c.b16 %v4119, %v4118
      %v4125 = vsel %vm793, %v4089, 0
      %v4128 = vsel %vm793, %v4093, 0
      %v4131 = vsel %vm793, %v4097, 0
      %v4134 = vsel %vm793, %v4101, 0
      %v4137 = vsel %vm793, %v4105, 0
      %v4140 = vsel %vm793, %v4111, 0
      %4142 = vmatpush.bf16.msra.mxu0 0
      %4143 = vmatpush.bf16.msra.mxu0 0
      %4144 = vmatpush.bf16.msra.mxu0 0
      %4145 = vmatpush.bf16.msra.mxu0 0
      %4146 = vmatpush.bf16.msra.mxu0 0
      %4147 = vmatpush.bf16.msra.mxu0 0
      %4148 = vmatpush.bf16.msra.mxu0 %v4121
      %4149 = vmatpush.bf16.msra.mxu0 %v4120
      %4150 = vmatmul.bf16.gmra.mxu0 %v4125
      %v4151 = vpop.f32.mrf.mxu0
      %v4152 = vadd.f32 0.0, %v4151
      %v4153 = vpop.f32.mrf.mxu0
      %v4154 = vadd.f32 0.0, %v4153
      %4155 = vmatmul.bf16.gmra.mxu0 %v4128
      %v4156 = vpop.f32.mrf.mxu0
      %v4157 = vadd.f32 0.0, %v4156
      %v4158 = vpop.f32.mrf.mxu0
      %v4159 = vadd.f32 0.0, %v4158
      %4160 = vmatmul.bf16.gmra.mxu0 %v4131
      %v4161 = vpop.f32.mrf.mxu0
      %v4162 = vadd.f32 0.0, %v4161
      %v4163 = vpop.f32.mrf.mxu0
      %v4164 = vadd.f32 0.0, %v4163
      %4165 = vmatmul.bf16.gmra.mxu0 %v4134
      %v4166 = vpop.f32.mrf.mxu0
      %v4167 = vadd.f32 0.0, %v4166
      %v4168 = vpop.f32.mrf.mxu0
      %v4169 = vadd.f32 0.0, %v4168
      %4170 = vmatmul.bf16.gmra.mxu0 %v4137
      %v4171 = vpop.f32.mrf.mxu0
      %v4172 = vadd.f32 0.0, %v4171
      %v4173 = vpop.f32.mrf.mxu0
      %v4174 = vadd.f32 0.0, %v4173
      %4175 = vmatmul.bf16.gmra.mxu0 %v4140
      %v4176 = vpop.f32.mrf.mxu0
      %v4177 = vadd.f32 0.0, %v4176
      %v4178 = vpop.f32.mrf.mxu0
      %v4179 = vadd.f32 0.0, %v4178
      %4180 = vdwg.mxu0
      %v4181 = vadd.f32 %v4066, %v4152
      %v4182 = vadd.f32 %v4067, %v4154
      %v4183 = vadd.f32 %v4068, %v4157
      %v4184 = vadd.f32 %v4069, %v4159
      %v4185 = vadd.f32 %v4070, %v4162
      %v4186 = vadd.f32 %v4071, %v4164
      %v4187 = vadd.f32 %v4072, %v4167
      %v4188 = vadd.f32 %v4073, %v4169
      %v4189 = vadd.f32 %v4074, %v4172
      %v4190 = vadd.f32 %v4075, %v4174
      %v4191 = vadd.f32 %v4076, %v4177
      %v4192 = vadd.f32 %v4077, %v4179
      %s4193 = scalar_lea.vmem %s4, 304
      %v4194 = vld [vmem:[%s4193] sm:$0xf]
      %v4195 = vld [vmem:[%s4193 + $0x4] sm:$0xf]
      %v4196 = vld [vmem:[%s4193 + $0x8] sm:$0xf]
      %v4197 = vld [vmem:[%s4193 + $0xc] sm:$0xf]
      %v4198 = vpack.c.b16 %v3859, %v3775
      %v4203 = vunpack.c.l.b16 %v4194
      %v4204 = vunpack.c.l.b16 %v4195
      %v4205 = vunpack.c.l.b16 %v4196
      %v4206 = vunpack.c.l.b16 %v4197
      %v4207 = vpack.c.b16 %v4204, %v4203
      %v4208 = vpack.c.b16 %v4206, %v4205
      %v4212 = vsel %vm793, %v4198, 0
      %4214 = vmatpush.bf16.msra.mxu0 0
      %4215 = vmatpush.bf16.msra.mxu0 0
      %4216 = vmatpush.bf16.msra.mxu0 0
      %4217 = vmatpush.bf16.msra.mxu0 0
      %4218 = vmatpush.bf16.msra.mxu0 0
      %4219 = vmatpush.bf16.msra.mxu0 0
      %4220 = vmatpush.bf16.msra.mxu0 %v4208
      %4221 = vmatpush.bf16.msra.mxu0 %v4207
      %4222 = vmatmul.bf16.gmra.mxu0 %v3318
      %v4223 = vpop.f32.mrf.mxu0
      %v4224 = vadd.f32 0.0, %v4223
      %v4225 = vpop.f32.mrf.mxu0
      %v4226 = vadd.f32 0.0, %v4225
      %4227 = vmatmul.bf16.gmra.mxu0 %v3320
      %v4228 = vpop.f32.mrf.mxu0
      %v4229 = vadd.f32 0.0, %v4228
      %v4230 = vpop.f32.mrf.mxu0
      %v4231 = vadd.f32 0.0, %v4230
      %4232 = vmatmul.bf16.gmra.mxu0 %v3322
      %v4233 = vpop.f32.mrf.mxu0
      %v4234 = vadd.f32 0.0, %v4233
      %v4235 = vpop.f32.mrf.mxu0
      %v4236 = vadd.f32 0.0, %v4235
      %4237 = vmatmul.bf16.gmra.mxu0 %v3324
      %v4238 = vpop.f32.mrf.mxu0
      %v4239 = vadd.f32 0.0, %v4238
      %v4240 = vpop.f32.mrf.mxu0
      %v4241 = vadd.f32 0.0, %v4240
      %4242 = vmatmul.bf16.gmra.mxu0 %v3327
      %v4243 = vpop.f32.mrf.mxu0
      %v4244 = vadd.f32 0.0, %v4243
      %v4245 = vpop.f32.mrf.mxu0
      %v4246 = vadd.f32 0.0, %v4245
      %4247 = vmatmul.bf16.gmra.mxu0 %v4212
      %v4248 = vpop.f32.mrf.mxu0
      %v4249 = vadd.f32 0.0, %v4248
      %v4250 = vpop.f32.mrf.mxu0
      %v4251 = vadd.f32 0.0, %v4250
      %4252 = vdwg.mxu0
      %v4253 = vadd.f32 %v4181, %v4224
      %v4254 = vadd.f32 %v4182, %v4226
      %v4255 = vadd.f32 %v4183, %v4229
      %v4256 = vadd.f32 %v4184, %v4231
      %v4257 = vadd.f32 %v4185, %v4234
      %v4258 = vadd.f32 %v4186, %v4236
      %v4259 = vadd.f32 %v4187, %v4239
      %v4260 = vadd.f32 %v4188, %v4241
      %v4261 = vadd.f32 %v4189, %v4244
      %v4262 = vadd.f32 %v4190, %v4246
      %v4263 = vadd.f32 %v4191, %v4249
      %v4264 = vadd.f32 %v4192, %v4251
      %s4265 = scalar_lea.vmem %s4, 320
      %v4266 = vld [vmem:[%s4265] sm:$0xf]
      %v4267 = vld [vmem:[%s4265 + $0x4] sm:$0xf]
      %v4268 = vld [vmem:[%s4265 + $0x8] sm:$0xf]
      %v4269 = vld [vmem:[%s4265 + $0xc] sm:$0xf]
      %v4271 = vunpack.c.l.b16 %v2228
      %v4272 = vpack.c.b16 %v4271, %v3859
      %v4277 = vunpack.c.l.b16 %v4266
      %v4278 = vunpack.c.l.b16 %v4267
      %v4279 = vunpack.c.l.b16 %v4268
      %v4280 = vunpack.c.l.b16 %v4269
      %v4281 = vpack.c.b16 %v4278, %v4277
      %v4282 = vpack.c.b16 %v4280, %v4279
      %v4285 = vsel %vm793, %v3776, 0
      %v4288 = vsel %vm793, %v4272, 0
      %4290 = vmatpush.bf16.msra.mxu0 0
      %4291 = vmatpush.bf16.msra.mxu0 0
      %4292 = vmatpush.bf16.msra.mxu0 0
      %4293 = vmatpush.bf16.msra.mxu0 0
      %4294 = vmatpush.bf16.msra.mxu0 0
      %4295 = vmatpush.bf16.msra.mxu0 0
      %4296 = vmatpush.bf16.msra.mxu0 %v4282
      %4297 = vmatpush.bf16.msra.mxu0 %v4281
      %4298 = vmatmul.bf16.gmra.mxu0 %v2404
      %v4299 = vpop.f32.mrf.mxu0
      %v4300 = vadd.f32 0.0, %v4299
      %v4301 = vpop.f32.mrf.mxu0
      %v4302 = vadd.f32 0.0, %v4301
      %4303 = vmatmul.bf16.gmra.mxu0 %v2406
      %v4304 = vpop.f32.mrf.mxu0
      %v4305 = vadd.f32 0.0, %v4304
      %v4306 = vpop.f32.mrf.mxu0
      %v4307 = vadd.f32 0.0, %v4306
      %4308 = vmatmul.bf16.gmra.mxu0 %v2408
      %v4309 = vpop.f32.mrf.mxu0
      %v4310 = vadd.f32 0.0, %v4309
      %v4311 = vpop.f32.mrf.mxu0
      %v4312 = vadd.f32 0.0, %v4311
      %4313 = vmatmul.bf16.gmra.mxu0 %v3243
      %v4314 = vpop.f32.mrf.mxu0
      %v4315 = vadd.f32 0.0, %v4314
      %v4316 = vpop.f32.mrf.mxu0
      %v4317 = vadd.f32 0.0, %v4316
      %4318 = vmatmul.bf16.gmra.mxu0 %v4285
      %v4319 = vpop.f32.mrf.mxu0
      %v4320 = vadd.f32 0.0, %v4319
      %v4321 = vpop.f32.mrf.mxu0
      %v4322 = vadd.f32 0.0, %v4321
      %4323 = vmatmul.bf16.gmra.mxu0 %v4288
      %v4324 = vpop.f32.mrf.mxu0
      %v4325 = vadd.f32 0.0, %v4324
      %v4326 = vpop.f32.mrf.mxu0
      %v4327 = vadd.f32 0.0, %v4326
      %4328 = vdwg.mxu0
      %v4329 = vadd.f32 %v4253, %v4300
      %v4330 = vadd.f32 %v4254, %v4302
      %v4331 = vadd.f32 %v4255, %v4305
      %v4332 = vadd.f32 %v4256, %v4307
      %v4333 = vadd.f32 %v4257, %v4310
      %v4334 = vadd.f32 %v4258, %v4312
      %v4335 = vadd.f32 %v4259, %v4315
      %v4336 = vadd.f32 %v4260, %v4317
      %v4337 = vadd.f32 %v4261, %v4320
      %v4338 = vadd.f32 %v4262, %v4322
      %v4339 = vadd.f32 %v4263, %v4325
      %v4340 = vadd.f32 %v4264, %v4327
      %s4341 = scalar_lea.vmem %s4, 336
      %v4342 = vld [vmem:[%s4341] sm:$0xf]
      %v4343 = vld [vmem:[%s4341 + $0x4] sm:$0xf]
      %v4344 = vld [vmem:[%s4341 + $0x8] sm:$0xf]
      %v4345 = vld [vmem:[%s4341 + $0xc] sm:$0xf]
      %v4346 = vrot.slane %v3879, 1
      %v4347 = vsel %vm2269, %v2316, %v4346
      %v4348 = vor.u32 %v3876, %v4346
      %v4349 = vrot.slane %v3888, 1
      %v4350 = vsel %vm2269, %v4348, %v4349
      %v4351 = vor.u32 %v3885, %v4349
      %v4352 = vshll.u32 %v4272, 16
      %v4354 = vrot.slane %v4352, 1
      %v4355 = vsel %vm2269, %v4351, %v4354
      %v4356 = vshrl.u32 %v4272, 16
      %v4358 = vor.u32 %v4356, %v4354
      %v4363 = vunpack.c.l.b16 %v4342
      %v4364 = vunpack.c.l.b16 %v4343
      %v4365 = vunpack.c.l.b16 %v4344
      %v4366 = vunpack.c.l.b16 %v4345
      %v4367 = vpack.c.b16 %v4364, %v4363
      %v4368 = vpack.c.b16 %v4366, %v4365
      %v4372 = vsel %vm793, %v4347, 0
      %v4375 = vsel %vm793, %v4350, 0
      %v4378 = vsel %vm793, %v4355, 0
      %v4381 = vsel %vm793, %v4358, 0
      %4383 = vmatpush.bf16.msra.mxu0 0
      %4384 = vmatpush.bf16.msra.mxu0 0
      %4385 = vmatpush.bf16.msra.mxu0 0
      %4386 = vmatpush.bf16.msra.mxu0 0
      %4387 = vmatpush.bf16.msra.mxu0 0
      %4388 = vmatpush.bf16.msra.mxu0 0
      %4389 = vmatpush.bf16.msra.mxu0 %v4368
      %4390 = vmatpush.bf16.msra.mxu0 %v4367
      %4391 = vmatmul.bf16.gmra.mxu0 %v2339
      %v4392 = vpop.f32.mrf.mxu0
      %v4393 = vadd.f32 0.0, %v4392
      %v4394 = vpop.f32.mrf.mxu0
      %v4395 = vadd.f32 0.0, %v4394
      %4396 = vmatmul.bf16.gmra.mxu0 %v2342
      %v4397 = vpop.f32.mrf.mxu0
      %v4398 = vadd.f32 0.0, %v4397
      %v4399 = vpop.f32.mrf.mxu0
      %v4400 = vadd.f32 0.0, %v4399
      %4401 = vmatmul.bf16.gmra.mxu0 %v4372
      %v4402 = vpop.f32.mrf.mxu0
      %v4403 = vadd.f32 0.0, %v4402
      %v4404 = vpop.f32.mrf.mxu0
      %v4405 = vadd.f32 0.0, %v4404
      %4406 = vmatmul.bf16.gmra.mxu0 %v4375
      %v4407 = vpop.f32.mrf.mxu0
      %v4408 = vadd.f32 0.0, %v4407
      %v4409 = vpop.f32.mrf.mxu0
      %v4410 = vadd.f32 0.0, %v4409
      %4411 = vmatmul.bf16.gmra.mxu0 %v4378
      %v4412 = vpop.f32.mrf.mxu0
      %v4413 = vadd.f32 0.0, %v4412
      %v4414 = vpop.f32.mrf.mxu0
      %v4415 = vadd.f32 0.0, %v4414
      %4416 = vmatmul.bf16.gmra.mxu0 %v4381
      %v4417 = vpop.f32.mrf.mxu0
      %v4418 = vadd.f32 0.0, %v4417
      %v4419 = vpop.f32.mrf.mxu0
      %v4420 = vadd.f32 0.0, %v4419
      %4421 = vdwg.mxu0
      %v4422 = vadd.f32 %v4329, %v4393
      %v4423 = vadd.f32 %v4330, %v4395
      %v4424 = vadd.f32 %v4331, %v4398
      %v4425 = vadd.f32 %v4332, %v4400
      %v4426 = vadd.f32 %v4333, %v4403
      %v4427 = vadd.f32 %v4334, %v4405
      %v4428 = vadd.f32 %v4335, %v4408
      %v4429 = vadd.f32 %v4336, %v4410
      %v4430 = vadd.f32 %v4337, %v4413
      %v4431 = vadd.f32 %v4338, %v4415
      %v4432 = vadd.f32 %v4339, %v4418
      %v4433 = vadd.f32 %v4340, %v4420
      %s4434 = scalar_lea.vmem %s4, 352
      %v4435 = vld [vmem:[%s4434] sm:$0xf]
      %v4436 = vld [vmem:[%s4434 + $0x4] sm:$0xf]
      %v4437 = vld [vmem:[%s4434 + $0x8] sm:$0xf]
      %v4438 = vld [vmem:[%s4434 + $0xc] sm:$0xf]
      %v4439 = vrot.slane %v3229, 1
      %v4440 = vsel %vm2454, %v2464, %v4439
      %v4441 = vrot.slane %v3776, 1
      %v4442 = vsel %vm2454, %v4439, %v4441
      %v4443 = vrot.slane %v4272, 1
      %v4444 = vsel %vm2454, %v4441, %v4443
      %v4449 = vunpack.c.l.b16 %v4435
      %v4450 = vunpack.c.l.b16 %v4436
      %v4451 = vunpack.c.l.b16 %v4437
      %v4452 = vunpack.c.l.b16 %v4438
      %v4453 = vpack.c.b16 %v4450, %v4449
      %v4454 = vpack.c.b16 %v4452, %v4451
      %v4458 = vsel %vm793, %v4440, 0
      %v4461 = vsel %vm793, %v4442, 0
      %v4464 = vsel %vm793, %v4444, 0
      %v4467 = vsel %vm793, %v4443, 0
      %4469 = vmatpush.bf16.msra.mxu0 0
      %4470 = vmatpush.bf16.msra.mxu0 0
      %4471 = vmatpush.bf16.msra.mxu0 0
      %4472 = vmatpush.bf16.msra.mxu0 0
      %4473 = vmatpush.bf16.msra.mxu0 0
      %4474 = vmatpush.bf16.msra.mxu0 0
      %4475 = vmatpush.bf16.msra.mxu0 %v4454
      %4476 = vmatpush.bf16.msra.mxu0 %v4453
      %4477 = vmatmul.bf16.gmra.mxu0 %v2488
      %v4478 = vpop.f32.mrf.mxu0
      %v4479 = vadd.f32 0.0, %v4478
      %v4480 = vpop.f32.mrf.mxu0
      %v4481 = vadd.f32 0.0, %v4480
      %4482 = vmatmul.bf16.gmra.mxu0 %v2491
      %v4483 = vpop.f32.mrf.mxu0
      %v4484 = vadd.f32 0.0, %v4483
      %v4485 = vpop.f32.mrf.mxu0
      %v4486 = vadd.f32 0.0, %v4485
      %4487 = vmatmul.bf16.gmra.mxu0 %v4458
      %v4488 = vpop.f32.mrf.mxu0
      %v4489 = vadd.f32 0.0, %v4488
      %v4490 = vpop.f32.mrf.mxu0
      %v4491 = vadd.f32 0.0, %v4490
      %4492 = vmatmul.bf16.gmra.mxu0 %v4461
      %v4493 = vpop.f32.mrf.mxu0
      %v4494 = vadd.f32 0.0, %v4493
      %v4495 = vpop.f32.mrf.mxu0
      %v4496 = vadd.f32 0.0, %v4495
      %4497 = vmatmul.bf16.gmra.mxu0 %v4464
      %v4498 = vpop.f32.mrf.mxu0
      %v4499 = vadd.f32 0.0, %v4498
      %v4500 = vpop.f32.mrf.mxu0
      %v4501 = vadd.f32 0.0, %v4500
      %4502 = vmatmul.bf16.gmra.mxu0 %v4467
      %v4503 = vpop.f32.mrf.mxu0
      %v4504 = vadd.f32 0.0, %v4503
      %v4505 = vpop.f32.mrf.mxu0
      %v4506 = vadd.f32 0.0, %v4505
      %4507 = vdwg.mxu0
      %v4508 = vadd.f32 %v4422, %v4479
      %v4509 = vadd.f32 %v4423, %v4481
      %v4510 = vadd.f32 %v4424, %v4484
      %v4511 = vadd.f32 %v4425, %v4486
      %v4512 = vadd.f32 %v4426, %v4489
      %v4513 = vadd.f32 %v4427, %v4491
      %v4514 = vadd.f32 %v4428, %v4494
      %v4515 = vadd.f32 %v4429, %v4496
      %v4516 = vadd.f32 %v4430, %v4499
      %v4517 = vadd.f32 %v4431, %v4501
      %v4518 = vadd.f32 %v4432, %v4504
      %v4519 = vadd.f32 %v4433, %v4506
      %s4520 = scalar_lea.vmem %s4, 368
      %v4521 = vld [vmem:[%s4520] sm:$0xf]
      %v4522 = vld [vmem:[%s4520 + $0x4] sm:$0xf]
      %v4523 = vld [vmem:[%s4520 + $0x8] sm:$0xf]
      %v4524 = vld [vmem:[%s4520 + $0xc] sm:$0xf]
      %v4525 = vrot.slane %v3876, 1
      %v4526 = vrot.slane %v3879, 2
      %v4527 = vor.u32 %v4525, %v4526
      %v4528 = vsel %vm2552, %v2574, %v4527
      %v4529 = vrot.slane %v3885, 1
      %v4530 = vrot.slane %v3888, 2
      %v4531 = vor.u32 %v4529, %v4530
      %v4532 = vsel %vm2552, %v4527, %v4531
      %v4533 = vrot.slane %v4356, 1
      %v4534 = vrot.slane %v4352, 2
      %v4535 = vor.u32 %v4533, %v4534
      %v4536 = vsel %vm2552, %v4531, %v4535
      %v4541 = vunpack.c.l.b16 %v4521
      %v4542 = vunpack.c.l.b16 %v4522
      %v4543 = vunpack.c.l.b16 %v4523
      %v4544 = vunpack.c.l.b16 %v4524
      %v4545 = vpack.c.b16 %v4542, %v4541
      %v4546 = vpack.c.b16 %v4544, %v4543
      %v4550 = vsel %vm793, %v4528, 0
      %v4553 = vsel %vm793, %v4532, 0
      %v4556 = vsel %vm793, %v4536, 0
      %v4559 = vsel %vm793, %v4535, 0
      %4561 = vmatpush.bf16.msra.mxu0 0
      %4562 = vmatpush.bf16.msra.mxu0 0
      %4563 = vmatpush.bf16.msra.mxu0 0
      %4564 = vmatpush.bf16.msra.mxu0 0
      %4565 = vmatpush.bf16.msra.mxu0 0
      %4566 = vmatpush.bf16.msra.mxu0 0
      %4567 = vmatpush.bf16.msra.mxu0 %v4546
      %4568 = vmatpush.bf16.msra.mxu0 %v4545
      %4569 = vmatmul.bf16.gmra.mxu0 %v2598
      %v4570 = vpop.f32.mrf.mxu0
      %v4571 = vadd.f32 0.0, %v4570
      %v4572 = vpop.f32.mrf.mxu0
      %v4573 = vadd.f32 0.0, %v4572
      %4574 = vmatmul.bf16.gmra.mxu0 %v2601
      %v4575 = vpop.f32.mrf.mxu0
      %v4576 = vadd.f32 0.0, %v4575
      %v4577 = vpop.f32.mrf.mxu0
      %v4578 = vadd.f32 0.0, %v4577
      %4579 = vmatmul.bf16.gmra.mxu0 %v4550
      %v4580 = vpop.f32.mrf.mxu0
      %v4581 = vadd.f32 0.0, %v4580
      %v4582 = vpop.f32.mrf.mxu0
      %v4583 = vadd.f32 0.0, %v4582
      %4584 = vmatmul.bf16.gmra.mxu0 %v4553
      %v4585 = vpop.f32.mrf.mxu0
      %v4586 = vadd.f32 0.0, %v4585
      %v4587 = vpop.f32.mrf.mxu0
      %v4588 = vadd.f32 0.0, %v4587
      %4589 = vmatmul.bf16.gmra.mxu0 %v4556
      %v4590 = vpop.f32.mrf.mxu0
      %v4591 = vadd.f32 0.0, %v4590
      %v4592 = vpop.f32.mrf.mxu0
      %v4593 = vadd.f32 0.0, %v4592
      %4594 = vmatmul.bf16.gmra.mxu0 %v4559
      %v4595 = vpop.f32.mrf.mxu0
      %v4596 = vadd.f32 0.0, %v4595
      %v4597 = vpop.f32.mrf.mxu0
      %v4598 = vadd.f32 0.0, %v4597
      %4599 = vdwg.mxu0
      %v4600 = vadd.f32 %v4508, %v4571
      %v4601 = vadd.f32 %v4509, %v4573
      %v4602 = vadd.f32 %v4510, %v4576
      %v4603 = vadd.f32 %v4511, %v4578
      %v4604 = vadd.f32 %v4512, %v4581
      %v4605 = vadd.f32 %v4513, %v4583
      %v4606 = vadd.f32 %v4514, %v4586
      %v4607 = vadd.f32 %v4515, %v4588
      %v4608 = vadd.f32 %v4516, %v4591
      %v4609 = vadd.f32 %v4517, %v4593
      %v4610 = vadd.f32 %v4518, %v4596
      %v4611 = vadd.f32 %v4519, %v4598
      %s4612 = scalar_lea.vmem %s4, 384
      %v4613 = vld [vmem:[%s4612] sm:$0xf]
      %v4614 = vld [vmem:[%s4612 + $0x4] sm:$0xf]
      %v4615 = vld [vmem:[%s4612 + $0x8] sm:$0xf]
      %v4616 = vld [vmem:[%s4612 + $0xc] sm:$0xf]
      %v4617 = vrot.slane %v4272, 2
      %v4618 = vsel %vm2662, %v3779, %v4617
      %v4623 = vunpack.c.l.b16 %v4613
      %v4624 = vunpack.c.l.b16 %v4614
      %v4625 = vunpack.c.l.b16 %v4615
      %v4626 = vunpack.c.l.b16 %v4616
      %v4627 = vpack.c.b16 %v4624, %v4623
      %v4628 = vpack.c.b16 %v4626, %v4625
      %v4632 = vsel %vm793, %v4618, 0
      %v4635 = vsel %vm793, %v4617, 0
      %4637 = vmatpush.bf16.msra.mxu0 0
      %4638 = vmatpush.bf16.msra.mxu0 0
      %4639 = vmatpush.bf16.msra.mxu0 0
      %4640 = vmatpush.bf16.msra.mxu0 0
      %4641 = vmatpush.bf16.msra.mxu0 0
      %4642 = vmatpush.bf16.msra.mxu0 0
      %4643 = vmatpush.bf16.msra.mxu0 %v4628
      %4644 = vmatpush.bf16.msra.mxu0 %v4627
      %4645 = vmatmul.bf16.gmra.mxu0 %v2696
      %v4646 = vpop.f32.mrf.mxu0
      %v4647 = vadd.f32 0.0, %v4646
      %v4648 = vpop.f32.mrf.mxu0
      %v4649 = vadd.f32 0.0, %v4648
      %4650 = vmatmul.bf16.gmra.mxu0 %v2699
      %v4651 = vpop.f32.mrf.mxu0
      %v4652 = vadd.f32 0.0, %v4651
      %v4653 = vpop.f32.mrf.mxu0
      %v4654 = vadd.f32 0.0, %v4653
      %4655 = vmatmul.bf16.gmra.mxu0 %v3794
      %v4656 = vpop.f32.mrf.mxu0
      %v4657 = vadd.f32 0.0, %v4656
      %v4658 = vpop.f32.mrf.mxu0
      %v4659 = vadd.f32 0.0, %v4658
      %4660 = vmatmul.bf16.gmra.mxu0 %v3797
      %v4661 = vpop.f32.mrf.mxu0
      %v4662 = vadd.f32 0.0, %v4661
      %v4663 = vpop.f32.mrf.mxu0
      %v4664 = vadd.f32 0.0, %v4663
      %4665 = vmatmul.bf16.gmra.mxu0 %v4632
      %v4666 = vpop.f32.mrf.mxu0
      %v4667 = vadd.f32 0.0, %v4666
      %v4668 = vpop.f32.mrf.mxu0
      %v4669 = vadd.f32 0.0, %v4668
      %4670 = vmatmul.bf16.gmra.mxu0 %v4635
      %v4671 = vpop.f32.mrf.mxu0
      %v4672 = vadd.f32 0.0, %v4671
      %v4673 = vpop.f32.mrf.mxu0
      %v4674 = vadd.f32 0.0, %v4673
      %4675 = vdwg.mxu0
      %v4676 = vadd.f32 %v4600, %v4647
      %v4677 = vadd.f32 %v4601, %v4649
      %v4678 = vadd.f32 %v4602, %v4652
      %v4679 = vadd.f32 %v4603, %v4654
      %v4680 = vadd.f32 %v4604, %v4657
      %v4681 = vadd.f32 %v4605, %v4659
      %v4682 = vadd.f32 %v4606, %v4662
      %v4683 = vadd.f32 %v4607, %v4664
      %v4684 = vadd.f32 %v4608, %v4667
      %v4685 = vadd.f32 %v4609, %v4669
      %v4686 = vadd.f32 %v4610, %v4672
      %v4687 = vadd.f32 %v4611, %v4674
      %v4689 = vperm.slane %v2229, 0
      %v4691 = vadd.f32 %v4676, %v4689
      %v4692 = vadd.f32 %v4677, %v4689
      %v4693 = vadd.f32 %v4678, %v4689
      %v4694 = vadd.f32 %v4679, %v4689
      %v4695 = vadd.f32 %v4680, %v4689
      %v4696 = vadd.f32 %v4681, %v4689
      %v4697 = vadd.f32 %v4682, %v4689
      %v4698 = vadd.f32 %v4683, %v4689
      %v4699 = vadd.f32 %v4684, %v4689
      %v4700 = vadd.f32 %v4685, %v4689
      %v4701 = vadd.f32 %v4686, %v4689
      %v4702 = vadd.f32 %v4687, %v4689
      %v4703 = vmax.f32 %v4691, 0.0
      %v4704 = vmax.f32 %v4692, 0.0
      %v4705 = vmax.f32 %v4693, 0.0
      %v4706 = vmax.f32 %v4694, 0.0
      %v4707 = vmax.f32 %v4695, 0.0
      %v4708 = vmax.f32 %v4696, 0.0
      %v4709 = vmax.f32 %v4697, 0.0
      %v4710 = vmax.f32 %v4698, 0.0
      %v4711 = vmax.f32 %v4699, 0.0
      %v4712 = vmax.f32 %v4700, 0.0
      %v4713 = vmax.f32 %v4701, 0.0
      %v4714 = vmax.f32 %v4702, 0.0
      %v4727 = vrot.slane %v4703, 1
      %v4728 = vrot.slane %v4704, 1
      %v4729 = vsel %vm1235, %v4727, %v4728
      %v4730 = vrot.slane %v4705, 1
      %v4731 = vsel %vm1235, %v4728, %v4730
      %v4732 = vrot.slane %v4706, 1
      %v4733 = vsel %vm1235, %v4730, %v4732
      %v4734 = vrot.slane %v4707, 1
      %v4735 = vsel %vm1235, %v4732, %v4734
      %v4736 = vrot.slane %v4708, 1
      %v4737 = vsel %vm1235, %v4734, %v4736
      %v4738 = vrot.slane %v4709, 1
      %v4739 = vsel %vm1235, %v4736, %v4738
      %v4740 = vrot.slane %v4710, 1
      %v4741 = vsel %vm1235, %v4738, %v4740
      %v4742 = vrot.slane %v4711, 1
      %v4743 = vsel %vm1235, %v4740, %v4742
      %v4744 = vrot.slane %v4712, 1
      %v4745 = vsel %vm1235, %v4742, %v4744
      %v4746 = vrot.slane %v4713, 1
      %v4747 = vsel %vm1235, %v4744, %v4746
      %v4748 = vrot.slane %v4714, 1
      %v4749 = vsel %vm1235, %v4746, %v4748
      %v4762 = vmax.f32 %v4703, %v4729
      %v4763 = vmax.f32 %v4704, %v4731
      %v4764 = vmax.f32 %v4705, %v4733
      %v4765 = vmax.f32 %v4706, %v4735
      %v4766 = vmax.f32 %v4707, %v4737
      %v4767 = vmax.f32 %v4708, %v4739
      %v4768 = vmax.f32 %v4709, %v4741
      %v4769 = vmax.f32 %v4710, %v4743
      %v4770 = vmax.f32 %v4711, %v4745
      %v4771 = vmax.f32 %v4712, %v4747
      %v4772 = vmax.f32 %v4713, %v4749
      %v4773 = vmax.f32 %v4714, %v4748
      %v4785 = vrot.slane %v4763, 4
      %v4786 = vrot.slane %v4764, 4
      %v4787 = vsel %vm1935, %v4785, %v4786
      %v4788 = vrot.slane %v4765, 4
      %v4789 = vsel %vm1935, %v4786, %v4788
      %v4790 = vrot.slane %v4766, 4
      %v4791 = vsel %vm1935, %v4788, %v4790
      %v4792 = vrot.slane %v4767, 4
      %v4793 = vsel %vm1935, %v4790, %v4792
      %v4794 = vrot.slane %v4768, 4
      %v4795 = vsel %vm1935, %v4792, %v4794
      %v4796 = vrot.slane %v4769, 4
      %v4797 = vsel %vm1935, %v4794, %v4796
      %v4798 = vrot.slane %v4770, 4
      %v4799 = vsel %vm1935, %v4796, %v4798
      %v4800 = vrot.slane %v4771, 4
      %v4801 = vsel %vm1935, %v4798, %v4800
      %v4802 = vrot.slane %v4772, 4
      %v4803 = vsel %vm1935, %v4800, %v4802
      %v4804 = vrot.slane %v4773, 4
      %v4805 = vsel %vm1935, %v4802, %v4804
      %v4816 = vmax.f32 %v4762, %v4787
      %v4817 = vmax.f32 %v4763, %v4789
      %v4818 = vmax.f32 %v4764, %v4791
      %v4819 = vmax.f32 %v4765, %v4793
      %v4820 = vmax.f32 %v4766, %v4795
      %v4821 = vmax.f32 %v4767, %v4797
      %v4822 = vmax.f32 %v4768, %v4799
      %v4823 = vmax.f32 %v4769, %v4801
      %v4824 = vmax.f32 %v4770, %v4803
      %v4825 = vmax.f32 %v4771, %v4805
      %v4826 = vld [vmem:[%s8] sm:$0xf]
      %v4827 = vld [vmem:[%s8 + $0x4] sm:$0xf]
      %v4828 = vld [vmem:[%s8 + $0x8] sm:$0xf]
      %v4829 = vld [vmem:[%s8 + $0xc] sm:$0xf]
      %v4830 = vld [vmem:[%s8 + $0x10] sm:$0x3]
      %v4831 = vpack.c.bf16 %v4817, %v4816
      %v4832 = vpack.c.bf16 %v4819, %v4818
      %v4833 = vpack.c.bf16 %v4821, %v4820
      %v4834 = vpack.c.bf16 %v4823, %v4822
      %v4835 = vpack.c.bf16 %v4825, %v4824
      %v4841 = vunpack.c.l.b16 %v4826
      %v4842 = vunpack.c.l.b16 %v4827
      %v4843 = vunpack.c.l.b16 %v4828
      %v4844 = vunpack.c.l.b16 %v4829
      %v4845 = vunpack.c.l.b16 %v4830
      %v4846 = vpack.c.b16 %v4842, %v4841
      %v4847 = vpack.c.b16 %v4844, %v4843
      %v4848 = vpack.c.b16 %v4845, %v4845
      %vm4849 = vcmask 646144
      %v4851 = vsel %vm4849, %v4846, 0
      %v4854 = vsel %vm4849, %v4847, 0
      %v4857 = vsel %vm4849, %v4848, 0
      %vm4859 = vcmask 1047552
      %v4860 = vsel %vm1235, 4294967295, 65535
      %v4861 = vsel %vm4859, %v4860, 0
      %v4863 = vand.u32 %v4835, %v4861
      %4865 = vmatpush.bf16.msra.mxu0 0
      %4866 = vmatpush.bf16.msra.mxu0 0
      %4867 = vmatpush.bf16.msra.mxu0 0
      %4868 = vmatpush.bf16.msra.mxu0 %v4863
      %4869 = vmatpush.bf16.msra.mxu0 %v4834
      %4870 = vmatpush.bf16.msra.mxu0 %v4833
      %4871 = vmatpush.bf16.msra.mxu0 %v4832
      %4872 = vmatpush.bf16.msra.mxu0 %v4831
      %4873 = vmatmul.bf16.gmra.mxu0 %v4851
      %v4874 = vpop.f32.mrf.mxu0
      %v4875 = vadd.f32 0.0, %v4874
      %v4876 = vpop.f32.mrf.mxu0
      %v4877 = vadd.f32 0.0, %v4876
      %4878 = vmatmul.bf16.gmra.mxu0 %v4854
      %v4879 = vpop.f32.mrf.mxu0
      %v4880 = vadd.f32 0.0, %v4879
      %v4881 = vpop.f32.mrf.mxu0
      %v4882 = vadd.f32 0.0, %v4881
      %4883 = vmatmul.bf16.gmra.mxu0 %v4857
      %v4884 = vpop.f32.mrf.mxu0
      %v4885 = vadd.f32 0.0, %v4884
      %v4886 = vpop.f32.mrf.mxu0
      %4887 = vdwg.mxu0
      %v4888 = vpack.c.bf16 %v4875, %v4875
      %v4889 = vpack.c.bf16 %v4877, %v4877
      %v4890 = vpack.c.bf16 %v4880, %v4880
      %v4891 = vpack.c.bf16 %v4882, %v4882
      %v4892 = vpack.c.bf16 %v4885, %v4885
      %v4893 = vld [vmem:[%s7] sm:$0x1]
      %v4894 = vld [vmem:[%s6] sm:$0xf]
      %v4895 = vld [vmem:[%s6 + $0x4] sm:$0xf]
      %v4896 = vld [vmem:[%s6 + $0x8] sm:$0xf]
      %v4897 = vld [vmem:[%s6 + $0xc] sm:$0xf]
      %v4898 = vld [vmem:[%s6 + $0x10] sm:$0xf]
      %v4899 = vld [vmem:[%s6 + $0x14] sm:$0xf]
      %v4900 = vld [vmem:[%s6 + $0x18] sm:$0xf]
      %v4901 = vld [vmem:[%s6 + $0x1c] sm:$0xf]
      %s4902 = scalar_lea.vmem %s6, 32
      %v4903 = vld [vmem:[%s4902] sm:$0xf]
      %v4904 = vld [vmem:[%s4902 + $0x4] sm:$0xf]
      %v4905 = vld [vmem:[%s4902 + $0x8] sm:$0xf]
      %v4906 = vld [vmem:[%s4902 + $0xc] sm:$0xf]
      %v4907 = vld [vmem:[%s4902 + $0x10] sm:$0xf]
      %v4908 = vld [vmem:[%s4902 + $0x14] sm:$0xf]
      %v4909 = vld [vmem:[%s4902 + $0x18] sm:$0xf]
      %v4910 = vld [vmem:[%s4902 + $0x1c] sm:$0xf]
      %v4914 = vunpack.c.l.b16 %v4888
      %v4915 = vunpack.c.l.b16 %v4889
      %v4916 = vunpack.c.l.b16 %v4890
      %v4917 = vpack.c.b16 %v4915, %v4914
      %v4918 = vpack.c.b16 %v4916, %v4916
      %v4920 = vshrl.u32 %v4917, 16
      %v4922 = vshll.u32 %v4917, 16
      %v4924 = vrot.slane %v4922, 1
      %v4925 = vor.u32 %v4920, %v4924
      %v4927 = vshll.u32 %v4918, 16
      %v4929 = vrot.slane %v4927, 1
      %v4930 = vsel %vm2269, %v4925, %v4929
      %v4931 = vshrl.u32 %v4918, 16
      %v4933 = vor.u32 %v4931, %v4929
      %v4942 = vunpack.c.l.b16 %v4903
      %v4943 = vunpack.c.l.b16 %v4904
      %v4944 = vunpack.c.l.b16 %v4905
      %v4945 = vunpack.c.l.b16 %v4906
      %v4946 = vunpack.c.l.b16 %v4907
      %v4947 = vunpack.c.l.b16 %v4908
      %v4948 = vunpack.c.l.b16 %v4909
      %v4949 = vunpack.c.l.b16 %v4910
      %v4950 = vpack.c.b16 %v4943, %v4942
      %v4951 = vpack.c.b16 %v4945, %v4944
      %v4952 = vpack.c.b16 %v4947, %v4946
      %v4953 = vpack.c.b16 %v4949, %v4948
      %vm4958 = vcmask 523264
      %v4960 = vsel %vm4958, %v4930, 0
      %v4963 = vsel %vm4958, %v4933, 0
      %4965 = vmatpush.bf16.msra.mxu0 0
      %4966 = vmatpush.bf16.msra.mxu0 0
      %4967 = vmatpush.bf16.msra.mxu0 0
      %4968 = vmatpush.bf16.msra.mxu0 0
      %4969 = vmatpush.bf16.msra.mxu0 %v4953
      %4970 = vmatpush.bf16.msra.mxu0 %v4952
      %4971 = vmatpush.bf16.msra.mxu0 %v4951
      %4972 = vmatpush.bf16.msra.mxu0 %v4950
      %4973 = vmatmul.bf16.gmra.mxu0 %v4960
      %v4974 = vpop.f32.mrf.mxu0
      %v4975 = vadd.f32 0.0, %v4974
      %v4976 = vpop.f32.mrf.mxu0
      %v4977 = vadd.f32 0.0, %v4976
      %4978 = vmatmul.bf16.gmra.mxu0 %v4963
      %v4979 = vpop.f32.mrf.mxu0
      %v4980 = vadd.f32 0.0, %v4979
      %v4981 = vpop.f32.mrf.mxu0
      %4982 = vdwg.mxu0
      %v4991 = vunpack.c.l.b16 %v4894
      %v4992 = vunpack.c.l.b16 %v4895
      %v4993 = vunpack.c.l.b16 %v4896
      %v4994 = vunpack.c.l.b16 %v4897
      %v4995 = vunpack.c.l.b16 %v4898
      %v4996 = vunpack.c.l.b16 %v4899
      %v4997 = vunpack.c.l.b16 %v4900
      %v4998 = vunpack.c.l.b16 %v4901
      %v4999 = vpack.c.b16 %v4992, %v4991
      %v5000 = vpack.c.b16 %v4994, %v4993
      %v5001 = vpack.c.b16 %v4996, %v4995
      %v5002 = vpack.c.b16 %v4998, %v4997
      %v5007 = vsel %vm4958, %v4917, 0
      %v5009 = vsel %vm4958, %v4918, 0
      %5011 = vmatpush.bf16.msra.mxu0 0
      %5012 = vmatpush.bf16.msra.mxu0 0
      %5013 = vmatpush.bf16.msra.mxu0 0
      %5014 = vmatpush.bf16.msra.mxu0 0
      %5015 = vmatpush.bf16.msra.mxu0 %v5002
      %5016 = vmatpush.bf16.msra.mxu0 %v5001
      %5017 = vmatpush.bf16.msra.mxu0 %v5000
      %5018 = vmatpush.bf16.msra.mxu0 %v4999
      %5019 = vmatmul.bf16.gmra.mxu0 %v5007
      %v5020 = vpop.f32.mrf.mxu0
      %v5021 = vadd.f32 %v4975, %v5020
      %v5022 = vpop.f32.mrf.mxu0
      %v5023 = vadd.f32 %v4977, %v5022
      %5024 = vmatmul.bf16.gmra.mxu0 %v5009
      %v5025 = vpop.f32.mrf.mxu0
      %v5026 = vadd.f32 %v4980, %v5025
      %v5027 = vpop.f32.mrf.mxu0
      %5028 = vdwg.mxu0
      %s5029 = scalar_lea.vmem %s6, 64
      %v5030 = vld [vmem:[%s5029] sm:$0xf]
      %v5031 = vld [vmem:[%s5029 + $0x4] sm:$0xf]
      %v5032 = vld [vmem:[%s5029 + $0x8] sm:$0xf]
      %v5033 = vld [vmem:[%s5029 + $0xc] sm:$0xf]
      %v5034 = vld [vmem:[%s5029 + $0x10] sm:$0xf]
      %v5035 = vld [vmem:[%s5029 + $0x14] sm:$0xf]
      %v5036 = vld [vmem:[%s5029 + $0x18] sm:$0xf]
      %v5037 = vld [vmem:[%s5029 + $0x1c] sm:$0xf]
      %v5038 = vrot.slane %v4917, 1
      %v5039 = vrot.slane %v4918, 1
      %v5040 = vsel %vm2454, %v5038, %v5039
      %v5049 = vunpack.c.l.b16 %v5030
      %v5050 = vunpack.c.l.b16 %v5031
      %v5051 = vunpack.c.l.b16 %v5032
      %v5052 = vunpack.c.l.b16 %v5033
      %v5053 = vunpack.c.l.b16 %v5034
      %v5054 = vunpack.c.l.b16 %v5035
      %v5055 = vunpack.c.l.b16 %v5036
      %v5056 = vunpack.c.l.b16 %v5037
      %v5057 = vpack.c.b16 %v5050, %v5049
      %v5058 = vpack.c.b16 %v5052, %v5051
      %v5059 = vpack.c.b16 %v5054, %v5053
      %v5060 = vpack.c.b16 %v5056, %v5055
      %v5066 = vsel %vm4958, %v5040, 0
      %v5069 = vsel %vm4958, %v5039, 0
      %5071 = vmatpush.bf16.msra.mxu0 0
      %5072 = vmatpush.bf16.msra.mxu0 0
      %5073 = vmatpush.bf16.msra.mxu0 0
      %5074 = vmatpush.bf16.msra.mxu0 0
      %5075 = vmatpush.bf16.msra.mxu0 %v5060
      %5076 = vmatpush.bf16.msra.mxu0 %v5059
      %5077 = vmatpush.bf16.msra.mxu0 %v5058
      %5078 = vmatpush.bf16.msra.mxu0 %v5057
      %5079 = vmatmul.bf16.gmra.mxu0 %v5066
      %v5080 = vpop.f32.mrf.mxu0
      %v5081 = vadd.f32 0.0, %v5080
      %v5082 = vpop.f32.mrf.mxu0
      %v5083 = vadd.f32 0.0, %v5082
      %5084 = vmatmul.bf16.gmra.mxu0 %v5069
      %v5085 = vpop.f32.mrf.mxu0
      %v5086 = vadd.f32 0.0, %v5085
      %v5087 = vpop.f32.mrf.mxu0
      %5088 = vdwg.mxu0
      %v5089 = vadd.f32 %v5021, %v5081
      %v5090 = vadd.f32 %v5023, %v5083
      %v5091 = vadd.f32 %v5026, %v5086
      %s5092 = scalar_lea.vmem %s6, 96
      %v5093 = vld [vmem:[%s5092] sm:$0xf]
      %v5094 = vld [vmem:[%s5092 + $0x4] sm:$0xf]
      %v5095 = vld [vmem:[%s5092 + $0x8] sm:$0xf]
      %v5096 = vld [vmem:[%s5092 + $0xc] sm:$0xf]
      %v5097 = vld [vmem:[%s5092 + $0x10] sm:$0xf]
      %v5098 = vld [vmem:[%s5092 + $0x14] sm:$0xf]
      %v5099 = vld [vmem:[%s5092 + $0x18] sm:$0xf]
      %v5100 = vld [vmem:[%s5092 + $0x1c] sm:$0xf]
      %v5102 = vunpack.c.l.b16 %v4891
      %v5103 = vpack.c.b16 %v5102, %v4916
      %v5104 = vrot.slane %v4917, 3
      %v5105 = vrot.slane %v5103, 3
      %v5106 = vsel %vm3013, %v5104, %v5105
      %v5115 = vunpack.c.l.b16 %v5093
      %v5116 = vunpack.c.l.b16 %v5094
      %v5117 = vunpack.c.l.b16 %v5095
      %v5118 = vunpack.c.l.b16 %v5096
      %v5119 = vunpack.c.l.b16 %v5097
      %v5120 = vunpack.c.l.b16 %v5098
      %v5121 = vunpack.c.l.b16 %v5099
      %v5122 = vunpack.c.l.b16 %v5100
      %v5123 = vpack.c.b16 %v5116, %v5115
      %v5124 = vpack.c.b16 %v5118, %v5117
      %v5125 = vpack.c.b16 %v5120, %v5119
      %v5126 = vpack.c.b16 %v5122, %v5121
      %v5132 = vsel %vm4958, %v5106, 0
      %v5135 = vsel %vm4958, %v5105, 0
      %5137 = vmatpush.bf16.msra.mxu0 0
      %5138 = vmatpush.bf16.msra.mxu0 0
      %5139 = vmatpush.bf16.msra.mxu0 0
      %5140 = vmatpush.bf16.msra.mxu0 0
      %5141 = vmatpush.bf16.msra.mxu0 %v5126
      %5142 = vmatpush.bf16.msra.mxu0 %v5125
      %5143 = vmatpush.bf16.msra.mxu0 %v5124
      %5144 = vmatpush.bf16.msra.mxu0 %v5123
      %5145 = vmatmul.bf16.gmra.mxu0 %v5132
      %v5146 = vpop.f32.mrf.mxu0
      %v5147 = vadd.f32 0.0, %v5146
      %v5148 = vpop.f32.mrf.mxu0
      %v5149 = vadd.f32 0.0, %v5148
      %5150 = vmatmul.bf16.gmra.mxu0 %v5135
      %v5151 = vpop.f32.mrf.mxu0
      %v5152 = vadd.f32 0.0, %v5151
      %v5153 = vpop.f32.mrf.mxu0
      %5154 = vdwg.mxu0
      %v5155 = vadd.f32 %v5089, %v5147
      %v5156 = vadd.f32 %v5090, %v5149
      %v5157 = vadd.f32 %v5091, %v5152
      %s5158 = scalar_lea.vmem %s6, 128
      %v5159 = vld [vmem:[%s5158] sm:$0xf]
      %v5160 = vld [vmem:[%s5158 + $0x4] sm:$0xf]
      %v5161 = vld [vmem:[%s5158 + $0x8] sm:$0xf]
      %v5162 = vld [vmem:[%s5158 + $0xc] sm:$0xf]
      %v5163 = vld [vmem:[%s5158 + $0x10] sm:$0xf]
      %v5164 = vld [vmem:[%s5158 + $0x14] sm:$0xf]
      %v5165 = vld [vmem:[%s5158 + $0x18] sm:$0xf]
      %v5166 = vld [vmem:[%s5158 + $0x1c] sm:$0xf]
      %v5167 = vrot.slane %v4920, 3
      %v5168 = vrot.slane %v4922, 4
      %v5169 = vor.u32 %v5167, %v5168
      %v5171 = vshrl.u32 %v5103, 16
      %v5173 = vrot.slane %v5171, 3
      %v5174 = vshll.u32 %v5103, 16
      %v5176 = vrot.slane %v5174, 4
      %v5177 = vor.u32 %v5173, %v5176
      %v5178 = vsel %vm3113, %v5169, %v5177
      %v5187 = vunpack.c.l.b16 %v5159
      %v5188 = vunpack.c.l.b16 %v5160
      %v5189 = vunpack.c.l.b16 %v5161
      %v5190 = vunpack.c.l.b16 %v5162
      %v5191 = vunpack.c.l.b16 %v5163
      %v5192 = vunpack.c.l.b16 %v5164
      %v5193 = vunpack.c.l.b16 %v5165
      %v5194 = vunpack.c.l.b16 %v5166
      %v5195 = vpack.c.b16 %v5188, %v5187
      %v5196 = vpack.c.b16 %v5190, %v5189
      %v5197 = vpack.c.b16 %v5192, %v5191
      %v5198 = vpack.c.b16 %v5194, %v5193
      %v5204 = vsel %vm4958, %v5178, 0
      %v5207 = vsel %vm4958, %v5177, 0
      %5209 = vmatpush.bf16.msra.mxu0 0
      %5210 = vmatpush.bf16.msra.mxu0 0
      %5211 = vmatpush.bf16.msra.mxu0 0
      %5212 = vmatpush.bf16.msra.mxu0 0
      %5213 = vmatpush.bf16.msra.mxu0 %v5198
      %5214 = vmatpush.bf16.msra.mxu0 %v5197
      %5215 = vmatpush.bf16.msra.mxu0 %v5196
      %5216 = vmatpush.bf16.msra.mxu0 %v5195
      %5217 = vmatmul.bf16.gmra.mxu0 %v5204
      %v5218 = vpop.f32.mrf.mxu0
      %v5219 = vadd.f32 0.0, %v5218
      %v5220 = vpop.f32.mrf.mxu0
      %v5221 = vadd.f32 0.0, %v5220
      %5222 = vmatmul.bf16.gmra.mxu0 %v5207
      %v5223 = vpop.f32.mrf.mxu0
      %v5224 = vadd.f32 0.0, %v5223
      %v5225 = vpop.f32.mrf.mxu0
      %5226 = vdwg.mxu0
      %v5227 = vadd.f32 %v5155, %v5219
      %v5228 = vadd.f32 %v5156, %v5221
      %v5229 = vadd.f32 %v5157, %v5224
      %s5230 = scalar_lea.vmem %s6, 160
      %v5231 = vld [vmem:[%s5230] sm:$0xf]
      %v5232 = vld [vmem:[%s5230 + $0x4] sm:$0xf]
      %v5233 = vld [vmem:[%s5230 + $0x8] sm:$0xf]
      %v5234 = vld [vmem:[%s5230 + $0xc] sm:$0xf]
      %v5235 = vld [vmem:[%s5230 + $0x10] sm:$0xf]
      %v5236 = vld [vmem:[%s5230 + $0x14] sm:$0xf]
      %v5237 = vld [vmem:[%s5230 + $0x18] sm:$0xf]
      %v5238 = vld [vmem:[%s5230 + $0x1c] sm:$0xf]
      %v5239 = vpack.c.b16 %v4916, %v4915
      %v5240 = vpack.c.b16 %v5102, %v5102
      %v5249 = vunpack.c.l.b16 %v5231
      %v5250 = vunpack.c.l.b16 %v5232
      %v5251 = vunpack.c.l.b16 %v5233
      %v5252 = vunpack.c.l.b16 %v5234
      %v5253 = vunpack.c.l.b16 %v5235
      %v5254 = vunpack.c.l.b16 %v5236
      %v5255 = vunpack.c.l.b16 %v5237
      %v5256 = vunpack.c.l.b16 %v5238
      %v5257 = vpack.c.b16 %v5250, %v5249
      %v5258 = vpack.c.b16 %v5252, %v5251
      %v5259 = vpack.c.b16 %v5254, %v5253
      %v5260 = vpack.c.b16 %v5256, %v5255
      %v5266 = vsel %vm4958, %v5239, 0
      %v5269 = vsel %vm4958, %v5240, 0
      %5271 = vmatpush.bf16.msra.mxu0 0
      %5272 = vmatpush.bf16.msra.mxu0 0
      %5273 = vmatpush.bf16.msra.mxu0 0
      %5274 = vmatpush.bf16.msra.mxu0 0
      %5275 = vmatpush.bf16.msra.mxu0 %v5260
      %5276 = vmatpush.bf16.msra.mxu0 %v5259
      %5277 = vmatpush.bf16.msra.mxu0 %v5258
      %5278 = vmatpush.bf16.msra.mxu0 %v5257
      %5279 = vmatmul.bf16.gmra.mxu0 %v5266
      %v5280 = vpop.f32.mrf.mxu0
      %v5281 = vadd.f32 0.0, %v5280
      %v5282 = vpop.f32.mrf.mxu0
      %v5283 = vadd.f32 0.0, %v5282
      %5284 = vmatmul.bf16.gmra.mxu0 %v5269
      %v5285 = vpop.f32.mrf.mxu0
      %v5286 = vadd.f32 0.0, %v5285
      %v5287 = vpop.f32.mrf.mxu0
      %5288 = vdwg.mxu0
      %v5289 = vadd.f32 %v5227, %v5281
      %v5290 = vadd.f32 %v5228, %v5283
      %v5291 = vadd.f32 %v5229, %v5286
      %s5292 = scalar_lea.vmem %s6, 192
      %v5293 = vld [vmem:[%s5292] sm:$0xf]
      %v5294 = vld [vmem:[%s5292 + $0x4] sm:$0xf]
      %v5295 = vld [vmem:[%s5292 + $0x8] sm:$0xf]
      %v5296 = vld [vmem:[%s5292 + $0xc] sm:$0xf]
      %v5297 = vld [vmem:[%s5292 + $0x10] sm:$0xf]
      %v5298 = vld [vmem:[%s5292 + $0x14] sm:$0xf]
      %v5299 = vld [vmem:[%s5292 + $0x18] sm:$0xf]
      %v5300 = vld [vmem:[%s5292 + $0x1c] sm:$0xf]
      %v5302 = vunpack.c.l.b16 %v4892
      %v5303 = vpack.c.b16 %v5302, %v5102
      %v5304 = vrot.slane %v5239, 2
      %v5305 = vrot.slane %v5303, 2
      %v5306 = vsel %vm2662, %v5304, %v5305
      %v5315 = vunpack.c.l.b16 %v5293
      %v5316 = vunpack.c.l.b16 %v5294
      %v5317 = vunpack.c.l.b16 %v5295
      %v5318 = vunpack.c.l.b16 %v5296
      %v5319 = vunpack.c.l.b16 %v5297
      %v5320 = vunpack.c.l.b16 %v5298
      %v5321 = vunpack.c.l.b16 %v5299
      %v5322 = vunpack.c.l.b16 %v5300
      %v5323 = vpack.c.b16 %v5316, %v5315
      %v5324 = vpack.c.b16 %v5318, %v5317
      %v5325 = vpack.c.b16 %v5320, %v5319
      %v5326 = vpack.c.b16 %v5322, %v5321
      %v5332 = vsel %vm4958, %v5306, 0
      %v5335 = vsel %vm4958, %v5305, 0
      %5337 = vmatpush.bf16.msra.mxu0 0
      %5338 = vmatpush.bf16.msra.mxu0 0
      %5339 = vmatpush.bf16.msra.mxu0 0
      %5340 = vmatpush.bf16.msra.mxu0 0
      %5341 = vmatpush.bf16.msra.mxu0 %v5326
      %5342 = vmatpush.bf16.msra.mxu0 %v5325
      %5343 = vmatpush.bf16.msra.mxu0 %v5324
      %5344 = vmatpush.bf16.msra.mxu0 %v5323
      %5345 = vmatmul.bf16.gmra.mxu0 %v5332
      %v5346 = vpop.f32.mrf.mxu0
      %v5347 = vadd.f32 0.0, %v5346
      %v5348 = vpop.f32.mrf.mxu0
      %v5349 = vadd.f32 0.0, %v5348
      %5350 = vmatmul.bf16.gmra.mxu0 %v5335
      %v5351 = vpop.f32.mrf.mxu0
      %v5352 = vadd.f32 0.0, %v5351
      %v5353 = vpop.f32.mrf.mxu0
      %5354 = vdwg.mxu0
      %v5355 = vadd.f32 %v5289, %v5347
      %v5356 = vadd.f32 %v5290, %v5349
      %v5357 = vadd.f32 %v5291, %v5352
      %s5358 = scalar_lea.vmem %s6, 224
      %v5359 = vld [vmem:[%s5358] sm:$0xf]
      %v5360 = vld [vmem:[%s5358 + $0x4] sm:$0xf]
      %v5361 = vld [vmem:[%s5358 + $0x8] sm:$0xf]
      %v5362 = vld [vmem:[%s5358 + $0xc] sm:$0xf]
      %v5363 = vld [vmem:[%s5358 + $0x10] sm:$0xf]
      %v5364 = vld [vmem:[%s5358 + $0x14] sm:$0xf]
      %v5365 = vld [vmem:[%s5358 + $0x18] sm:$0xf]
      %v5366 = vld [vmem:[%s5358 + $0x1c] sm:$0xf]
      %v5367 = vshrl.u32 %v5239, 16
      %v5369 = vrot.slane %v5367, 2
      %v5370 = vshll.u32 %v5239, 16
      %v5372 = vrot.slane %v5370, 3
      %v5373 = vor.u32 %v5369, %v5372
      %v5375 = vshrl.u32 %v5303, 16
      %v5377 = vrot.slane %v5375, 2
      %v5378 = vshll.u32 %v5303, 16
      %v5380 = vrot.slane %v5378, 3
      %v5381 = vor.u32 %v5377, %v5380
      %v5382 = vsel %vm2868, %v5373, %v5381
      %v5391 = vunpack.c.l.b16 %v5359
      %v5392 = vunpack.c.l.b16 %v5360
      %v5393 = vunpack.c.l.b16 %v5361
      %v5394 = vunpack.c.l.b16 %v5362
      %v5395 = vunpack.c.l.b16 %v5363
      %v5396 = vunpack.c.l.b16 %v5364
      %v5397 = vunpack.c.l.b16 %v5365
      %v5398 = vunpack.c.l.b16 %v5366
      %v5399 = vpack.c.b16 %v5392, %v5391
      %v5400 = vpack.c.b16 %v5394, %v5393
      %v5401 = vpack.c.b16 %v5396, %v5395
      %v5402 = vpack.c.b16 %v5398, %v5397
      %v5408 = vsel %vm4958, %v5382, 0
      %v5411 = vsel %vm4958, %v5381, 0
      %5413 = vmatpush.bf16.msra.mxu0 0
      %5414 = vmatpush.bf16.msra.mxu0 0
      %5415 = vmatpush.bf16.msra.mxu0 0
      %5416 = vmatpush.bf16.msra.mxu0 0
      %5417 = vmatpush.bf16.msra.mxu0 %v5402
      %5418 = vmatpush.bf16.msra.mxu0 %v5401
      %5419 = vmatpush.bf16.msra.mxu0 %v5400
      %5420 = vmatpush.bf16.msra.mxu0 %v5399
      %5421 = vmatmul.bf16.gmra.mxu0 %v5408
      %v5422 = vpop.f32.mrf.mxu0
      %v5423 = vadd.f32 0.0, %v5422
      %v5424 = vpop.f32.mrf.mxu0
      %v5425 = vadd.f32 0.0, %v5424
      %5426 = vmatmul.bf16.gmra.mxu0 %v5411
      %v5427 = vpop.f32.mrf.mxu0
      %v5428 = vadd.f32 0.0, %v5427
      %v5429 = vpop.f32.mrf.mxu0
      %5430 = vdwg.mxu0
      %v5431 = vadd.f32 %v5355, %v5423
      %v5432 = vadd.f32 %v5356, %v5425
      %v5433 = vadd.f32 %v5357, %v5428
      %s5434 = scalar_lea.vmem %s6, 256
      %v5435 = vld [vmem:[%s5434] sm:$0xf]
      %v5436 = vld [vmem:[%s5434 + $0x4] sm:$0xf]
      %v5437 = vld [vmem:[%s5434 + $0x8] sm:$0xf]
      %v5438 = vld [vmem:[%s5434 + $0xc] sm:$0xf]
      %v5439 = vld [vmem:[%s5434 + $0x10] sm:$0xf]
      %v5440 = vld [vmem:[%s5434 + $0x14] sm:$0xf]
      %v5441 = vld [vmem:[%s5434 + $0x18] sm:$0xf]
      %v5442 = vld [vmem:[%s5434 + $0x1c] sm:$0xf]
      %v5443 = vrot.slane %v5239, 3
      %v5444 = vrot.slane %v5303, 3
      %v5445 = vsel %vm3013, %v5443, %v5444
      %v5454 = vunpack.c.l.b16 %v5435
      %v5455 = vunpack.c.l.b16 %v5436
      %v5456 = vunpack.c.l.b16 %v5437
      %v5457 = vunpack.c.l.b16 %v5438
      %v5458 = vunpack.c.l.b16 %v5439
      %v5459 = vunpack.c.l.b16 %v5440
      %v5460 = vunpack.c.l.b16 %v5441
      %v5461 = vunpack.c.l.b16 %v5442
      %v5462 = vpack.c.b16 %v5455, %v5454
      %v5463 = vpack.c.b16 %v5457, %v5456
      %v5464 = vpack.c.b16 %v5459, %v5458
      %v5465 = vpack.c.b16 %v5461, %v5460
      %v5471 = vsel %vm4958, %v5445, 0
      %v5474 = vsel %vm4958, %v5444, 0
      %5476 = vmatpush.bf16.msra.mxu0 0
      %5477 = vmatpush.bf16.msra.mxu0 0
      %5478 = vmatpush.bf16.msra.mxu0 0
      %5479 = vmatpush.bf16.msra.mxu0 0
      %5480 = vmatpush.bf16.msra.mxu0 %v5465
      %5481 = vmatpush.bf16.msra.mxu0 %v5464
      %5482 = vmatpush.bf16.msra.mxu0 %v5463
      %5483 = vmatpush.bf16.msra.mxu0 %v5462
      %5484 = vmatmul.bf16.gmra.mxu0 %v5471
      %v5485 = vpop.f32.mrf.mxu0
      %v5486 = vadd.f32 0.0, %v5485
      %v5487 = vpop.f32.mrf.mxu0
      %v5488 = vadd.f32 0.0, %v5487
      %5489 = vmatmul.bf16.gmra.mxu0 %v5474
      %v5490 = vpop.f32.mrf.mxu0
      %v5491 = vadd.f32 0.0, %v5490
      %v5492 = vpop.f32.mrf.mxu0
      %5493 = vdwg.mxu0
      %v5494 = vadd.f32 %v5431, %v5486
      %v5495 = vadd.f32 %v5432, %v5488
      %v5496 = vadd.f32 %v5433, %v5491
      %v5498 = vperm.slane %v4893, 0
      %v5500 = vadd.f32 %v5494, %v5498
      %v5501 = vadd.f32 %v5495, %v5498
      %v5502 = vadd.f32 %v5496, %v5498
      %v5503 = vmax.f32 %v5500, 0.0
      %v5504 = vmax.f32 %v5501, 0.0
      %v5505 = vmax.f32 %v5502, 0.0
      %v5509 = vrot.slane %v5503, 1
      %v5510 = vrot.slane %v5504, 1
      %v5511 = vsel %vm1235, %v5509, %v5510
      %v5512 = vrot.slane %v5505, 1
      %v5513 = vsel %vm1235, %v5510, %v5512
      %v5517 = vmax.f32 %v5503, %v5511
      %v5518 = vmax.f32 %v5504, %v5513
      %v5519 = vmax.f32 %v5505, %v5512
      %vm5523 = vcmask 1041408
      %v5524 = vrot.slane %v5517, 6
      %v5525 = vrot.slane %v5518, 6
      %v5526 = vsel %vm5523, %v5524, %v5525
      %v5527 = vrot.slane %v5519, 6
      %v5528 = vsel %vm5523, %v5525, %v5527
      %v5531 = vmax.f32 %v5517, %v5526
      %v5532 = vmax.f32 %v5518, %v5528
      %v5533 = vld [vmem:[%s11] sm:$0xf]
      %v5534 = vld [vmem:[%s11 + $0x4] sm:$0xf]
      %v5535 = vpack.c.bf16 %v5532, %v5531
      %v5538 = vunpack.c.l.b16 %v5533
      %v5539 = vunpack.c.l.b16 %v5534
      %v5540 = vpack.c.b16 %v5539, %v5538
      %vm5541 = vcmask 121856
      %v5543 = vsel %vm5541, %v5540, 0
      %v5546 = vand.u32 %v5535, %v4861
      %5548 = vmatpush.bf16.msra.mxu0 0
      %5549 = vmatpush.bf16.msra.mxu0 0
      %5550 = vmatpush.bf16.msra.mxu0 0
      %5551 = vmatpush.bf16.msra.mxu0 0
      %5552 = vmatpush.bf16.msra.mxu0 0
      %5553 = vmatpush.bf16.msra.mxu0 0
      %5554 = vmatpush.bf16.msra.mxu0 0
      %5555 = vmatpush.bf16.msra.mxu0 %v5546
      %5556 = vmatmul.bf16.gmra.mxu0 %v5543
      %v5557 = vpop.f32.mrf.mxu0
      %v5558 = vadd.f32 0.0, %v5557
      %v5559 = vpop.f32.mrf.mxu0
      %v5560 = vadd.f32 0.0, %v5559
      %5561 = vdwg.mxu0
      %v5562 = vpack.c.bf16 %v5558, %v5558
      %v5563 = vpack.c.bf16 %v5560, %v5560
      %v5564 = vld [vmem:[%s10] sm:$0x1]
      %v5565 = vld [vmem:[%s9] sm:$0xf]
      %v5566 = vld [vmem:[%s9 + $0x4] sm:$0xf]
      %v5567 = vld [vmem:[%s9 + $0x8] sm:$0xf]
      %v5568 = vld [vmem:[%s9 + $0xc] sm:$0xf]
      %v5569 = vld [vmem:[%s9 + $0x10] sm:$0xf]
      %v5570 = vld [vmem:[%s9 + $0x14] sm:$0xf]
      %v5571 = vld [vmem:[%s9 + $0x18] sm:$0xf]
      %v5572 = vld [vmem:[%s9 + $0x1c] sm:$0xf]
      %s5573 = scalar_lea.vmem %s9, 32
      %v5574 = vld [vmem:[%s5573] sm:$0xf]
      %v5575 = vld [vmem:[%s5573 + $0x4] sm:$0xf]
      %v5576 = vld [vmem:[%s5573 + $0x8] sm:$0xf]
      %v5577 = vld [vmem:[%s5573 + $0xc] sm:$0xf]
      %v5578 = vld [vmem:[%s5573 + $0x10] sm:$0xf]
      %v5579 = vld [vmem:[%s5573 + $0x14] sm:$0xf]
      %v5580 = vld [vmem:[%s5573 + $0x18] sm:$0xf]
      %v5581 = vld [vmem:[%s5573 + $0x1c] sm:$0xf]
      %v5583 = vunpack.c.l.b16 %v5562
      %v5584 = vpack.c.b16 %v5583, %v5583
      %v5586 = vshrl.u32 %v5584, 16
      %v5588 = vshll.u32 %v5584, 16
      %v5590 = vrot.slane %v5588, 1
      %v5591 = vor.u32 %v5586, %v5590
      %v5600 = vunpack.c.l.b16 %v5574
      %v5601 = vunpack.c.l.b16 %v5575
      %v5602 = vunpack.c.l.b16 %v5576
      %v5603 = vunpack.c.l.b16 %v5577
      %v5604 = vunpack.c.l.b16 %v5578
      %v5605 = vunpack.c.l.b16 %v5579
      %v5606 = vunpack.c.l.b16 %v5580
      %v5607 = vunpack.c.l.b16 %v5581
      %v5608 = vpack.c.b16 %v5601, %v5600
      %v5609 = vpack.c.b16 %v5603, %v5602
      %v5610 = vpack.c.b16 %v5605, %v5604
      %v5611 = vpack.c.b16 %v5607, %v5606
      %v5617 = vsel %vm4958, %v5591, 0
      %5619 = vmatpush.bf16.msra.mxu0 0
      %5620 = vmatpush.bf16.msra.mxu0 0
      %5621 = vmatpush.bf16.msra.mxu0 0
      %5622 = vmatpush.bf16.msra.mxu0 0
      %5623 = vmatpush.bf16.msra.mxu0 %v5611
      %5624 = vmatpush.bf16.msra.mxu0 %v5610
      %5625 = vmatpush.bf16.msra.mxu0 %v5609
      %5626 = vmatpush.bf16.msra.mxu0 %v5608
      %5627 = vmatmul.bf16.gmra.mxu0 %v5617
      %v5628 = vpop.f32.mrf.mxu0
      %v5629 = vadd.f32 0.0, %v5628
      %v5630 = vpop.f32.mrf.mxu0
      %5631 = vdwg.mxu0
      %v5640 = vunpack.c.l.b16 %v5565
      %v5641 = vunpack.c.l.b16 %v5566
      %v5642 = vunpack.c.l.b16 %v5567
      %v5643 = vunpack.c.l.b16 %v5568
      %v5644 = vunpack.c.l.b16 %v5569
      %v5645 = vunpack.c.l.b16 %v5570
      %v5646 = vunpack.c.l.b16 %v5571
      %v5647 = vunpack.c.l.b16 %v5572
      %v5648 = vpack.c.b16 %v5641, %v5640
      %v5649 = vpack.c.b16 %v5643, %v5642
      %v5650 = vpack.c.b16 %v5645, %v5644
      %v5651 = vpack.c.b16 %v5647, %v5646
      %v5657 = vsel %vm4958, %v5562, 0
      %5659 = vmatpush.bf16.msra.mxu0 0
      %5660 = vmatpush.bf16.msra.mxu0 0
      %5661 = vmatpush.bf16.msra.mxu0 0
      %5662 = vmatpush.bf16.msra.mxu0 0
      %5663 = vmatpush.bf16.msra.mxu0 %v5651
      %5664 = vmatpush.bf16.msra.mxu0 %v5650
      %5665 = vmatpush.bf16.msra.mxu0 %v5649
      %5666 = vmatpush.bf16.msra.mxu0 %v5648
      %5667 = vmatmul.bf16.gmra.mxu0 %v5657
      %v5668 = vpop.f32.mrf.mxu0
      %v5669 = vadd.f32 %v5629, %v5668
      %v5670 = vpop.f32.mrf.mxu0
      %5671 = vdwg.mxu0
      %s5672 = scalar_lea.vmem %s9, 64
      %v5673 = vld [vmem:[%s5672] sm:$0xf]
      %v5674 = vld [vmem:[%s5672 + $0x4] sm:$0xf]
      %v5675 = vld [vmem:[%s5672 + $0x8] sm:$0xf]
      %v5676 = vld [vmem:[%s5672 + $0xc] sm:$0xf]
      %v5677 = vld [vmem:[%s5672 + $0x10] sm:$0xf]
      %v5678 = vld [vmem:[%s5672 + $0x14] sm:$0xf]
      %v5679 = vld [vmem:[%s5672 + $0x18] sm:$0xf]
      %v5680 = vld [vmem:[%s5672 + $0x1c] sm:$0xf]
      %v5681 = vrot.slane %v5584, 1
      %v5690 = vunpack.c.l.b16 %v5673
      %v5691 = vunpack.c.l.b16 %v5674
      %v5692 = vunpack.c.l.b16 %v5675
      %v5693 = vunpack.c.l.b16 %v5676
      %v5694 = vunpack.c.l.b16 %v5677
      %v5695 = vunpack.c.l.b16 %v5678
      %v5696 = vunpack.c.l.b16 %v5679
      %v5697 = vunpack.c.l.b16 %v5680
      %v5698 = vpack.c.b16 %v5691, %v5690
      %v5699 = vpack.c.b16 %v5693, %v5692
      %v5700 = vpack.c.b16 %v5695, %v5694
      %v5701 = vpack.c.b16 %v5697, %v5696
      %v5707 = vsel %vm4958, %v5681, 0
      %5709 = vmatpush.bf16.msra.mxu0 0
      %5710 = vmatpush.bf16.msra.mxu0 0
      %5711 = vmatpush.bf16.msra.mxu0 0
      %5712 = vmatpush.bf16.msra.mxu0 0
      %5713 = vmatpush.bf16.msra.mxu0 %v5701
      %5714 = vmatpush.bf16.msra.mxu0 %v5700
      %5715 = vmatpush.bf16.msra.mxu0 %v5699
      %5716 = vmatpush.bf16.msra.mxu0 %v5698
      %5717 = vmatmul.bf16.gmra.mxu0 %v5707
      %v5718 = vpop.f32.mrf.mxu0
      %v5719 = vadd.f32 0.0, %v5718
      %v5720 = vpop.f32.mrf.mxu0
      %5721 = vdwg.mxu0
      %v5722 = vadd.f32 %v5669, %v5719
      %s5723 = scalar_lea.vmem %s9, 96
      %v5724 = vld [vmem:[%s5723] sm:$0xf]
      %v5725 = vld [vmem:[%s5723 + $0x4] sm:$0xf]
      %v5726 = vld [vmem:[%s5723 + $0x8] sm:$0xf]
      %v5727 = vld [vmem:[%s5723 + $0xc] sm:$0xf]
      %v5728 = vld [vmem:[%s5723 + $0x10] sm:$0xf]
      %v5729 = vld [vmem:[%s5723 + $0x14] sm:$0xf]
      %v5730 = vld [vmem:[%s5723 + $0x18] sm:$0xf]
      %v5731 = vld [vmem:[%s5723 + $0x1c] sm:$0xf]
      %v5733 = vunpack.c.l.b16 %v5563
      %v5734 = vpack.c.b16 %v5733, %v5583
      %v5735 = vrot.slane %v5734, 2
      %v5744 = vunpack.c.l.b16 %v5724
      %v5745 = vunpack.c.l.b16 %v5725
      %v5746 = vunpack.c.l.b16 %v5726
      %v5747 = vunpack.c.l.b16 %v5727
      %v5748 = vunpack.c.l.b16 %v5728
      %v5749 = vunpack.c.l.b16 %v5729
      %v5750 = vunpack.c.l.b16 %v5730
      %v5751 = vunpack.c.l.b16 %v5731
      %v5752 = vpack.c.b16 %v5745, %v5744
      %v5753 = vpack.c.b16 %v5747, %v5746
      %v5754 = vpack.c.b16 %v5749, %v5748
      %v5755 = vpack.c.b16 %v5751, %v5750
      %v5761 = vsel %vm4958, %v5735, 0
      %5763 = vmatpush.bf16.msra.mxu0 0
      %5764 = vmatpush.bf16.msra.mxu0 0
      %5765 = vmatpush.bf16.msra.mxu0 0
      %5766 = vmatpush.bf16.msra.mxu0 0
      %5767 = vmatpush.bf16.msra.mxu0 %v5755
      %5768 = vmatpush.bf16.msra.mxu0 %v5754
      %5769 = vmatpush.bf16.msra.mxu0 %v5753
      %5770 = vmatpush.bf16.msra.mxu0 %v5752
      %5771 = vmatmul.bf16.gmra.mxu0 %v5761
      %v5772 = vpop.f32.mrf.mxu0
      %v5773 = vadd.f32 0.0, %v5772
      %v5774 = vpop.f32.mrf.mxu0
      %5775 = vdwg.mxu0
      %v5776 = vadd.f32 %v5722, %v5773
      %s5777 = scalar_lea.vmem %s9, 128
      %v5778 = vld [vmem:[%s5777] sm:$0xf]
      %v5779 = vld [vmem:[%s5777 + $0x4] sm:$0xf]
      %v5780 = vld [vmem:[%s5777 + $0x8] sm:$0xf]
      %v5781 = vld [vmem:[%s5777 + $0xc] sm:$0xf]
      %v5782 = vld [vmem:[%s5777 + $0x10] sm:$0xf]
      %v5783 = vld [vmem:[%s5777 + $0x14] sm:$0xf]
      %v5784 = vld [vmem:[%s5777 + $0x18] sm:$0xf]
      %v5785 = vld [vmem:[%s5777 + $0x1c] sm:$0xf]
      %v5787 = vshrl.u32 %v5734, 16
      %v5789 = vrot.slane %v5787, 2
      %v5790 = vshll.u32 %v5734, 16
      %v5792 = vrot.slane %v5790, 3
      %v5793 = vor.u32 %v5789, %v5792
      %v5802 = vunpack.c.l.b16 %v5778
      %v5803 = vunpack.c.l.b16 %v5779
      %v5804 = vunpack.c.l.b16 %v5780
      %v5805 = vunpack.c.l.b16 %v5781
      %v5806 = vunpack.c.l.b16 %v5782
      %v5807 = vunpack.c.l.b16 %v5783
      %v5808 = vunpack.c.l.b16 %v5784
      %v5809 = vunpack.c.l.b16 %v5785
      %v5810 = vpack.c.b16 %v5803, %v5802
      %v5811 = vpack.c.b16 %v5805, %v5804
      %v5812 = vpack.c.b16 %v5807, %v5806
      %v5813 = vpack.c.b16 %v5809, %v5808
      %v5819 = vsel %vm4958, %v5793, 0
      %5821 = vmatpush.bf16.msra.mxu0 0
      %5822 = vmatpush.bf16.msra.mxu0 0
      %5823 = vmatpush.bf16.msra.mxu0 0
      %5824 = vmatpush.bf16.msra.mxu0 0
      %5825 = vmatpush.bf16.msra.mxu0 %v5813
      %5826 = vmatpush.bf16.msra.mxu0 %v5812
      %5827 = vmatpush.bf16.msra.mxu0 %v5811
      %5828 = vmatpush.bf16.msra.mxu0 %v5810
      %5829 = vmatmul.bf16.gmra.mxu0 %v5819
      %v5830 = vpop.f32.mrf.mxu0
      %v5831 = vadd.f32 0.0, %v5830
      %v5832 = vpop.f32.mrf.mxu0
      %5833 = vdwg.mxu0
      %v5834 = vadd.f32 %v5776, %v5831
      %s5835 = scalar_lea.vmem %s9, 160
      %v5836 = vld [vmem:[%s5835] sm:$0xf]
      %v5837 = vld [vmem:[%s5835 + $0x4] sm:$0xf]
      %v5838 = vld [vmem:[%s5835 + $0x8] sm:$0xf]
      %v5839 = vld [vmem:[%s5835 + $0xc] sm:$0xf]
      %v5840 = vld [vmem:[%s5835 + $0x10] sm:$0xf]
      %v5841 = vld [vmem:[%s5835 + $0x14] sm:$0xf]
      %v5842 = vld [vmem:[%s5835 + $0x18] sm:$0xf]
      %v5843 = vld [vmem:[%s5835 + $0x1c] sm:$0xf]
      %v5844 = vrot.slane %v5734, 3
      %v5853 = vunpack.c.l.b16 %v5836
      %v5854 = vunpack.c.l.b16 %v5837
      %v5855 = vunpack.c.l.b16 %v5838
      %v5856 = vunpack.c.l.b16 %v5839
      %v5857 = vunpack.c.l.b16 %v5840
      %v5858 = vunpack.c.l.b16 %v5841
      %v5859 = vunpack.c.l.b16 %v5842
      %v5860 = vunpack.c.l.b16 %v5843
      %v5861 = vpack.c.b16 %v5854, %v5853
      %v5862 = vpack.c.b16 %v5856, %v5855
      %v5863 = vpack.c.b16 %v5858, %v5857
      %v5864 = vpack.c.b16 %v5860, %v5859
      %v5870 = vsel %vm4958, %v5844, 0
      %5872 = vmatpush.bf16.msra.mxu0 0
      %5873 = vmatpush.bf16.msra.mxu0 0
      %5874 = vmatpush.bf16.msra.mxu0 0
      %5875 = vmatpush.bf16.msra.mxu0 0
      %5876 = vmatpush.bf16.msra.mxu0 %v5864
      %5877 = vmatpush.bf16.msra.mxu0 %v5863
      %5878 = vmatpush.bf16.msra.mxu0 %v5862
      %5879 = vmatpush.bf16.msra.mxu0 %v5861
      %5880 = vmatmul.bf16.gmra.mxu0 %v5870
      %v5881 = vpop.f32.mrf.mxu0
      %v5882 = vadd.f32 0.0, %v5881
      %v5883 = vpop.f32.mrf.mxu0
      %5884 = vdwg.mxu0
      %v5885 = vadd.f32 %v5834, %v5882
      %s5886 = scalar_lea.vmem %s9, 192
      %v5887 = vld [vmem:[%s5886] sm:$0xf]
      %v5888 = vld [vmem:[%s5886 + $0x4] sm:$0xf]
      %v5889 = vld [vmem:[%s5886 + $0x8] sm:$0xf]
      %v5890 = vld [vmem:[%s5886 + $0xc] sm:$0xf]
      %v5891 = vld [vmem:[%s5886 + $0x10] sm:$0xf]
      %v5892 = vld [vmem:[%s5886 + $0x14] sm:$0xf]
      %v5893 = vld [vmem:[%s5886 + $0x18] sm:$0xf]
      %v5894 = vld [vmem:[%s5886 + $0x1c] sm:$0xf]
      %v5903 = vunpack.c.l.b16 %v5887
      %v5904 = vunpack.c.l.b16 %v5888
      %v5905 = vunpack.c.l.b16 %v5889
      %v5906 = vunpack.c.l.b16 %v5890
      %v5907 = vunpack.c.l.b16 %v5891
      %v5908 = vunpack.c.l.b16 %v5892
      %v5909 = vunpack.c.l.b16 %v5893
      %v5910 = vunpack.c.l.b16 %v5894
      %v5911 = vpack.c.b16 %v5904, %v5903
      %v5912 = vpack.c.b16 %v5906, %v5905
      %v5913 = vpack.c.b16 %v5908, %v5907
      %v5914 = vpack.c.b16 %v5910, %v5909
      %v5920 = vsel %vm4958, %v5563, 0
      %5922 = vmatpush.bf16.msra.mxu0 0
      %5923 = vmatpush.bf16.msra.mxu0 0
      %5924 = vmatpush.bf16.msra.mxu0 0
      %5925 = vmatpush.bf16.msra.mxu0 0
      %5926 = vmatpush.bf16.msra.mxu0 %v5914
      %5927 = vmatpush.bf16.msra.mxu0 %v5913
      %5928 = vmatpush.bf16.msra.mxu0 %v5912
      %5929 = vmatpush.bf16.msra.mxu0 %v5911
      %5930 = vmatmul.bf16.gmra.mxu0 %v5920
      %v5931 = vpop.f32.mrf.mxu0
      %v5932 = vadd.f32 0.0, %v5931
      %v5933 = vpop.f32.mrf.mxu0
      %5934 = vdwg.mxu0
      %v5935 = vadd.f32 %v5885, %v5932
      %s5936 = scalar_lea.vmem %s9, 224
      %v5937 = vld [vmem:[%s5936] sm:$0xf]
      %v5938 = vld [vmem:[%s5936 + $0x4] sm:$0xf]
      %v5939 = vld [vmem:[%s5936 + $0x8] sm:$0xf]
      %v5940 = vld [vmem:[%s5936 + $0xc] sm:$0xf]
      %v5941 = vld [vmem:[%s5936 + $0x10] sm:$0xf]
      %v5942 = vld [vmem:[%s5936 + $0x14] sm:$0xf]
      %v5943 = vld [vmem:[%s5936 + $0x18] sm:$0xf]
      %v5944 = vld [vmem:[%s5936 + $0x1c] sm:$0xf]
      %v5945 = vpack.c.b16 %v5733, %v5733
      %v5947 = vshrl.u32 %v5945, 16
      %v5949 = vshll.u32 %v5945, 16
      %v5951 = vrot.slane %v5949, 1
      %v5952 = vor.u32 %v5947, %v5951
      %v5961 = vunpack.c.l.b16 %v5937
      %v5962 = vunpack.c.l.b16 %v5938
      %v5963 = vunpack.c.l.b16 %v5939
      %v5964 = vunpack.c.l.b16 %v5940
      %v5965 = vunpack.c.l.b16 %v5941
      %v5966 = vunpack.c.l.b16 %v5942
      %v5967 = vunpack.c.l.b16 %v5943
      %v5968 = vunpack.c.l.b16 %v5944
      %v5969 = vpack.c.b16 %v5962, %v5961
      %v5970 = vpack.c.b16 %v5964, %v5963
      %v5971 = vpack.c.b16 %v5966, %v5965
      %v5972 = vpack.c.b16 %v5968, %v5967
      %v5978 = vsel %vm4958, %v5952, 0
      %5980 = vmatpush.bf16.msra.mxu0 0
      %5981 = vmatpush.bf16.msra.mxu0 0
      %5982 = vmatpush.bf16.msra.mxu0 0
      %5983 = vmatpush.bf16.msra.mxu0 0
      %5984 = vmatpush.bf16.msra.mxu0 %v5972
      %5985 = vmatpush.bf16.msra.mxu0 %v5971
      %5986 = vmatpush.bf16.msra.mxu0 %v5970
      %5987 = vmatpush.bf16.msra.mxu0 %v5969
      %5988 = vmatmul.bf16.gmra.mxu0 %v5978
      %v5989 = vpop.f32.mrf.mxu0
      %v5990 = vadd.f32 0.0, %v5989
      %v5991 = vpop.f32.mrf.mxu0
      %5992 = vdwg.mxu0
      %v5993 = vadd.f32 %v5935, %v5990
      %s5994 = scalar_lea.vmem %s9, 256
      %v5995 = vld [vmem:[%s5994] sm:$0xf]
      %v5996 = vld [vmem:[%s5994 + $0x4] sm:$0xf]
      %v5997 = vld [vmem:[%s5994 + $0x8] sm:$0xf]
      %v5998 = vld [vmem:[%s5994 + $0xc] sm:$0xf]
      %v5999 = vld [vmem:[%s5994 + $0x10] sm:$0xf]
      %v6000 = vld [vmem:[%s5994 + $0x14] sm:$0xf]
      %v6001 = vld [vmem:[%s5994 + $0x18] sm:$0xf]
      %v6002 = vld [vmem:[%s5994 + $0x1c] sm:$0xf]
      %v6003 = vrot.slane %v5945, 1
      %v6012 = vunpack.c.l.b16 %v5995
      %v6013 = vunpack.c.l.b16 %v5996
      %v6014 = vunpack.c.l.b16 %v5997
      %v6015 = vunpack.c.l.b16 %v5998
      %v6016 = vunpack.c.l.b16 %v5999
      %v6017 = vunpack.c.l.b16 %v6000
      %v6018 = vunpack.c.l.b16 %v6001
      %v6019 = vunpack.c.l.b16 %v6002
      %v6020 = vpack.c.b16 %v6013, %v6012
      %v6021 = vpack.c.b16 %v6015, %v6014
      %v6022 = vpack.c.b16 %v6017, %v6016
      %v6023 = vpack.c.b16 %v6019, %v6018
      %v6029 = vsel %vm4958, %v6003, 0
      %6031 = vmatpush.bf16.msra.mxu0 0
      %6032 = vmatpush.bf16.msra.mxu0 0
      %6033 = vmatpush.bf16.msra.mxu0 0
      %6034 = vmatpush.bf16.msra.mxu0 0
      %6035 = vmatpush.bf16.msra.mxu0 %v6023
      %6036 = vmatpush.bf16.msra.mxu0 %v6022
      %6037 = vmatpush.bf16.msra.mxu0 %v6021
      %6038 = vmatpush.bf16.msra.mxu0 %v6020
      %6039 = vmatmul.bf16.gmra.mxu0 %v6029
      %v6040 = vpop.f32.mrf.mxu0
      %v6041 = vadd.f32 0.0, %v6040
      %v6042 = vpop.f32.mrf.mxu0
      %6043 = vdwg.mxu0
      %v6044 = vadd.f32 %v5993, %v6041
      %v6046 = vperm.slane %v5564, 0
      %v6048 = vadd.f32 %v6044, %v6046
      %v6049 = vmax.f32 %v6048, 0.0
      %v6051 = vrot.slane %v6049, 1
      %v6053 = vmax.f32 %v6049, %v6051
      %v6055 = vrot.slane %v6053, 4
      %v6057 = vmax.f32 %v6053, %v6055
      %v6058 = vpack.c.bf16 %v6057, %v6057
      %v6059 = vld [vmem:[%s12] sm:$0xff]
      %v6060 = vld [vmem:[%s12 + $0x8] sm:$0xff]
      %v6061 = vld [vmem:[%s12 + $0x10] sm:$0xff]
      %v6062 = vld [vmem:[%s12 + $0x18] sm:$0xff]
      %v6063 = vld [vmem:[%s12 + $0x20] sm:$0xff]
      %v6064 = vld [vmem:[%s12 + $0x28] sm:$0xff]
      %v6065 = vld [vmem:[%s12 + $0x30] sm:$0xff]
      %v6066 = vld [vmem:[%s12 + $0x38] sm:$0xff]
      %v6067 = vld [vmem:[%s12 + $0x40] sm:$0xff]
      %v6068 = vld [vmem:[%s12 + $0x48] sm:$0xff]
      %v6069 = vld [vmem:[%s12 + $0x50] sm:$0xff]
      %v6070 = vld [vmem:[%s12 + $0x58] sm:$0xff]
      %v6071 = vld [vmem:[%s12 + $0x60] sm:$0xff]
      %v6072 = vld [vmem:[%s12 + $0x68] sm:$0xff]
      %v6073 = vld [vmem:[%s12 + $0x70] sm:$0xff]
      %v6074 = vld [vmem:[%s12 + $0x78] sm:$0xff]
      %v6075 = vld [vmem:[%s13] sm:$0xf]
      %v6092 = vunpack.c.l.b16 %v6059
      %v6093 = vunpack.c.h.b16 %v6059
      %v6094 = vunpack.c.l.b16 %v6060
      %v6095 = vunpack.c.h.b16 %v6060
      %v6096 = vunpack.c.l.b16 %v6061
      %v6097 = vunpack.c.h.b16 %v6061
      %v6098 = vunpack.c.l.b16 %v6062
      %v6099 = vunpack.c.h.b16 %v6062
      %v6100 = vunpack.c.l.b16 %v6063
      %v6101 = vunpack.c.h.b16 %v6063
      %v6102 = vunpack.c.l.b16 %v6064
      %v6103 = vunpack.c.h.b16 %v6064
      %v6104 = vunpack.c.l.b16 %v6065
      %v6105 = vunpack.c.h.b16 %v6065
      %v6106 = vunpack.c.l.b16 %v6066
      %v6107 = vunpack.c.h.b16 %v6066
      %v6108 = vunpack.c.l.b16 %v6067
      %v6109 = vunpack.c.h.b16 %v6067
      %v6110 = vunpack.c.l.b16 %v6068
      %v6111 = vunpack.c.h.b16 %v6068
      %v6112 = vunpack.c.l.b16 %v6069
      %v6113 = vunpack.c.h.b16 %v6069
      %v6114 = vunpack.c.l.b16 %v6070
      %v6115 = vunpack.c.h.b16 %v6070
      %v6116 = vunpack.c.l.b16 %v6071
      %v6117 = vunpack.c.h.b16 %v6071
      %v6118 = vunpack.c.l.b16 %v6072
      %v6119 = vunpack.c.h.b16 %v6072
      %v6120 = vunpack.c.l.b16 %v6073
      %v6121 = vunpack.c.h.b16 %v6073
      %v6122 = vunpack.c.l.b16 %v6074
      %v6123 = vunpack.c.h.b16 %v6074
      %v6124 = vpack.c.b16 %v6096, %v6092
      %v6125 = vpack.c.b16 %v6097, %v6093
      %v6126 = vpack.c.b16 %v6098, %v6094
      %v6127 = vpack.c.b16 %v6099, %v6095
      %v6128 = vpack.c.b16 %v6104, %v6100
      %v6129 = vpack.c.b16 %v6105, %v6101
      %v6130 = vpack.c.b16 %v6106, %v6102
      %v6131 = vpack.c.b16 %v6107, %v6103
      %v6132 = vpack.c.b16 %v6112, %v6108
      %v6133 = vpack.c.b16 %v6113, %v6109
      %v6134 = vpack.c.b16 %v6114, %v6110
      %v6135 = vpack.c.b16 %v6115, %v6111
      %v6136 = vpack.c.b16 %v6120, %v6116
      %v6137 = vpack.c.b16 %v6121, %v6117
      %v6138 = vpack.c.b16 %v6122, %v6118
      %v6139 = vpack.c.b16 %v6123, %v6119
      %v6157 = vperm.slane %v6075, 0
      %v6158 = vperm.slane %v6075, 1
      %v6159 = vperm.slane %v6075, 2
      %v6160 = vperm.slane %v6075, 3
      %v6166 = vsel %vm4958, %v6058, 0
      %6168 = vmatpush.bf16.msra.mxu0 0
      %6169 = vmatpush.bf16.msra.mxu0 0
      %6170 = vmatpush.bf16.msra.mxu0 0
      %6171 = vmatpush.bf16.msra.mxu0 0
      %6172 = vmatpush.bf16.msra.mxu0 %v6136
      %6173 = vmatpush.bf16.msra.mxu0 %v6132
      %6174 = vmatpush.bf16.msra.mxu0 %v6128
      %6175 = vmatpush.bf16.msra.mxu0 %v6124
      %6176 = vmatmul.bf16.gmra.mxu0 %v6166
      %v6177 = vpop.f32.mrf.mxu0
      %v6178 = vadd.f32 %v6157, %v6177
      %v6179 = vpop.f32.mrf.mxu0
      %6180 = vdwg.mxu0
      %6181 = vmatpush.bf16.msra.mxu0 0
      %6182 = vmatpush.bf16.msra.mxu0 0
      %6183 = vmatpush.bf16.msra.mxu0 0
      %6184 = vmatpush.bf16.msra.mxu0 0
      %6185 = vmatpush.bf16.msra.mxu0 %v6137
      %6186 = vmatpush.bf16.msra.mxu0 %v6133
      %6187 = vmatpush.bf16.msra.mxu0 %v6129
      %6188 = vmatpush.bf16.msra.mxu0 %v6125
      %6189 = vmatmul.bf16.gmra.mxu0 %v6166
      %v6190 = vpop.f32.mrf.mxu0
      %v6191 = vadd.f32 %v6158, %v6190
      %v6192 = vpop.f32.mrf.mxu0
      %6193 = vdwg.mxu0
      %6194 = vmatpush.bf16.msra.mxu0 0
      %6195 = vmatpush.bf16.msra.mxu0 0
      %6196 = vmatpush.bf16.msra.mxu0 0
      %6197 = vmatpush.bf16.msra.mxu0 0
      %6198 = vmatpush.bf16.msra.mxu0 %v6138
      %6199 = vmatpush.bf16.msra.mxu0 %v6134
      %6200 = vmatpush.bf16.msra.mxu0 %v6130
      %6201 = vmatpush.bf16.msra.mxu0 %v6126
      %6202 = vmatmul.bf16.gmra.mxu0 %v6166
      %v6203 = vpop.f32.mrf.mxu0
      %v6204 = vadd.f32 %v6159, %v6203
      %v6205 = vpop.f32.mrf.mxu0
      %6206 = vdwg.mxu0
      %6207 = vmatpush.bf16.msra.mxu0 0
      %6208 = vmatpush.bf16.msra.mxu0 0
      %6209 = vmatpush.bf16.msra.mxu0 0
      %6210 = vmatpush.bf16.msra.mxu0 0
      %6211 = vmatpush.bf16.msra.mxu0 %v6139
      %6212 = vmatpush.bf16.msra.mxu0 %v6135
      %6213 = vmatpush.bf16.msra.mxu0 %v6131
      %6214 = vmatpush.bf16.msra.mxu0 %v6127
      %6215 = vmatmul.bf16.gmra.mxu0 %v6166
      %v6216 = vpop.f32.mrf.mxu0
      %v6217 = vadd.f32 %v6160, %v6216
      %v6218 = vpop.f32.mrf.mxu0
      %6219 = vdwg.mxu0
      %v6220 = vmax.f32 %v6178, 0.0
      %v6221 = vmax.f32 %v6191, 0.0
      %v6222 = vmax.f32 %v6204, 0.0
      %v6223 = vmax.f32 %v6217, 0.0
      %v6224 = vpack.c.bf16 %v6220, %v6220
      %v6225 = vpack.c.bf16 %v6221, %v6221
      %v6226 = vpack.c.bf16 %v6222, %v6222
      %v6227 = vpack.c.bf16 %v6223, %v6223
      %v6228 = vld [vmem:[%s14] sm:$0xf]
      %v6229 = vld [vmem:[%s14 + $0x4] sm:$0xf]
      %v6230 = vld [vmem:[%s14 + $0x8] sm:$0xf]
      %v6231 = vld [vmem:[%s14 + $0xc] sm:$0xf]
      %v6232 = vld [vmem:[%s14 + $0x10] sm:$0xf]
      %v6233 = vld [vmem:[%s14 + $0x14] sm:$0xf]
      %v6234 = vld [vmem:[%s14 + $0x18] sm:$0xf]
      %v6235 = vld [vmem:[%s14 + $0x1c] sm:$0xf]
      %v6236 = vld [vmem:[%s14 + $0x20] sm:$0xf]
      %v6237 = vld [vmem:[%s14 + $0x24] sm:$0xf]
      %v6238 = vld [vmem:[%s14 + $0x28] sm:$0xf]
      %v6239 = vld [vmem:[%s14 + $0x2c] sm:$0xf]
      %v6240 = vld [vmem:[%s14 + $0x30] sm:$0xf]
      %v6241 = vld [vmem:[%s14 + $0x34] sm:$0xf]
      %v6242 = vld [vmem:[%s14 + $0x38] sm:$0xf]
      %v6243 = vld [vmem:[%s14 + $0x3c] sm:$0xf]
      %v6244 = vld [vmem:[%s14 + $0x40] sm:$0xf]
      %v6245 = vld [vmem:[%s14 + $0x44] sm:$0xf]
      %v6246 = vld [vmem:[%s14 + $0x48] sm:$0xf]
      %v6247 = vld [vmem:[%s14 + $0x4c] sm:$0xf]
      %v6248 = vld [vmem:[%s14 + $0x50] sm:$0xf]
      %v6249 = vld [vmem:[%s14 + $0x54] sm:$0xf]
      %v6250 = vld [vmem:[%s14 + $0x58] sm:$0xf]
      %v6251 = vld [vmem:[%s14 + $0x5c] sm:$0xf]
      %v6252 = vld [vmem:[%s14 + $0x60] sm:$0xf]
      %v6253 = vld [vmem:[%s14 + $0x64] sm:$0xf]
      %v6254 = vld [vmem:[%s14 + $0x68] sm:$0xf]
      %v6255 = vld [vmem:[%s14 + $0x6c] sm:$0xf]
      %v6256 = vld [vmem:[%s14 + $0x70] sm:$0xf]
      %v6257 = vld [vmem:[%s14 + $0x74] sm:$0xf]
      %v6258 = vld [vmem:[%s14 + $0x78] sm:$0xf]
      %v6259 = vld [vmem:[%s14 + $0x7c] sm:$0xf]
      %v6260 = vld [vmem:[%s14 + $0x80] sm:$0xf]
      %v6261 = vld [vmem:[%s14 + $0x84] sm:$0xf]
      %v6262 = vld [vmem:[%s14 + $0x88] sm:$0xf]
      %v6263 = vld [vmem:[%s14 + $0x8c] sm:$0xf]
      %v6264 = vld [vmem:[%s14 + $0x90] sm:$0xf]
      %v6265 = vld [vmem:[%s14 + $0x94] sm:$0xf]
      %v6266 = vld [vmem:[%s14 + $0x98] sm:$0xf]
      %v6267 = vld [vmem:[%s14 + $0x9c] sm:$0xf]
      %v6268 = vld [vmem:[%s14 + $0xa0] sm:$0xf]
      %v6269 = vld [vmem:[%s14 + $0xa4] sm:$0xf]
      %v6270 = vld [vmem:[%s14 + $0xa8] sm:$0xf]
      %v6271 = vld [vmem:[%s14 + $0xac] sm:$0xf]
      %v6272 = vld [vmem:[%s14 + $0xb0] sm:$0xf]
      %v6273 = vld [vmem:[%s14 + $0xb4] sm:$0xf]
      %v6274 = vld [vmem:[%s14 + $0xb8] sm:$0xf]
      %v6275 = vld [vmem:[%s14 + $0xbc] sm:$0xf]
      %v6276 = vld [vmem:[%s14 + $0xc0] sm:$0xf]
      %v6277 = vld [vmem:[%s14 + $0xc4] sm:$0xf]
      %v6278 = vld [vmem:[%s14 + $0xc8] sm:$0xf]
      %v6279 = vld [vmem:[%s14 + $0xcc] sm:$0xf]
      %v6280 = vld [vmem:[%s14 + $0xd0] sm:$0xf]
      %v6281 = vld [vmem:[%s14 + $0xd4] sm:$0xf]
      %v6282 = vld [vmem:[%s14 + $0xd8] sm:$0xf]
      %v6283 = vld [vmem:[%s14 + $0xdc] sm:$0xf]
      %v6284 = vld [vmem:[%s14 + $0xe0] sm:$0xf]
      %v6285 = vld [vmem:[%s14 + $0xe4] sm:$0xf]
      %v6286 = vld [vmem:[%s14 + $0xe8] sm:$0xf]
      %v6287 = vld [vmem:[%s14 + $0xec] sm:$0xf]
      %v6288 = vld [vmem:[%s14 + $0xf0] sm:$0xf]
      %v6289 = vld [vmem:[%s14 + $0xf4] sm:$0xf]
      %v6290 = vld [vmem:[%s14 + $0xf8] sm:$0xf]
      %v6291 = vld [vmem:[%s14 + $0xfc] sm:$0xf]
      %v6292 = vld [vmem:[%s15] sm:$0x1]
      %v6357 = vunpack.c.l.b16 %v6228
      %v6358 = vunpack.c.l.b16 %v6229
      %v6359 = vunpack.c.l.b16 %v6230
      %v6360 = vunpack.c.l.b16 %v6231
      %v6361 = vunpack.c.l.b16 %v6232
      %v6362 = vunpack.c.l.b16 %v6233
      %v6363 = vunpack.c.l.b16 %v6234
      %v6364 = vunpack.c.l.b16 %v6235
      %v6365 = vunpack.c.l.b16 %v6236
      %v6366 = vunpack.c.l.b16 %v6237
      %v6367 = vunpack.c.l.b16 %v6238
      %v6368 = vunpack.c.l.b16 %v6239
      %v6369 = vunpack.c.l.b16 %v6240
      %v6370 = vunpack.c.l.b16 %v6241
      %v6371 = vunpack.c.l.b16 %v6242
      %v6372 = vunpack.c.l.b16 %v6243
      %v6373 = vunpack.c.l.b16 %v6244
      %v6374 = vunpack.c.l.b16 %v6245
      %v6375 = vunpack.c.l.b16 %v6246
      %v6376 = vunpack.c.l.b16 %v6247
      %v6377 = vunpack.c.l.b16 %v6248
      %v6378 = vunpack.c.l.b16 %v6249
      %v6379 = vunpack.c.l.b16 %v6250
      %v6380 = vunpack.c.l.b16 %v6251
      %v6381 = vunpack.c.l.b16 %v6252
      %v6382 = vunpack.c.l.b16 %v6253
      %v6383 = vunpack.c.l.b16 %v6254
      %v6384 = vunpack.c.l.b16 %v6255
      %v6385 = vunpack.c.l.b16 %v6256
      %v6386 = vunpack.c.l.b16 %v6257
      %v6387 = vunpack.c.l.b16 %v6258
      %v6388 = vunpack.c.l.b16 %v6259
      %v6389 = vunpack.c.l.b16 %v6260
      %v6390 = vunpack.c.l.b16 %v6261
      %v6391 = vunpack.c.l.b16 %v6262
      %v6392 = vunpack.c.l.b16 %v6263
      %v6393 = vunpack.c.l.b16 %v6264
      %v6394 = vunpack.c.l.b16 %v6265
      %v6395 = vunpack.c.l.b16 %v6266
      %v6396 = vunpack.c.l.b16 %v6267
      %v6397 = vunpack.c.l.b16 %v6268
      %v6398 = vunpack.c.l.b16 %v6269
      %v6399 = vunpack.c.l.b16 %v6270
      %v6400 = vunpack.c.l.b16 %v6271
      %v6401 = vunpack.c.l.b16 %v6272
      %v6402 = vunpack.c.l.b16 %v6273
      %v6403 = vunpack.c.l.b16 %v6274
      %v6404 = vunpack.c.l.b16 %v6275
      %v6405 = vunpack.c.l.b16 %v6276
      %v6406 = vunpack.c.l.b16 %v6277
      %v6407 = vunpack.c.l.b16 %v6278
      %v6408 = vunpack.c.l.b16 %v6279
      %v6409 = vunpack.c.l.b16 %v6280
      %v6410 = vunpack.c.l.b16 %v6281
      %v6411 = vunpack.c.l.b16 %v6282
      %v6412 = vunpack.c.l.b16 %v6283
      %v6413 = vunpack.c.l.b16 %v6284
      %v6414 = vunpack.c.l.b16 %v6285
      %v6415 = vunpack.c.l.b16 %v6286
      %v6416 = vunpack.c.l.b16 %v6287
      %v6417 = vunpack.c.l.b16 %v6288
      %v6418 = vunpack.c.l.b16 %v6289
      %v6419 = vunpack.c.l.b16 %v6290
      %v6420 = vunpack.c.l.b16 %v6291
      %v6421 = vpack.c.b16 %v6358, %v6357
      %v6422 = vpack.c.b16 %v6360, %v6359
      %v6423 = vpack.c.b16 %v6362, %v6361
      %v6424 = vpack.c.b16 %v6364, %v6363
      %v6425 = vpack.c.b16 %v6366, %v6365
      %v6426 = vpack.c.b16 %v6368, %v6367
      %v6427 = vpack.c.b16 %v6370, %v6369
      %v6428 = vpack.c.b16 %v6372, %v6371
      %v6429 = vpack.c.b16 %v6374, %v6373
      %v6430 = vpack.c.b16 %v6376, %v6375
      %v6431 = vpack.c.b16 %v6378, %v6377
      %v6432 = vpack.c.b16 %v6380, %v6379
      %v6433 = vpack.c.b16 %v6382, %v6381
      %v6434 = vpack.c.b16 %v6384, %v6383
      %v6435 = vpack.c.b16 %v6386, %v6385
      %v6436 = vpack.c.b16 %v6388, %v6387
      %v6437 = vpack.c.b16 %v6390, %v6389
      %v6438 = vpack.c.b16 %v6392, %v6391
      %v6439 = vpack.c.b16 %v6394, %v6393
      %v6440 = vpack.c.b16 %v6396, %v6395
      %v6441 = vpack.c.b16 %v6398, %v6397
      %v6442 = vpack.c.b16 %v6400, %v6399
      %v6443 = vpack.c.b16 %v6402, %v6401
      %v6444 = vpack.c.b16 %v6404, %v6403
      %v6445 = vpack.c.b16 %v6406, %v6405
      %v6446 = vpack.c.b16 %v6408, %v6407
      %v6447 = vpack.c.b16 %v6410, %v6409
      %v6448 = vpack.c.b16 %v6412, %v6411
      %v6449 = vpack.c.b16 %v6414, %v6413
      %v6450 = vpack.c.b16 %v6416, %v6415
      %v6451 = vpack.c.b16 %v6418, %v6417
      %v6452 = vpack.c.b16 %v6420, %v6419
      %6485 = vmatpush.bf16.msra.mxu0 %v6428
      %6486 = vmatpush.bf16.msra.mxu0 %v6427
      %6487 = vmatpush.bf16.msra.mxu0 %v6426
      %6488 = vmatpush.bf16.msra.mxu0 %v6425
      %6489 = vmatpush.bf16.msra.mxu0 %v6424
      %6490 = vmatpush.bf16.msra.mxu0 %v6423
      %6491 = vmatpush.bf16.msra.mxu0 %v6422
      %6492 = vmatpush.bf16.msra.mxu0 %v6421
      %6493 = vmatmul.bf16.gmra.mxu0 %v6224
      %v6494 = vpop.f32.mrf.mxu0
      %v6495 = vadd.f32 %v6292, %v6494
      %v6496 = vpop.f32.mrf.mxu0
      %6497 = vdwg.mxu0
      %6498 = vmatpush.bf16.msra.mxu0 %v6436
      %6499 = vmatpush.bf16.msra.mxu0 %v6435
      %6500 = vmatpush.bf16.msra.mxu0 %v6434
      %6501 = vmatpush.bf16.msra.mxu0 %v6433
      %6502 = vmatpush.bf16.msra.mxu0 %v6432
      %6503 = vmatpush.bf16.msra.mxu0 %v6431
      %6504 = vmatpush.bf16.msra.mxu0 %v6430
      %6505 = vmatpush.bf16.msra.mxu0 %v6429
      %6506 = vmatmul.bf16.gmra.mxu0 %v6225
      %v6507 = vpop.f32.mrf.mxu0
      %v6508 = vadd.f32 %v6495, %v6507
      %v6509 = vpop.f32.mrf.mxu0
      %6510 = vdwg.mxu0
      %6511 = vmatpush.bf16.msra.mxu0 %v6444
      %6512 = vmatpush.bf16.msra.mxu0 %v6443
      %6513 = vmatpush.bf16.msra.mxu0 %v6442
      %6514 = vmatpush.bf16.msra.mxu0 %v6441
      %6515 = vmatpush.bf16.msra.mxu0 %v6440
      %6516 = vmatpush.bf16.msra.mxu0 %v6439
      %6517 = vmatpush.bf16.msra.mxu0 %v6438
      %6518 = vmatpush.bf16.msra.mxu0 %v6437
      %6519 = vmatmul.bf16.gmra.mxu0 %v6226
      %v6520 = vpop.f32.mrf.mxu0
      %v6521 = vadd.f32 %v6508, %v6520
      %v6522 = vpop.f32.mrf.mxu0
      %6523 = vdwg.mxu0
      %6524 = vmatpush.bf16.msra.mxu0 %v6452
      %6525 = vmatpush.bf16.msra.mxu0 %v6451
      %6526 = vmatpush.bf16.msra.mxu0 %v6450
      %6527 = vmatpush.bf16.msra.mxu0 %v6449
      %6528 = vmatpush.bf16.msra.mxu0 %v6448
      %6529 = vmatpush.bf16.msra.mxu0 %v6447
      %6530 = vmatpush.bf16.msra.mxu0 %v6446
      %6531 = vmatpush.bf16.msra.mxu0 %v6445
      %6532 = vmatmul.bf16.gmra.mxu0 %v6227
      %v6533 = vpop.f32.mrf.mxu0
      %v6534 = vadd.f32 %v6521, %v6533
      %v6535 = vpop.f32.mrf.mxu0
      %6536 = vdwg.mxu0
      %v6537 = vperm.slane %v6534, 0
      %6538 = vst [vmem:[%s519] sm:$0xff] %v6537
      %p6539 = scmp.lt.s32.totalorder %s27, 1
      %s6540 = scalar_select %p6539, %s27, 1
      %s6541 = smul.addr %s6540, 8
      %s6542 = scalar_lea.vmem %s16, %s6541
      // Predicated region
      $region85: #{large_forward.1} parent=83 // pred_check
        %p6543 = pneg %p386
      $region86: #{large_forward.1} parent=83 // pred_check_branch
        %6545 = sbr.rel (%p6543) target = $region88
      $region87: #{large_forward.1} parent=83 // pred_region
        _
      $region88: #{large_forward.1} parent=83 // pred_fallthru
        _
    $region84: #{large_forward.1} parent=5 // pred_fallthru
      _
    %p6546 = scmp.le.s32.totalorder 2, %s22
    // Predicated region
    $region89: #{large_forward.1} parent=5 // pred_check
      %p6547 = pneg %p6546
    $region90: #{large_forward.1} parent=5 // pred_check_branch
      %6549 = sbr.rel (%p6547) target = $region92
    $region91: #{large_forward.1} parent=5 // pred_region
      %s6550 = ssub.s32 %s22, 2
      // Predicated region
      $region93: #{large_forward.1} parent=91 // pred_check
        %p6551 = pneg %p392
      $region94: #{large_forward.1} parent=91 // pred_check_branch
        %6553 = sbr.rel (%p6551) target = $region96
      $region95: #{large_forward.1} parent=91 // pred_region
        %p6554 = scmp.lt.s32.totalorder %s28, 1
        %s6555 = scalar_select %p6554, %s28, 1
        %s6556 = smul.addr %s6555, 8
        %s6557 = scalar_lea.vmem %s16, %s6556
      $region96: #{large_forward.1} parent=91 // pred_fallthru
        _
    $region92: #{large_forward.1} parent=5 // pred_fallthru
      _
  $region6: #{large_forward.1} parent=0 // loop_footer
    %s26 = sadd.s32 1, %s22
  $region7: #{large_forward.1} parent=0 // loop_footer_branch
    %21 = sbr.rel target = $region3
  $region8: #{large_forward.1} parent=0 // loop_exit
    _

</llo_original>
